<compile_context>
chip_gen: v6e
topology: v6e:2x2x1
jax: 0.10.0
libtpu: 0.0.40
codegen_flags: <defaults>
</compile_context>

<pallas_src>
import functools

import jax
import jax.numpy as jnp
from jax.experimental import pallas as pl
from jax.experimental.pallas import tpu as pltpu

LANE = 128
MXU_DTYPE = jnp.bfloat16   # matmul operand / storage dtype (accumulation is f32)


def _round_up(v, m):
    return ((v + m - 1) // m) * m


def _fold_bn(w, gamma, beta, mean, var, eps=1e-5):
    """Fold BatchNorm (eval mode, running stats) into a conv weight (HWIO) + bias."""
    scale = gamma / jnp.sqrt(var + eps)
    return w * scale[None, None, None, :], beta - mean * scale


def _pad2d(w, rows, cols):
    r, c = w.shape
    return jnp.pad(w, ((0, rows - r), (0, cols - c)))


def _vmem_capacity_bytes():
    try:
        return int(pltpu.get_tpu_info().vmem_capacity_bytes)
    except Exception:
        return 64 * 1024 * 1024   # conservative (v7x per-TC size)


# ---------------------------------------------------------------------------
# Kernel
# ---------------------------------------------------------------------------
def c3_kernel(x_ref, xt_ref, xb_ref,
              w12_ref, b12_ref,
              wm1_ref, bm1_ref, wm2_ref, bm2_ref,
              w3a_ref, w3b_ref, b3_ref,
              o_ref, zbuf_ref, *, TH, W, c_p):
    """Fused C3 forward for one (image, row-tile) grid point.

    x_ref:  (1, TH, W, C1p) bf16  interior input rows
    xt_ref: (1, 1,  W, C1p) bf16  row above the tile (clamped at the image top)
    xb_ref: (1, 1,  W, C1p) bf16  row below the tile (clamped at the image bottom)
    zbuf_ref: (TH+2, W+2, c_p) bf16 VMEM scratch = zero-padded bottleneck input z
    o_ref:  (1, TH, W, C2p) bf16  output rows
    """
    ti = pl.program_id(1)
    nt = pl.num_programs(1)
    relu = lambda v: jnp.maximum(v, 0.0)
    dot = functools.partial(jnp.dot, preferred_element_type=jnp.float32)
    bf16 = lambda v: v.astype(MXU_DTYPE)

    w12 = w12_ref[...]
    b12 = b12_ref[...]
    wm1 = wm1_ref[...]
    bm1 = bm1_ref[...]

    def cv1_m1(xv):
        """Fused cv1|cv2 (one N=2*c_p matmul), then m[0].cv1.  Returns f32."""
        y12 = relu(dot(xv, w12) + b12)              # (M, 2*c_p)
        y1 = y12[:, :c_p]                           # cv1 branch (lane-aligned slice)
        y2 = y12[:, c_p:]                           # cv2 branch
        z = relu(dot(bf16(y1), wm1) + bm1)          # m[0].cv1
        return y1, y2, z

    # --- halo rows: recompute z from the neighbour x rows, true zero at edges ---
    _, _, zt = cv1_m1(xt_ref[0, 0])                                 # (W, c_p)
    zt = jnp.where(ti == 0, jnp.zeros_like(zt), zt)                 # top image pad
    zbuf_ref[0:1, 1:W + 1, :] = bf16(zt).reshape(1, W, c_p)

    _, _, zb = cv1_m1(xb_ref[0, 0])
    zb = jnp.where(ti == nt - 1, jnp.zeros_like(zb), zb)            # bottom image pad
    zbuf_ref[TH + 1:TH + 2, 1:W + 1, :] = bf16(zb).reshape(1, W, c_p)

    # --- interior rows ---
    x = x_ref[0].reshape(TH * W, -1)                                # bf16 (TH*W, C1p)
    y1, y2, z = cv1_m1(x)                                           # f32 (TH*W, c_p)
    zbuf_ref[1:TH + 1, 1:W + 1, :] = bf16(z).reshape(TH, W, c_p)

    # Zero the left/right padding columns of the z scratch (every step: safe
    # under any megacore sharding of the grid).
    zcol = jnp.zeros((TH + 2, 1, c_p), zbuf_ref.dtype)
    zbuf_ref[:, 0:1, :] = zcol
    zbuf_ref[:, W + 1:W + 2, :] = zcol

    # --- m[0].cv2: 3x3 conv as 9 accumulating K=c_p matmuls off the bf16 scratch ---
    acc = bm2_ref[...]                                              # (1, c_p) f32, broadcasts
    for dy in range(3):
        for dx in range(3):
            patch = zbuf_ref[dy:dy + TH, dx:dx + W, :].reshape(TH * W, c_p)
            acc = acc + dot(patch, wm2_ref[dy, dx])                 # f32 accumulate
    m_out = y1 + relu(acc)                                          # Bottleneck shortcut

    # --- cv3: split weights instead of a channel concat ---
    out = relu(dot(bf16(m_out), w3a_ref[...])
               + dot(bf16(y2), w3b_ref[...]) + b3_ref[...])         # (TH*W, C2p) f32
    o_ref[0] = out.reshape(TH, W, -1).astype(o_ref.dtype)


# ---------------------------------------------------------------------------
# Wrapper
# ---------------------------------------------------------------------------
def _pick_tile_rows(N, H, W, c_p, C1p, C2p, vmem_cap):
    """Largest divisor of H whose per-tile working set fits the VMEM budget.

    Per-row accounting (bytes): double-buffered bf16 x/out blocks, the bf16 z
    scratch, ~8 live f32 (row, c_p) intermediates and the f32 pre-cast output.
    Prefers tilings with an even number of grid points (keeps both v7x
    TensorCores busy when N is small).
    """
    per_row = W * (2 * 2 * C1p * 2          # x block, 2 buffers, bf16
                   + 2 * 2 * C2p * 2        # out block, 2 buffers, bf16
                   + 2 * c_p                # z scratch row (bf16)
                   + 8 * 4 * c_p            # f32 intermediates (y12, y1, y2, z, acc, ...)
                   + 4 * C2p)               # f32 out before the bf16 cast
    budget = min(vmem_cap // 4, 24 * 1024 * 1024)
    cands = [th for th in range(1, H + 1)
             if H % th == 0 and th * per_row <= budget]
    if not cands:
        cands = [1]
    even = [th for th in cands if (N * (H // th)) % 2 == 0]
    pool = even if even else cands
    return max(pool)


def c3_forward(x_nchw, params, tile_rows=None, nhwc_out=False):
    """C3 forward.

    x_nchw: (N, C1, H, W) f32.
    Returns (N, C2, H, W) f32 by default; with nhwc_out=True returns the
    channel-padded NHWC bf16 tensor straight from the kernel (no extra HBM
    passes) for chaining into a following NHWC layer.
    """
    (w1, b1), (w2, b2), (wm1, bm1), (wm2, bm2), (w3, b3) = params
    N, C1, H, W = x_nchw.shape
    c_ = w1.shape[-1]
    C2 = w3.shape[-1]

    C1p = _round_up(C1, LANE)
    c_p = _round_up(c_, LANE)
    C2p = _round_up(C2, LANE)

    vmem_cap = _vmem_capacity_bytes()
    TH = tile_rows if tile_rows is not None else _pick_tile_rows(
        N, H, W, c_p, C1p, C2p, vmem_cap)
    assert H % TH == 0, (H, TH)
    nT = H // TH

    # NCHW -> NHWC, channel-pad to a lane-dense multiple of 128, cast to bf16
    # (single XLA layout pass; x only ever feeds bf16 matmuls).
    x = jnp.transpose(x_nchw, (0, 2, 3, 1))
    x = jnp.pad(x, ((0, 0), (0, 0), (0, 0), (0, C1p - C1))).astype(MXU_DTYPE)

    # Weights: pad to lane-dense shapes, cast matmul operands to bf16.
    w1m = _pad2d(w1[0, 0], C1p, c_p)
    w2m = _pad2d(w2[0, 0], C1p, c_p)
    w12 = jnp.concatenate([w1m, w2m], axis=1).astype(MXU_DTYPE)      # (C1p, 2*c_p)
    wm1m = _pad2d(wm1[0, 0], c_p, c_p).astype(MXU_DTYPE)
    wm2p = jnp.pad(wm2, ((0, 0), (0, 0), (0, c_p - c_), (0, c_p - c_)))
    wm2f = wm2p.astype(MXU_DTYPE)                                     # (3, 3, c_p, c_p)
    w3a = _pad2d(w3[0, 0][:c_], c_p, C2p).astype(MXU_DTYPE)           # m branch
    w3b = _pad2d(w3[0, 0][c_:], c_p, C2p).astype(MXU_DTYPE)           # cv2 branch

    def padb(b, n):
        return jnp.pad(b, (0, n - b.shape[0])).reshape(1, n).astype(jnp.float32)

    b12 = jnp.concatenate([padb(b1, c_p), padb(b2, c_p)], axis=1)     # (1, 2*c_p)
    bm1p, bm2p = padb(bm1, c_p), padb(bm2, c_p)
    b3p = padb(b3, C2p)

    def full_spec(shape):
        return pl.BlockSpec(shape, lambda n, i, _nd=len(shape): (0,) * _nd)

    x_mid_spec = pl.BlockSpec((1, TH, W, C1p), lambda n, i: (n, i, 0, 0))
    # Halo rows: clamped element row index; the kernel masks them to zero at
    # the image boundary so the clamped (wrong) row is never actually used.
    x_top_spec = pl.BlockSpec(
        (1, 1, W, C1p), lambda n, i: (n, jnp.maximum(i * TH - 1, 0), 0, 0))
    x_bot_spec = pl.BlockSpec(
        (1, 1, W, C1p), lambda n, i: (n, jnp.minimum(i * TH + TH, H - 1), 0, 0))

    kernel = functools.partial(c3_kernel, TH=TH, W=W, c_p=c_p)
    vmem_limit = min(int(vmem_cap * 0.6), 80 * 1024 * 1024)

    out_nhwc = pl.pallas_call(
        kernel,
        out_shape=jax.ShapeDtypeStruct((N, H, W, C2p), MXU_DTYPE),
        grid=(N, nT),
        in_specs=[
            x_mid_spec, x_top_spec, x_bot_spec,
            full_spec(w12.shape), full_spec(b12.shape),
            full_spec(wm1m.shape), full_spec(bm1p.shape),
            full_spec(wm2f.shape), full_spec(bm2p.shape),
            full_spec(w3a.shape), full_spec(w3b.shape), full_spec(b3p.shape),
        ],
        out_specs=pl.BlockSpec((1, TH, W, C2p), lambda n, i: (n, i, 0, 0)),
        scratch_shapes=[pltpu.VMEM((TH + 2, W + 2, c_p), MXU_DTYPE)],
        compiler_params=pltpu.CompilerParams(
            dimension_semantics=("parallel", "parallel"),
            vmem_limit_bytes=vmem_limit),
    )(x, x, x,
      w12, b12, wm1m, bm1p, wm2f, bm2p, w3a, w3b, b3p)

    if nhwc_out:
        return out_nhwc                                  # (N, H, W, C2p) bf16
    out = out_nhwc[..., :C2].astype(jnp.float32)
    return jnp.transpose(out, (0, 3, 1, 2))              # (N, C2, H, W) f32


# ---------------------------------------------------------------------------
# Pure-JAX reference (eval-mode BN folded; emulates the kernel's bf16 MXU inputs)
# ---------------------------------------------------------------------------
def _conv_bn_relu_ref(x_nhwc, w, b, padding):
    y = jax.lax.conv_general_dilated(
        x_nhwc.astype(MXU_DTYPE), w.astype(MXU_DTYPE),
        window_strides=(1, 1), padding=padding,
        dimension_numbers=('NHWC', 'HWIO', 'NHWC'),
        preferred_element_type=jnp.float32)
    return jnp.maximum(y + b, 0.0)


def c3_ref(x_nchw, params):
    (w1, b1), (w2, b2), (wm1, bm1), (wm2, bm2), (w3, b3) = params
    x = jnp.transpose(x_nchw, (0, 2, 3, 1))
    y1 = _conv_bn_relu_ref(x, w1, b1, 'VALID')
    y2 = _conv_bn_relu_ref(x, w2, b2, 'VALID')
    z = _conv_bn_relu_ref(y1, wm1, bm1, 'VALID')
    bout = _conv_bn_relu_ref(z, wm2, bm2, 'SAME')
    m = y1 + bout                                   # Bottleneck shortcut
    cat = jnp.concatenate([m, y2], axis=-1)
    out = _conv_bn_relu_ref(cat, w3, b3, 'VALID')
    return jnp.transpose(out, (0, 3, 1, 2))


if __name__ == "__main__":
    key = jax.random.PRNGKey(0)
    N, C1, C2, H, W = 2, 8, 8, 16, 16
    c_ = int(C2 * 0.5)                # C3(e=0.5); kernel implements n=1 bottleneck

    def make_conv_bn(k, kh, kw, cin, cout):
        k1, k2, k3, k4, k5 = jax.random.split(k, 5)
        w = jax.random.normal(k1, (kh, kw, cin, cout), jnp.float32) * 0.1
        gamma = 1.0 + 0.1 * jax.random.normal(k2, (cout,), jnp.float32)
        beta = 0.1 * jax.random.normal(k3, (cout,), jnp.float32)
        mean = 0.1 * jax.random.normal(k4, (cout,), jnp.float32)
        var = jnp.abs(jax.random.normal(k5, (cout,), jnp.float32)) + 0.5
        # TODO(synk): PyTorch default is train-mode BN (batch stats); we fold
        # eval-mode BN (running stats) into the conv — the standard inference path.
        return _fold_bn(w, gamma, beta, mean, var)

    keys = jax.random.split(key, 6)
    params = [
        make_conv_bn(keys[0], 1, 1, C1, c_),        # cv1
        make_conv_bn(keys[1], 1, 1, C1, c_),        # cv2
        make_conv_bn(keys[2], 1, 1, c_, c_),        # m[0].cv1 (e=1.0)
        make_conv_bn(keys[3], 3, 3, c_, c_),        # m[0].cv2
        make_conv_bn(keys[4], 1, 1, 2 * c_, C2),    # cv3
    ]
    x = jax.random.normal(keys[5], (N, C1, H, W), jnp.float32)

    # tile_rows=8 -> 2 spatial tiles per image: exercises the halo/boundary path.
    out = jax.block_until_ready(c3_forward(x, params, tile_rows=8))
    ref = c3_ref(x, params)

    assert out.shape == (N, C2, H, W), out.shape
    max_err = float(jnp.max(jnp.abs(out - ref)))
    # Kernel output is bf16 (per perf review) -> allow one bf16 ULP of slack.
    assert jnp.allclose(out, ref, atol=1e-2, rtol=1e-2), max_err
    print("KERNEL_OK")
</pallas_src>

<mosaic_0001>
module attributes {stable_mosaic.version = 11 : i64} {
  func.func @c3_kernel(%arg0: i32, %arg1: i32, %arg2: memref<1x8x16x128xbf16, #tpu.memory_space<vmem>>, %arg3: memref<1x1x16x128xbf16, #tpu.memory_space<vmem>>, %arg4: memref<1x1x16x128xbf16, #tpu.memory_space<vmem>>, %arg5: memref<128x256xbf16, #tpu.memory_space<vmem>>, %arg6: memref<1x256xf32, #tpu.memory_space<vmem>>, %arg7: memref<128x128xbf16, #tpu.memory_space<vmem>>, %arg8: memref<1x128xf32, #tpu.memory_space<vmem>>, %arg9: memref<3x3x128x128xbf16, #tpu.memory_space<vmem>>, %arg10: memref<1x128xf32, #tpu.memory_space<vmem>>, %arg11: memref<128x128xbf16, #tpu.memory_space<vmem>>, %arg12: memref<128x128xbf16, #tpu.memory_space<vmem>>, %arg13: memref<1x128xf32, #tpu.memory_space<vmem>>, %arg14: memref<1x8x16x128xbf16, #tpu.memory_space<vmem>>, %arg15: memref<10x18x128xbf16, #tpu.memory_space<vmem>>) attributes {dimension_semantics = [#tpu.dimension_semantics<parallel>, #tpu.dimension_semantics<parallel>], iteration_bounds = array<i64: 2, 2>, scalar_prefetch = 0 : i64, scratch_operands = 1 : i64, tpu.core_type = #tpu.core_type<tc>, window_params = [{transform_indices = @transform_0, window_bounds = array<i64: 1, 8, 16, 128>}, {transform_indices = @transform_1, window_bounds = array<i64: 1, 1, 16, 128>}, {transform_indices = @transform_2, window_bounds = array<i64: 1, 1, 16, 128>}, {pipeline_mode = #tpu.pipeline_mode<synchronous>, transform_indices = @transform_3, window_bounds = array<i64: 128, 256>}, {pipeline_mode = #tpu.pipeline_mode<synchronous>, transform_indices = @transform_4, window_bounds = array<i64: 1, 256>}, {pipeline_mode = #tpu.pipeline_mode<synchronous>, transform_indices = @transform_5, window_bounds = array<i64: 128, 128>}, {pipeline_mode = #tpu.pipeline_mode<synchronous>, transform_indices = @transform_6, window_bounds = array<i64: 1, 128>}, {pipeline_mode = #tpu.pipeline_mode<synchronous>, transform_indices = @transform_7, window_bounds = array<i64: 3, 3, 128, 128>}, {pipeline_mode = #tpu.pipeline_mode<synchronous>, transform_indices = @transform_8, window_bounds = array<i64: 1, 128>}, {pipeline_mode = #tpu.pipeline_mode<synchronous>, transform_indices = @transform_9, window_bounds = array<i64: 128, 128>}, {pipeline_mode = #tpu.pipeline_mode<synchronous>, transform_indices = @transform_10, window_bounds = array<i64: 128, 128>}, {pipeline_mode = #tpu.pipeline_mode<synchronous>, transform_indices = @transform_11, window_bounds = array<i64: 1, 128>}, {transform_indices = @transform_12, window_bounds = array<i64: 1, 8, 16, 128>}]} {
    %c0 = arith.constant 0 : index
    %c0_0 = arith.constant 0 : index
    %0 = vector.load %arg5[%c0, %c0_0] : memref<128x256xbf16, #tpu.memory_space<vmem>>, vector<128x256xbf16>
    %c0_1 = arith.constant 0 : index
    %c0_2 = arith.constant 0 : index
    %1 = vector.load %arg6[%c0_1, %c0_2] : memref<1x256xf32, #tpu.memory_space<vmem>>, vector<1x256xf32>
    %c0_3 = arith.constant 0 : index
    %c0_4 = arith.constant 0 : index
    %2 = vector.load %arg7[%c0_3, %c0_4] : memref<128x128xbf16, #tpu.memory_space<vmem>>, vector<128x128xbf16>
    %c0_5 = arith.constant 0 : index
    %c0_6 = arith.constant 0 : index
    %3 = vector.load %arg8[%c0_5, %c0_6] : memref<1x128xf32, #tpu.memory_space<vmem>>, vector<1x128xf32>
    %c0_7 = arith.constant 0 : index
    %c0_8 = arith.constant 0 : index
    %c0_9 = arith.constant 0 : index
    %c0_10 = arith.constant 0 : index
    %4 = vector.load %arg3[%c0_7, %c0_8, %c0_9, %c0_10] : memref<1x1x16x128xbf16, #tpu.memory_space<vmem>>, vector<1x1x16x128xbf16>
    %5 = vector.shape_cast %4 : vector<1x1x16x128xbf16> to vector<16x128xbf16>
    %cst = arith.constant dense<0.000000e+00> : vector<16x256xf32>
    %6 = tpu.matmul %5, %0, %cst {dimension_numbers = #tpu.dot_dimension_numbers<[1], [0], [0], [1], [0, 0, 1, 1], [], []>} : vector<16x128xbf16>, vector<128x256xbf16>, vector<16x256xf32> -> vector<16x256xf32>
    %7 = vector.broadcast %1 : vector<1x256xf32> to vector<16x256xf32>
    %8 = arith.addf %6, %7 : vector<16x256xf32>
    %cst_11 = arith.constant 0.000000e+00 : f32
    %9 = vector.broadcast %cst_11 : f32 to vector<16x256xf32>
    %10 = arith.maximumf %8, %9 : vector<16x256xf32>
    %11 = vector.extract_strided_slice %10 {offsets = [0, 0], sizes = [16, 128], strides = [1, 1]} : vector<16x256xf32> to vector<16x128xf32>
    %12 = arith.truncf %11 : vector<16x128xf32> to vector<16x128xbf16>
    %cst_12 = arith.constant dense<0.000000e+00> : vector<16x128xf32>
    %13 = tpu.matmul %12, %2, %cst_12 {dimension_numbers = #tpu.dot_dimension_numbers<[1], [0], [0], [1], [0, 0, 1, 1], [], []>} : vector<16x128xbf16>, vector<128x128xbf16>, vector<16x128xf32> -> vector<16x128xf32>
    %14 = vector.broadcast %3 : vector<1x128xf32> to vector<16x128xf32>
    %15 = arith.addf %13, %14 : vector<16x128xf32>
    %cst_13 = arith.constant 0.000000e+00 : f32
    %16 = vector.broadcast %cst_13 : f32 to vector<16x128xf32>
    %17 = arith.maximumf %15, %16 : vector<16x128xf32>
    %c0_i32 = arith.constant 0 : i32
    %18 = arith.cmpi eq, %arg1, %c0_i32 : i32
    %cst_14 = arith.constant 0.000000e+00 : f32
    %19 = vector.broadcast %cst_14 : f32 to vector<16x128xf32>
    %20 = arith.select %18, %19, %17 : vector<16x128xf32>
    %21 = arith.truncf %20 : vector<16x128xf32> to vector<16x128xbf16>
    %22 = vector.shape_cast %21 : vector<16x128xbf16> to vector<1x16x128xbf16>
    %c0_15 = arith.constant 0 : index
    %c1 = arith.constant 1 : index
    %c0_16 = arith.constant 0 : index
    %23 = vector.load %arg15[%c0_15, %c1, %c0_16] : memref<10x18x128xbf16, #tpu.memory_space<vmem>>, vector<1x16x128xbf16>
    tpu.vector_store %arg15[%c0_15, %c1, %c0_16], %22 {strides = array<i32>} : memref<10x18x128xbf16, #tpu.memory_space<vmem>>, vector<1x16x128xbf16>,
    %c0_17 = arith.constant 0 : index
    %c0_18 = arith.constant 0 : index
    %c0_19 = arith.constant 0 : index
    %c0_20 = arith.constant 0 : index
    %24 = vector.load %arg4[%c0_17, %c0_18, %c0_19, %c0_20] : memref<1x1x16x128xbf16, #tpu.memory_space<vmem>>, vector<1x1x16x128xbf16>
    %25 = vector.shape_cast %24 : vector<1x1x16x128xbf16> to vector<16x128xbf16>
    %cst_21 = arith.constant dense<0.000000e+00> : vector<16x256xf32>
    %26 = tpu.matmul %25, %0, %cst_21 {dimension_numbers = #tpu.dot_dimension_numbers<[1], [0], [0], [1], [0, 0, 1, 1], [], []>} : vector<16x128xbf16>, vector<128x256xbf16>, vector<16x256xf32> -> vector<16x256xf32>
    %27 = vector.broadcast %1 : vector<1x256xf32> to vector<16x256xf32>
    %28 = arith.addf %26, %27 : vector<16x256xf32>
    %cst_22 = arith.constant 0.000000e+00 : f32
    %29 = vector.broadcast %cst_22 : f32 to vector<16x256xf32>
    %30 = arith.maximumf %28, %29 : vector<16x256xf32>
    %31 = vector.extract_strided_slice %30 {offsets = [0, 0], sizes = [16, 128], strides = [1, 1]} : vector<16x256xf32> to vector<16x128xf32>
    %32 = arith.truncf %31 : vector<16x128xf32> to vector<16x128xbf16>
    %cst_23 = arith.constant dense<0.000000e+00> : vector<16x128xf32>
    %33 = tpu.matmul %32, %2, %cst_23 {dimension_numbers = #tpu.dot_dimension_numbers<[1], [0], [0], [1], [0, 0, 1, 1], [], []>} : vector<16x128xbf16>, vector<128x128xbf16>, vector<16x128xf32> -> vector<16x128xf32>
    %34 = vector.broadcast %3 : vector<1x128xf32> to vector<16x128xf32>
    %35 = arith.addf %33, %34 : vector<16x128xf32>
    %cst_24 = arith.constant 0.000000e+00 : f32
    %36 = vector.broadcast %cst_24 : f32 to vector<16x128xf32>
    %37 = arith.maximumf %35, %36 : vector<16x128xf32>
    %c1_i32 = arith.constant 1 : i32
    %38 = arith.cmpi eq, %arg1, %c1_i32 : i32
    %cst_25 = arith.constant 0.000000e+00 : f32
    %39 = vector.broadcast %cst_25 : f32 to vector<16x128xf32>
    %40 = arith.select %38, %39, %37 : vector<16x128xf32>
    %41 = arith.truncf %40 : vector<16x128xf32> to vector<16x128xbf16>
    %42 = vector.shape_cast %41 : vector<16x128xbf16> to vector<1x16x128xbf16>
    %c9 = arith.constant 9 : index
    %c1_26 = arith.constant 1 : index
    %c0_27 = arith.constant 0 : index
    %43 = vector.load %arg15[%c9, %c1_26, %c0_27] : memref<10x18x128xbf16, #tpu.memory_space<vmem>>, vector<1x16x128xbf16>
    tpu.vector_store %arg15[%c9, %c1_26, %c0_27], %42 {strides = array<i32>} : memref<10x18x128xbf16, #tpu.memory_space<vmem>>, vector<1x16x128xbf16>,
    %c0_28 = arith.constant 0 : index
    %c0_29 = arith.constant 0 : index
    %c0_30 = arith.constant 0 : index
    %c0_31 = arith.constant 0 : index
    %44 = vector.load %arg2[%c0_28, %c0_29, %c0_30, %c0_31] : memref<1x8x16x128xbf16, #tpu.memory_space<vmem>>, vector<1x8x16x128xbf16>
    %45 = vector.shape_cast %44 : vector<1x8x16x128xbf16> to vector<8x16x128xbf16>
    %46 = vector.shape_cast %45 : vector<8x16x128xbf16> to vector<128x128xbf16>
    %cst_32 = arith.constant dense<0.000000e+00> : vector<128x256xf32>
    %47 = tpu.matmul %46, %0, %cst_32 {dimension_numbers = #tpu.dot_dimension_numbers<[1], [0], [0], [1], [0, 0, 1, 1], [], []>} : vector<128x128xbf16>, vector<128x256xbf16>, vector<128x256xf32> -> vector<128x256xf32>
    %48 = vector.broadcast %1 : vector<1x256xf32> to vector<128x256xf32>
    %49 = arith.addf %47, %48 : vector<128x256xf32>
    %cst_33 = arith.constant 0.000000e+00 : f32
    %50 = vector.broadcast %cst_33 : f32 to vector<128x256xf32>
    %51 = arith.maximumf %49, %50 : vector<128x256xf32>
    %52 = vector.extract_strided_slice %51 {offsets = [0, 0], sizes = [128, 128], strides = [1, 1]} : vector<128x256xf32> to vector<128x128xf32>
    %53 = vector.extract_strided_slice %51 {offsets = [0, 128], sizes = [128, 128], strides = [1, 1]} : vector<128x256xf32> to vector<128x128xf32>
    %54 = arith.truncf %52 : vector<128x128xf32> to vector<128x128xbf16>
    %cst_34 = arith.constant dense<0.000000e+00> : vector<128x128xf32>
    %55 = tpu.matmul %54, %2, %cst_34 {dimension_numbers = #tpu.dot_dimension_numbers<[1], [0], [0], [1], [0, 0, 1, 1], [], []>} : vector<128x128xbf16>, vector<128x128xbf16>, vector<128x128xf32> -> vector<128x128xf32>
    %56 = vector.broadcast %3 : vector<1x128xf32> to vector<128x128xf32>
    %57 = arith.addf %55, %56 : vector<128x128xf32>
    %cst_35 = arith.constant 0.000000e+00 : f32
    %58 = vector.broadcast %cst_35 : f32 to vector<128x128xf32>
    %59 = arith.maximumf %57, %58 : vector<128x128xf32>
    %60 = arith.truncf %59 : vector<128x128xf32> to vector<128x128xbf16>
    %61 = vector.shape_cast %60 : vector<128x128xbf16> to vector<8x16x128xbf16>
    %c1_36 = arith.constant 1 : index
    %c1_37 = arith.constant 1 : index
    %c0_38 = arith.constant 0 : index
    %62 = vector.load %arg15[%c1_36, %c1_37, %c0_38] : memref<10x18x128xbf16, #tpu.memory_space<vmem>>, vector<8x16x128xbf16>
    tpu.vector_store %arg15[%c1_36, %c1_37, %c0_38], %61 {strides = array<i32>} : memref<10x18x128xbf16, #tpu.memory_space<vmem>>, vector<8x16x128xbf16>,
    %cst_39 = arith.constant 0.000000e+00 : bf16
    %63 = vector.broadcast %cst_39 : bf16 to vector<10x1x128xbf16>
    %c0_40 = arith.constant 0 : index
    %c0_41 = arith.constant 0 : index
    %c0_42 = arith.constant 0 : index
    %64 = vector.load %arg15[%c0_40, %c0_41, %c0_42] : memref<10x18x128xbf16, #tpu.memory_space<vmem>>, vector<10x1x128xbf16>
    tpu.vector_store %arg15[%c0_40, %c0_41, %c0_42], %63 {strides = array<i32>} : memref<10x18x128xbf16, #tpu.memory_space<vmem>>, vector<10x1x128xbf16>,
    %c0_43 = arith.constant 0 : index
    %c17 = arith.constant 17 : index
    %c0_44 = arith.constant 0 : index
    %65 = vector.load %arg15[%c0_43, %c17, %c0_44] : memref<10x18x128xbf16, #tpu.memory_space<vmem>>, vector<10x1x128xbf16>
    tpu.vector_store %arg15[%c0_43, %c17, %c0_44], %63 {strides = array<i32>} : memref<10x18x128xbf16, #tpu.memory_space<vmem>>, vector<10x1x128xbf16>,
    %c0_45 = arith.constant 0 : index
    %c0_46 = arith.constant 0 : index
    %66 = vector.load %arg10[%c0_45, %c0_46] : memref<1x128xf32, #tpu.memory_space<vmem>>, vector<1x128xf32>
    %c0_47 = arith.constant 0 : index
    %c0_48 = arith.constant 0 : index
    %c0_49 = arith.constant 0 : index
    %67 = vector.load %arg15[%c0_47, %c0_48, %c0_49] : memref<10x18x128xbf16, #tpu.memory_space<vmem>>, vector<8x16x128xbf16>
    %68 = vector.shape_cast %67 : vector<8x16x128xbf16> to vector<128x128xbf16>
    %c0_50 = arith.constant 0 : index
    %c0_51 = arith.constant 0 : index
    %c0_52 = arith.constant 0 : index
    %c0_53 = arith.constant 0 : index
    %69 = vector.load %arg9[%c0_50, %c0_51, %c0_52, %c0_53] : memref<3x3x128x128xbf16, #tpu.memory_space<vmem>>, vector<1x1x128x128xbf16>
    %70 = vector.shape_cast %69 : vector<1x1x128x128xbf16> to vector<128x128xbf16>
    %cst_54 = arith.constant dense<0.000000e+00> : vector<128x128xf32>
    %71 = tpu.matmul %68, %70, %cst_54 {dimension_numbers = #tpu.dot_dimension_numbers<[1], [0], [0], [1], [0, 0, 1, 1], [], []>} : vector<128x128xbf16>, vector<128x128xbf16>, vector<128x128xf32> -> vector<128x128xf32>
    %72 = vector.broadcast %66 : vector<1x128xf32> to vector<128x128xf32>
    %73 = arith.addf %72, %71 : vector<128x128xf32>
    %c0_55 = arith.constant 0 : index
    %c1_56 = arith.constant 1 : index
    %c0_57 = arith.constant 0 : index
    %74 = vector.load %arg15[%c0_55, %c1_56, %c0_57] : memref<10x18x128xbf16, #tpu.memory_space<vmem>>, vector<8x16x128xbf16>
    %75 = vector.shape_cast %74 : vector<8x16x128xbf16> to vector<128x128xbf16>
    %c0_58 = arith.constant 0 : index
    %c1_59 = arith.constant 1 : index
    %c0_60 = arith.constant 0 : index
    %c0_61 = arith.constant 0 : index
    %76 = vector.load %arg9[%c0_58, %c1_59, %c0_60, %c0_61] : memref<3x3x128x128xbf16, #tpu.memory_space<vmem>>, vector<1x1x128x128xbf16>
    %77 = vector.shape_cast %76 : vector<1x1x128x128xbf16> to vector<128x128xbf16>
    %cst_62 = arith.constant dense<0.000000e+00> : vector<128x128xf32>
    %78 = tpu.matmul %75, %77, %cst_62 {dimension_numbers = #tpu.dot_dimension_numbers<[1], [0], [0], [1], [0, 0, 1, 1], [], []>} : vector<128x128xbf16>, vector<128x128xbf16>, vector<128x128xf32> -> vector<128x128xf32>
    %79 = arith.addf %73, %78 : vector<128x128xf32>
    %c0_63 = arith.constant 0 : index
    %c2 = arith.constant 2 : index
    %c0_64 = arith.constant 0 : index
    %80 = vector.load %arg15[%c0_63, %c2, %c0_64] : memref<10x18x128xbf16, #tpu.memory_space<vmem>>, vector<8x16x128xbf16>
    %81 = vector.shape_cast %80 : vector<8x16x128xbf16> to vector<128x128xbf16>
    %c0_65 = arith.constant 0 : index
    %c2_66 = arith.constant 2 : index
    %c0_67 = arith.constant 0 : index
    %c0_68 = arith.constant 0 : index
    %82 = vector.load %arg9[%c0_65, %c2_66, %c0_67, %c0_68] : memref<3x3x128x128xbf16, #tpu.memory_space<vmem>>, vector<1x1x128x128xbf16>
    %83 = vector.shape_cast %82 : vector<1x1x128x128xbf16> to vector<128x128xbf16>
    %cst_69 = arith.constant dense<0.000000e+00> : vector<128x128xf32>
    %84 = tpu.matmul %81, %83, %cst_69 {dimension_numbers = #tpu.dot_dimension_numbers<[1], [0], [0], [1], [0, 0, 1, 1], [], []>} : vector<128x128xbf16>, vector<128x128xbf16>, vector<128x128xf32> -> vector<128x128xf32>
    %85 = arith.addf %79, %84 : vector<128x128xf32>
    %c1_70 = arith.constant 1 : index
    %c0_71 = arith.constant 0 : index
    %c0_72 = arith.constant 0 : index
    %86 = vector.load %arg15[%c1_70, %c0_71, %c0_72] : memref<10x18x128xbf16, #tpu.memory_space<vmem>>, vector<8x16x128xbf16>
    %87 = vector.shape_cast %86 : vector<8x16x128xbf16> to vector<128x128xbf16>
    %c1_73 = arith.constant 1 : index
    %c0_74 = arith.constant 0 : index
    %c0_75 = arith.constant 0 : index
    %c0_76 = arith.constant 0 : index
    %88 = vector.load %arg9[%c1_73, %c0_74, %c0_75, %c0_76] : memref<3x3x128x128xbf16, #tpu.memory_space<vmem>>, vector<1x1x128x128xbf16>
    %89 = vector.shape_cast %88 : vector<1x1x128x128xbf16> to vector<128x128xbf16>
    %cst_77 = arith.constant dense<0.000000e+00> : vector<128x128xf32>
    %90 = tpu.matmul %87, %89, %cst_77 {dimension_numbers = #tpu.dot_dimension_numbers<[1], [0], [0], [1], [0, 0, 1, 1], [], []>} : vector<128x128xbf16>, vector<128x128xbf16>, vector<128x128xf32> -> vector<128x128xf32>
    %91 = arith.addf %85, %90 : vector<128x128xf32>
    %c1_78 = arith.constant 1 : index
    %c1_79 = arith.constant 1 : index
    %c0_80 = arith.constant 0 : index
    %92 = vector.load %arg15[%c1_78, %c1_79, %c0_80] : memref<10x18x128xbf16, #tpu.memory_space<vmem>>, vector<8x16x128xbf16>
    %93 = vector.shape_cast %92 : vector<8x16x128xbf16> to vector<128x128xbf16>
    %c1_81 = arith.constant 1 : index
    %c1_82 = arith.constant 1 : index
    %c0_83 = arith.constant 0 : index
    %c0_84 = arith.constant 0 : index
    %94 = vector.load %arg9[%c1_81, %c1_82, %c0_83, %c0_84] : memref<3x3x128x128xbf16, #tpu.memory_space<vmem>>, vector<1x1x128x128xbf16>
    %95 = vector.shape_cast %94 : vector<1x1x128x128xbf16> to vector<128x128xbf16>
    %cst_85 = arith.constant dense<0.000000e+00> : vector<128x128xf32>
    %96 = tpu.matmul %93, %95, %cst_85 {dimension_numbers = #tpu.dot_dimension_numbers<[1], [0], [0], [1], [0, 0, 1, 1], [], []>} : vector<128x128xbf16>, vector<128x128xbf16>, vector<128x128xf32> -> vector<128x128xf32>
    %97 = arith.addf %91, %96 : vector<128x128xf32>
    %c1_86 = arith.constant 1 : index
    %c2_87 = arith.constant 2 : index
    %c0_88 = arith.constant 0 : index
    %98 = vector.load %arg15[%c1_86, %c2_87, %c0_88] : memref<10x18x128xbf16, #tpu.memory_space<vmem>>, vector<8x16x128xbf16>
    %99 = vector.shape_cast %98 : vector<8x16x128xbf16> to vector<128x128xbf16>
    %c1_89 = arith.constant 1 : index
    %c2_90 = arith.constant 2 : index
    %c0_91 = arith.constant 0 : index
    %c0_92 = arith.constant 0 : index
    %100 = vector.load %arg9[%c1_89, %c2_90, %c0_91, %c0_92] : memref<3x3x128x128xbf16, #tpu.memory_space<vmem>>, vector<1x1x128x128xbf16>
    %101 = vector.shape_cast %100 : vector<1x1x128x128xbf16> to vector<128x128xbf16>
    %cst_93 = arith.constant dense<0.000000e+00> : vector<128x128xf32>
    %102 = tpu.matmul %99, %101, %cst_93 {dimension_numbers = #tpu.dot_dimension_numbers<[1], [0], [0], [1], [0, 0, 1, 1], [], []>} : vector<128x128xbf16>, vector<128x128xbf16>, vector<128x128xf32> -> vector<128x128xf32>
    %103 = arith.addf %97, %102 : vector<128x128xf32>
    %c2_94 = arith.constant 2 : index
    %c0_95 = arith.constant 0 : index
    %c0_96 = arith.constant 0 : index
    %104 = vector.load %arg15[%c2_94, %c0_95, %c0_96] : memref<10x18x128xbf16, #tpu.memory_space<vmem>>, vector<8x16x128xbf16>
    %105 = vector.shape_cast %104 : vector<8x16x128xbf16> to vector<128x128xbf16>
    %c2_97 = arith.constant 2 : index
    %c0_98 = arith.constant 0 : index
    %c0_99 = arith.constant 0 : index
    %c0_100 = arith.constant 0 : index
    %106 = vector.load %arg9[%c2_97, %c0_98, %c0_99, %c0_100] : memref<3x3x128x128xbf16, #tpu.memory_space<vmem>>, vector<1x1x128x128xbf16>
    %107 = vector.shape_cast %106 : vector<1x1x128x128xbf16> to vector<128x128xbf16>
    %cst_101 = arith.constant dense<0.000000e+00> : vector<128x128xf32>
    %108 = tpu.matmul %105, %107, %cst_101 {dimension_numbers = #tpu.dot_dimension_numbers<[1], [0], [0], [1], [0, 0, 1, 1], [], []>} : vector<128x128xbf16>, vector<128x128xbf16>, vector<128x128xf32> -> vector<128x128xf32>
    %109 = arith.addf %103, %108 : vector<128x128xf32>
    %c2_102 = arith.constant 2 : index
    %c1_103 = arith.constant 1 : index
    %c0_104 = arith.constant 0 : index
    %110 = vector.load %arg15[%c2_102, %c1_103, %c0_104] : memref<10x18x128xbf16, #tpu.memory_space<vmem>>, vector<8x16x128xbf16>
    %111 = vector.shape_cast %110 : vector<8x16x128xbf16> to vector<128x128xbf16>
    %c2_105 = arith.constant 2 : index
    %c1_106 = arith.constant 1 : index
    %c0_107 = arith.constant 0 : index
    %c0_108 = arith.constant 0 : index
    %112 = vector.load %arg9[%c2_105, %c1_106, %c0_107, %c0_108] : memref<3x3x128x128xbf16, #tpu.memory_space<vmem>>, vector<1x1x128x128xbf16>
    %113 = vector.shape_cast %112 : vector<1x1x128x128xbf16> to vector<128x128xbf16>
    %cst_109 = arith.constant dense<0.000000e+00> : vector<128x128xf32>
    %114 = tpu.matmul %111, %113, %cst_109 {dimension_numbers = #tpu.dot_dimension_numbers<[1], [0], [0], [1], [0, 0, 1, 1], [], []>} : vector<128x128xbf16>, vector<128x128xbf16>, vector<128x128xf32> -> vector<128x128xf32>
    %115 = arith.addf %109, %114 : vector<128x128xf32>
    %c2_110 = arith.constant 2 : index
    %c2_111 = arith.constant 2 : index
    %c0_112 = arith.constant 0 : index
    %116 = vector.load %arg15[%c2_110, %c2_111, %c0_112] : memref<10x18x128xbf16, #tpu.memory_space<vmem>>, vector<8x16x128xbf16>
    %117 = vector.shape_cast %116 : vector<8x16x128xbf16> to vector<128x128xbf16>
    %c2_113 = arith.constant 2 : index
    %c2_114 = arith.constant 2 : index
    %c0_115 = arith.constant 0 : index
    %c0_116 = arith.constant 0 : index
    %118 = vector.load %arg9[%c2_113, %c2_114, %c0_115, %c0_116] : memref<3x3x128x128xbf16, #tpu.memory_space<vmem>>, vector<1x1x128x128xbf16>
    %119 = vector.shape_cast %118 : vector<1x1x128x128xbf16> to vector<128x128xbf16>
    %cst_117 = arith.constant dense<0.000000e+00> : vector<128x128xf32>
    %120 = tpu.matmul %117, %119, %cst_117 {dimension_numbers = #tpu.dot_dimension_numbers<[1], [0], [0], [1], [0, 0, 1, 1], [], []>} : vector<128x128xbf16>, vector<128x128xbf16>, vector<128x128xf32> -> vector<128x128xf32>
    %121 = arith.addf %115, %120 : vector<128x128xf32>
    %cst_118 = arith.constant 0.000000e+00 : f32
    %122 = vector.broadcast %cst_118 : f32 to vector<128x128xf32>
    %123 = arith.maximumf %121, %122 : vector<128x128xf32>
    %124 = arith.addf %52, %123 : vector<128x128xf32>
    %125 = arith.truncf %124 : vector<128x128xf32> to vector<128x128xbf16>
    %c0_119 = arith.constant 0 : index
    %c0_120 = arith.constant 0 : index
    %126 = vector.load %arg11[%c0_119, %c0_120] : memref<128x128xbf16, #tpu.memory_space<vmem>>, vector<128x128xbf16>
    %cst_121 = arith.constant dense<0.000000e+00> : vector<128x128xf32>
    %127 = tpu.matmul %125, %126, %cst_121 {dimension_numbers = #tpu.dot_dimension_numbers<[1], [0], [0], [1], [0, 0, 1, 1], [], []>} : vector<128x128xbf16>, vector<128x128xbf16>, vector<128x128xf32> -> vector<128x128xf32>
    %128 = arith.truncf %53 : vector<128x128xf32> to vector<128x128xbf16>
    %c0_122 = arith.constant 0 : index
    %c0_123 = arith.constant 0 : index
    %129 = vector.load %arg12[%c0_122, %c0_123] : memref<128x128xbf16, #tpu.memory_space<vmem>>, vector<128x128xbf16>
    %cst_124 = arith.constant dense<0.000000e+00> : vector<128x128xf32>
    %130 = tpu.matmul %128, %129, %cst_124 {dimension_numbers = #tpu.dot_dimension_numbers<[1], [0], [0], [1], [0, 0, 1, 1], [], []>} : vector<128x128xbf16>, vector<128x128xbf16>, vector<128x128xf32> -> vector<128x128xf32>
    %131 = arith.addf %127, %130 : vector<128x128xf32>
    %c0_125 = arith.constant 0 : index
    %c0_126 = arith.constant 0 : index
    %132 = vector.load %arg13[%c0_125, %c0_126] : memref<1x128xf32, #tpu.memory_space<vmem>>, vector<1x128xf32>
    %133 = vector.broadcast %132 : vector<1x128xf32> to vector<128x128xf32>
    %134 = arith.addf %131, %133 : vector<128x128xf32>
    %cst_127 = arith.constant 0.000000e+00 : f32
    %135 = vector.broadcast %cst_127 : f32 to vector<128x128xf32>
    %136 = arith.maximumf %134, %135 : vector<128x128xf32>
    %137 = vector.shape_cast %136 : vector<128x128xf32> to vector<8x16x128xf32>
    %138 = arith.truncf %137 : vector<8x16x128xf32> to vector<8x16x128xbf16>
    %c0_128 = arith.constant 0 : index
    %c0_129 = arith.constant 0 : index
    %c0_130 = arith.constant 0 : index
    %c0_131 = arith.constant 0 : index
    %139 = vector.load %arg14[%c0_128, %c0_129, %c0_130, %c0_131] : memref<1x8x16x128xbf16, #tpu.memory_space<vmem>>, vector<1x8x16x128xbf16>
    %140 = vector.shape_cast %139 : vector<1x8x16x128xbf16> to vector<8x16x128xbf16>
    %141 = vector.shape_cast %138 : vector<8x16x128xbf16> to vector<1x8x16x128xbf16>
    tpu.vector_store %arg14[%c0_128, %c0_129, %c0_130, %c0_131], %141 {strides = array<i32>} : memref<1x8x16x128xbf16, #tpu.memory_space<vmem>>, vector<1x8x16x128xbf16>,
    return
  }
  func.func @transform_0(%arg0: i32, %arg1: i32) -> (i32, i32, i32, i32) {
    %c0_i32 = arith.constant 0 : i32
    %c0_i32_0 = arith.constant 0 : i32
    %c0_i32_1 = arith.constant 0 : i32
    return %arg0, %arg1, %c0_i32, %c0_i32_0 : i32, i32, i32, i32
  }
  func.func @transform_1(%arg0: i32, %arg1: i32) -> (i32, i32, i32, i32) {
    %c8_i32 = arith.constant 8 : i32
    %0 = arith.muli %arg1, %c8_i32 : i32
    %c1_i32 = arith.constant 1 : i32
    %1 = arith.subi %0, %c1_i32 : i32
    %c0_i32 = arith.constant 0 : i32
    %2 = arith.maxsi %1, %c0_i32 : i32
    %c0_i32_0 = arith.constant 0 : i32
    %c0_i32_1 = arith.constant 0 : i32
    %c0_i32_2 = arith.constant 0 : i32
    return %arg0, %2, %c0_i32_0, %c0_i32_1 : i32, i32, i32, i32
  }
  func.func @transform_2(%arg0: i32, %arg1: i32) -> (i32, i32, i32, i32) {
    %c8_i32 = arith.constant 8 : i32
    %0 = arith.muli %arg1, %c8_i32 : i32
    %c8_i32_0 = arith.constant 8 : i32
    %1 = arith.addi %0, %c8_i32_0 : i32
    %c15_i32 = arith.constant 15 : i32
    %2 = arith.minsi %1, %c15_i32 : i32
    %c0_i32 = arith.constant 0 : i32
    %c0_i32_1 = arith.constant 0 : i32
    %c0_i32_2 = arith.constant 0 : i32
    return %arg0, %2, %c0_i32, %c0_i32_1 : i32, i32, i32, i32
  }
  func.func @transform_3(%arg0: i32, %arg1: i32) -> (i32, i32) {
    %c0_i32 = arith.constant 0 : i32
    %c0_i32_0 = arith.constant 0 : i32
    %c0_i32_1 = arith.constant 0 : i32
    return %c0_i32, %c0_i32_0 : i32, i32
  }
  func.func @transform_4(%arg0: i32, %arg1: i32) -> (i32, i32) {
    %c0_i32 = arith.constant 0 : i32
    %c0_i32_0 = arith.constant 0 : i32
    %c0_i32_1 = arith.constant 0 : i32
    return %c0_i32, %c0_i32_0 : i32, i32
  }
  func.func @transform_5(%arg0: i32, %arg1: i32) -> (i32, i32) {
    %c0_i32 = arith.constant 0 : i32
    %c0_i32_0 = arith.constant 0 : i32
    %c0_i32_1 = arith.constant 0 : i32
    return %c0_i32, %c0_i32_0 : i32, i32
  }
  func.func @transform_6(%arg0: i32, %arg1: i32) -> (i32, i32) {
    %c0_i32 = arith.constant 0 : i32
    %c0_i32_0 = arith.constant 0 : i32
    %c0_i32_1 = arith.constant 0 : i32
    return %c0_i32, %c0_i32_0 : i32, i32
  }
  func.func @transform_7(%arg0: i32, %arg1: i32) -> (i32, i32, i32, i32) {
    %c0_i32 = arith.constant 0 : i32
    %c0_i32_0 = arith.constant 0 : i32
    %c0_i32_1 = arith.constant 0 : i32
    %c0_i32_2 = arith.constant 0 : i32
    %c0_i32_3 = arith.constant 0 : i32
    return %c0_i32, %c0_i32_0, %c0_i32_1, %c0_i32_2 : i32, i32, i32, i32
  }
  func.func @transform_8(%arg0: i32, %arg1: i32) -> (i32, i32) {
    %c0_i32 = arith.constant 0 : i32
    %c0_i32_0 = arith.constant 0 : i32
    %c0_i32_1 = arith.constant 0 : i32
    return %c0_i32, %c0_i32_0 : i32, i32
  }
  func.func @transform_9(%arg0: i32, %arg1: i32) -> (i32, i32) {
    %c0_i32 = arith.constant 0 : i32
    %c0_i32_0 = arith.constant 0 : i32
    %c0_i32_1 = arith.constant 0 : i32
    return %c0_i32, %c0_i32_0 : i32, i32
  }
  func.func @transform_10(%arg0: i32, %arg1: i32) -> (i32, i32) {
    %c0_i32 = arith.constant 0 : i32
    %c0_i32_0 = arith.constant 0 : i32
    %c0_i32_1 = arith.constant 0 : i32
    return %c0_i32, %c0_i32_0 : i32, i32
  }
  func.func @transform_11(%arg0: i32, %arg1: i32) -> (i32, i32) {
    %c0_i32 = arith.constant 0 : i32
    %c0_i32_0 = arith.constant 0 : i32
    %c0_i32_1 = arith.constant 0 : i32
    return %c0_i32, %c0_i32_0 : i32, i32
  }
  func.func @transform_12(%arg0: i32, %arg1: i32) -> (i32, i32, i32, i32) {
    %c0_i32 = arith.constant 0 : i32
    %c0_i32_0 = arith.constant 0 : i32
    %c0_i32_1 = arith.constant 0 : i32
    return %arg0, %arg1, %c0_i32, %c0_i32_0 : i32, i32, i32, i32
  }
}

</mosaic_0001>

<llo_original>
// kernel: tpu_custom_call.1
$region0: #{tpu_custom_call.1}
  #allocation0 [shape = 'u32[]', space=smem, size = 0x4, offset = 0x4, fixed_abs, tag = 'smem constant byte address 0x4 - core index']
  #allocation1 [shape = 'u32[144,128]{1,0:T(1,128)}', space=vmem, size = 0x12000, scoped, tag = 'internal scratch']
  #allocation2 [shape = 'bf16[10,18,128]{2,1,0:T(8,128)(2,1)}', space=vmem, size = 0xf000, scoped, tag = 'scratch operand']
  %s0 = inlined_call_operand.hbm [shape: bf16[2,16,16,128], index: 0, kind: input, shape index: {}]
  %s1 = inlined_call_operand.hbm [shape: bf16[2,16,16,128], index: 1, kind: input, shape index: {}]
  %s2 = inlined_call_operand.hbm [shape: bf16[2,16,16,128], index: 2, kind: input, shape index: {}]
  %s3 = inlined_call_operand.hbm [shape: bf16[128,256], index: 3, kind: input, shape index: {}]
  %s4 = inlined_call_operand.vmem [shape: f32[1,256], index: 4, kind: input, shape index: {}]
  %s5 = inlined_call_operand.hbm [shape: bf16[128,128], index: 5, kind: input, shape index: {}]
  %s6 = inlined_call_operand.vmem [shape: f32[1,128], index: 6, kind: input, shape index: {}]
  %s7 = inlined_call_operand.hbm [shape: bf16[3,3,128,128], index: 7, kind: input, shape index: {}]
  %s8 = inlined_call_operand.vmem [shape: f32[1,128], index: 8, kind: input, shape index: {}]
  %s9 = inlined_call_operand.hbm [shape: bf16[128,128], index: 9, kind: input, shape index: {}]
  %s10 = inlined_call_operand.hbm [shape: bf16[128,128], index: 10, kind: input, shape index: {}]
  %s11 = inlined_call_operand.vmem [shape: f32[1,128], index: 11, kind: input, shape index: {}]
  %s12 = inlined_call_operand.hbm [shape: bf16[2,16,16,128], index: 12, kind: output, shape index: {}]
  %s13 = sld [smem:[#allocation0]]
  $region113: #{tpu_custom_call.1} parent=0
    _
  %s15 = ssub.s32 1, %s13
  %s16 = scalar_select 0, %s15, %s13
  $region1: #{tpu_custom_call.1} parent=0
    #allocation3 [shape = 'u8[65536]{0}', space=vmem, size = 0x10000, scoped, tag = 'input window, operand 0']
    #allocation4 [shape = 's32[2]{0}', space=sflag, size = 0x8, scoped, tag = 'scoped memory for tpu_custom_call.1']
    #allocation5 [shape = 's32[2]{0}', space=sflag, size = 0x8, scoped, tag = 'scoped memory for tpu_custom_call.1']
    #allocation6 [shape = 'u8[8192]{0}', space=vmem, size = 0x2000, scoped, tag = 'input window, operand 1']
    #allocation7 [shape = 's32[2]{0}', space=sflag, size = 0x8, scoped, tag = 'scoped memory for tpu_custom_call.1']
    #allocation8 [shape = 'u8[8192]{0}', space=vmem, size = 0x2000, scoped, tag = 'input window, operand 2']
    #allocation9 [shape = 'u8[65536]{0}', space=vmem, size = 0x10000, scoped, tag = 'input window, operand 3, single buffered']
    #allocation10 [shape = 's32[1]{0}', space=sflag, size = 0x4, scoped, tag = 'scoped memory for tpu_custom_call.1']
    #allocation11 [shape = 'u8[32768]{0}', space=vmem, size = 0x8000, scoped, tag = 'input window, operand 5, single buffered']
    #allocation12 [shape = 'u8[294912]{0}', space=vmem, size = 0x48000, scoped, tag = 'input window, operand 7, single buffered']
    #allocation13 [shape = 's32[1]{0}', space=sflag, size = 0x4, scoped, tag = 'scoped memory for tpu_custom_call.1']
    #allocation14 [shape = 'u8[32768]{0}', space=vmem, size = 0x8000, scoped, tag = 'input window, operand 9, single buffered']
    #allocation15 [shape = 'u8[32768]{0}', space=vmem, size = 0x8000, scoped, tag = 'input window, operand 10, single buffered']
    #allocation16 [shape = 's32[1]{0}', space=sflag, size = 0x4, scoped, tag = 'scoped memory for tpu_custom_call.1']
    #allocation17 [shape = 'u8[65536]{0}', space=vmem, size = 0x10000, scoped, tag = 'output window, operand 0']
    %17 = vsyncpa [#allocation4], 0
    %s18 = scalar_lea.sflag [#allocation4], 1
    %19 = vsyncpa %s18, 0
    %20 = vsyncpa [#allocation7], 0
    %s21 = scalar_lea.sflag [#allocation7], 1
    %22 = vsyncpa %s21, 0
    %23 = vsyncpa [#allocation10], 0
    %24 = vsyncpa [#allocation13], 0
    %25 = vsyncpa [#allocation16], 0
    %26 = vsyncpa [#allocation5], 0
    %s27 = scalar_lea.sflag [#allocation5], 1
    %28 = vsyncpa %s27, 0
    loop: start=0, step=1, limit=6
    $region2: #{tpu_custom_call.1} parent=1 // loop_pre_header
      _
    $region3: #{tpu_custom_call.1} parent=1 // loop_header
      %s30 = sphi 0, %s34
      %p31 = scmp.ge.s32.totalorder %s30, 6
      %s37 = sphi 0, %s49
      %s38 = sphi 0, %s45
      %s39 = sphi 0, %s37
      %s40 = sphi 0, %s38
      %s41 = sphi 0, %s39
      %s42 = sphi 0, %s40
      %s54 = sphi 0, %s56
      %s57 = sphi 0, %s54
      %s58 = sphi 0, %s57
      %s74 = sphi 0, %s58
      %s90 = sphi 0, %s92
      %s93 = sphi 0, %s90
      %s94 = sphi 0, %s93
      %s110 = sphi 0, %s94
      %s126 = sphi 0, %s128
      %s129 = sphi 0, %s126
      %s130 = sphi 0, %s129
      %s146 = sphi 0, %s130
      %s150 = sphi 0, %s150
      %s152 = sphi 0, %s150
      %s153 = sphi 0, %s152
      %s167 = sphi 0, %s153
      %s171 = sphi 0, %s171
      %s173 = sphi 0, %s171
      %s174 = sphi 0, %s173
      %s188 = sphi 0, %s174
      %s192 = sphi 0, %s192
      %s194 = sphi 0, %s192
      %s195 = sphi 0, %s194
      %s209 = sphi 0, %s195
      %s213 = sphi 0, %s213
      %s215 = sphi 0, %s213
      %s216 = sphi 0, %s215
      %s230 = sphi 0, %s216
      %s234 = sphi 0, %s234
      %s236 = sphi 0, %s234
      %s237 = sphi 0, %s236
      %s251 = sphi 0, %s237
      %s255 = sphi 0, %s255
      %s257 = sphi 0, %s255
      %s258 = sphi 0, %s257
      %s272 = sphi 0, %s258
      %s276 = sphi 0, %s276
      %s278 = sphi 0, %s276
      %s279 = sphi 0, %s278
      %s293 = sphi 0, %s279
      %s297 = sphi 0, %s297
      %s299 = sphi 0, %s297
      %s300 = sphi 0, %s299
      %s314 = sphi 0, %s300
      %s318 = sphi 0, %s318
      %s320 = sphi 0, %s318
      %s321 = sphi 0, %s320
      %s335 = sphi 0, %s321
      %s343 = sphi 0, %s345
      %s346 = sphi 0, %s343
      %s347 = sphi 0, %s346
      %s363 = sphi 0, %s347
    $region4: #{tpu_custom_call.1} parent=1 // loop_header_branch
      %33 = sbr.rel (%p31) target = $region8
    $region5: #{tpu_custom_call.1} parent=1 // loop_body
      %s35 = ssub.s32 %s30, 1
      %s36 = ssub.s32 %s30, 2
      %s43 = sadd.s32 1, %s38
      %p44 = scmp.ge.s32.totalorder %s43, 2
      %s45 = scalar_select %p44, 0, %s43
      %s46 = sadd.s32 1, %s37
      %s47 = scalar_select %p44, %s46, %s37
      %p48 = scmp.ge.s32.totalorder %s47, 2
      %s49 = scalar_select %p48, 0, %s47
      %s50 = ssub.s32 %s37, %s49
      %s51 = ssub.s32 %s38, %s45
      %s52 = sor.u32 %s50, %s51
      %p53 = scmp.eq.s32.totalorder %s52, 0
      %s55 = sadd.s32 %s54, 1
      %s56 = scalar_select %p53, %s54, %s55
      %p59 = pneg %p53
      %p60 = scmp.eq.s32.totalorder %s30, 3
      %p61 = por %p59, %p60
      %p62 = scmp.ne.s32.totalorder %s54, %s57
      %p63 = scmp.eq.s32.totalorder %s30, 0
      %p64 = por %p62, %p63
      %p65 = scmp.ne.s32.totalorder %s54, %s57
      %p66 = scmp.eq.s32.totalorder %s35, 3
      %p67 = por %p65, %p66
      %p68 = scmp.ne.s32.totalorder %s57, %s58
      %p69 = scmp.eq.s32.totalorder %s35, 0
      %p70 = por %p68, %p69
      %p71 = scmp.ne.s32.totalorder %s57, %s58
      %p72 = scmp.eq.s32.totalorder %s36, 3
      %p73 = por %p71, %p72
      %p75 = scmp.ne.s32.totalorder %s58, %s74
      %p76 = scmp.eq.s32.totalorder %s36, 0
      %p77 = por %p75, %p76
      %s78 = smul.u32 %s38, 8
      %s79 = ssub.s32 %s78, 1
      %p80 = scmp.gt.s32.totalorder %s79, 0
      %s81 = scalar_select %p80, %s79, 0
      %s82 = smul.u32 %s45, 8
      %s83 = ssub.s32 %s82, 1
      %p84 = scmp.gt.s32.totalorder %s83, 0
      %s85 = scalar_select %p84, %s83, 0
      %s86 = ssub.s32 %s37, %s49
      %s87 = ssub.s32 %s81, %s85
      %s88 = sor.u32 %s86, %s87
      %p89 = scmp.eq.s32.totalorder %s88, 0
      %s91 = sadd.s32 %s90, 1
      %s92 = scalar_select %p89, %s90, %s91
      %p95 = pneg %p89
      %p96 = scmp.eq.s32.totalorder %s30, 3
      %p97 = por %p95, %p96
      %p98 = scmp.ne.s32.totalorder %s90, %s93
      %p99 = scmp.eq.s32.totalorder %s30, 0
      %p100 = por %p98, %p99
      %p101 = scmp.ne.s32.totalorder %s90, %s93
      %p102 = scmp.eq.s32.totalorder %s35, 3
      %p103 = por %p101, %p102
      %p104 = scmp.ne.s32.totalorder %s93, %s94
      %p105 = scmp.eq.s32.totalorder %s35, 0
      %p106 = por %p104, %p105
      %p107 = scmp.ne.s32.totalorder %s93, %s94
      %p108 = scmp.eq.s32.totalorder %s36, 3
      %p109 = por %p107, %p108
      %p111 = scmp.ne.s32.totalorder %s94, %s110
      %p112 = scmp.eq.s32.totalorder %s36, 0
      %p113 = por %p111, %p112
      %s114 = smul.u32 %s38, 8
      %s115 = sadd.s32 %s114, 8
      %p116 = scmp.lt.s32.totalorder %s115, 15
      %s117 = scalar_select %p116, %s115, 15
      %s118 = smul.u32 %s45, 8
      %s119 = sadd.s32 %s118, 8
      %p120 = scmp.lt.s32.totalorder %s119, 15
      %s121 = scalar_select %p120, %s119, 15
      %s122 = ssub.s32 %s37, %s49
      %s123 = ssub.s32 %s117, %s121
      %s124 = sor.u32 %s122, %s123
      %p125 = scmp.eq.s32.totalorder %s124, 0
      %s127 = sadd.s32 %s126, 1
      %s128 = scalar_select %p125, %s126, %s127
      %p131 = pneg %p125
      %p132 = scmp.eq.s32.totalorder %s30, 3
      %p133 = por %p131, %p132
      %p134 = scmp.ne.s32.totalorder %s126, %s129
      %p135 = scmp.eq.s32.totalorder %s30, 0
      %p136 = por %p134, %p135
      %p137 = scmp.ne.s32.totalorder %s126, %s129
      %p138 = scmp.eq.s32.totalorder %s35, 3
      %p139 = por %p137, %p138
      %p140 = scmp.ne.s32.totalorder %s129, %s130
      %p141 = scmp.eq.s32.totalorder %s35, 0
      %p142 = por %p140, %p141
      %p143 = scmp.ne.s32.totalorder %s129, %s130
      %p144 = scmp.eq.s32.totalorder %s36, 3
      %p145 = por %p143, %p144
      %p147 = scmp.ne.s32.totalorder %s130, %s146
      %p148 = scmp.eq.s32.totalorder %s36, 0
      %p149 = por %p147, %p148
      %s151 = sadd.s32 %s150, 1
      %p154 = scmp.eq.s32.totalorder %s30, 3
      %p155 = scmp.ne.s32.totalorder %s150, %s152
      %p156 = scmp.eq.s32.totalorder %s30, 0
      %p157 = por %p155, %p156
      %p158 = scmp.ne.s32.totalorder %s150, %s152
      %p159 = scmp.eq.s32.totalorder %s35, 3
      %p160 = por %p158, %p159
      %p161 = scmp.ne.s32.totalorder %s152, %s153
      %p162 = scmp.eq.s32.totalorder %s35, 0
      %p163 = por %p161, %p162
      %p164 = scmp.ne.s32.totalorder %s152, %s153
      %p165 = scmp.eq.s32.totalorder %s36, 3
      %p166 = por %p164, %p165
      %p168 = scmp.ne.s32.totalorder %s153, %s167
      %p169 = scmp.eq.s32.totalorder %s36, 0
      %p170 = por %p168, %p169
      %s172 = sadd.s32 %s171, 1
      %p175 = scmp.eq.s32.totalorder %s30, 3
      %p176 = scmp.ne.s32.totalorder %s171, %s173
      %p177 = scmp.eq.s32.totalorder %s30, 0
      %p178 = por %p176, %p177
      %p179 = scmp.ne.s32.totalorder %s171, %s173
      %p180 = scmp.eq.s32.totalorder %s35, 3
      %p181 = por %p179, %p180
      %p182 = scmp.ne.s32.totalorder %s173, %s174
      %p183 = scmp.eq.s32.totalorder %s35, 0
      %p184 = por %p182, %p183
      %p185 = scmp.ne.s32.totalorder %s173, %s174
      %p186 = scmp.eq.s32.totalorder %s36, 3
      %p187 = por %p185, %p186
      %p189 = scmp.ne.s32.totalorder %s174, %s188
      %p190 = scmp.eq.s32.totalorder %s36, 0
      %p191 = por %p189, %p190
      %s193 = sadd.s32 %s192, 1
      %p196 = scmp.eq.s32.totalorder %s30, 3
      %p197 = scmp.ne.s32.totalorder %s192, %s194
      %p198 = scmp.eq.s32.totalorder %s30, 0
      %p199 = por %p197, %p198
      %p200 = scmp.ne.s32.totalorder %s192, %s194
      %p201 = scmp.eq.s32.totalorder %s35, 3
      %p202 = por %p200, %p201
      %p203 = scmp.ne.s32.totalorder %s194, %s195
      %p204 = scmp.eq.s32.totalorder %s35, 0
      %p205 = por %p203, %p204
      %p206 = scmp.ne.s32.totalorder %s194, %s195
      %p207 = scmp.eq.s32.totalorder %s36, 3
      %p208 = por %p206, %p207
      %p210 = scmp.ne.s32.totalorder %s195, %s209
      %p211 = scmp.eq.s32.totalorder %s36, 0
      %p212 = por %p210, %p211
      %s214 = sadd.s32 %s213, 1
      %p217 = scmp.eq.s32.totalorder %s30, 3
      %p218 = scmp.ne.s32.totalorder %s213, %s215
      %p219 = scmp.eq.s32.totalorder %s30, 0
      %p220 = por %p218, %p219
      %p221 = scmp.ne.s32.totalorder %s213, %s215
      %p222 = scmp.eq.s32.totalorder %s35, 3
      %p223 = por %p221, %p222
      %p224 = scmp.ne.s32.totalorder %s215, %s216
      %p225 = scmp.eq.s32.totalorder %s35, 0
      %p226 = por %p224, %p225
      %p227 = scmp.ne.s32.totalorder %s215, %s216
      %p228 = scmp.eq.s32.totalorder %s36, 3
      %p229 = por %p227, %p228
      %p231 = scmp.ne.s32.totalorder %s216, %s230
      %p232 = scmp.eq.s32.totalorder %s36, 0
      %p233 = por %p231, %p232
      %s235 = sadd.s32 %s234, 1
      %p238 = scmp.eq.s32.totalorder %s30, 3
      %p239 = scmp.ne.s32.totalorder %s234, %s236
      %p240 = scmp.eq.s32.totalorder %s30, 0
      %p241 = por %p239, %p240
      %p242 = scmp.ne.s32.totalorder %s234, %s236
      %p243 = scmp.eq.s32.totalorder %s35, 3
      %p244 = por %p242, %p243
      %p245 = scmp.ne.s32.totalorder %s236, %s237
      %p246 = scmp.eq.s32.totalorder %s35, 0
      %p247 = por %p245, %p246
      %p248 = scmp.ne.s32.totalorder %s236, %s237
      %p249 = scmp.eq.s32.totalorder %s36, 3
      %p250 = por %p248, %p249
      %p252 = scmp.ne.s32.totalorder %s237, %s251
      %p253 = scmp.eq.s32.totalorder %s36, 0
      %p254 = por %p252, %p253
      %s256 = sadd.s32 %s255, 1
      %p259 = scmp.eq.s32.totalorder %s30, 3
      %p260 = scmp.ne.s32.totalorder %s255, %s257
      %p261 = scmp.eq.s32.totalorder %s30, 0
      %p262 = por %p260, %p261
      %p263 = scmp.ne.s32.totalorder %s255, %s257
      %p264 = scmp.eq.s32.totalorder %s35, 3
      %p265 = por %p263, %p264
      %p266 = scmp.ne.s32.totalorder %s257, %s258
      %p267 = scmp.eq.s32.totalorder %s35, 0
      %p268 = por %p266, %p267
      %p269 = scmp.ne.s32.totalorder %s257, %s258
      %p270 = scmp.eq.s32.totalorder %s36, 3
      %p271 = por %p269, %p270
      %p273 = scmp.ne.s32.totalorder %s258, %s272
      %p274 = scmp.eq.s32.totalorder %s36, 0
      %p275 = por %p273, %p274
      %s277 = sadd.s32 %s276, 1
      %p280 = scmp.eq.s32.totalorder %s30, 3
      %p281 = scmp.ne.s32.totalorder %s276, %s278
      %p282 = scmp.eq.s32.totalorder %s30, 0
      %p283 = por %p281, %p282
      %p284 = scmp.ne.s32.totalorder %s276, %s278
      %p285 = scmp.eq.s32.totalorder %s35, 3
      %p286 = por %p284, %p285
      %p287 = scmp.ne.s32.totalorder %s278, %s279
      %p288 = scmp.eq.s32.totalorder %s35, 0
      %p289 = por %p287, %p288
      %p290 = scmp.ne.s32.totalorder %s278, %s279
      %p291 = scmp.eq.s32.totalorder %s36, 3
      %p292 = por %p290, %p291
      %p294 = scmp.ne.s32.totalorder %s279, %s293
      %p295 = scmp.eq.s32.totalorder %s36, 0
      %p296 = por %p294, %p295
      %s298 = sadd.s32 %s297, 1
      %p301 = scmp.eq.s32.totalorder %s30, 3
      %p302 = scmp.ne.s32.totalorder %s297, %s299
      %p303 = scmp.eq.s32.totalorder %s30, 0
      %p304 = por %p302, %p303
      %p305 = scmp.ne.s32.totalorder %s297, %s299
      %p306 = scmp.eq.s32.totalorder %s35, 3
      %p307 = por %p305, %p306
      %p308 = scmp.ne.s32.totalorder %s299, %s300
      %p309 = scmp.eq.s32.totalorder %s35, 0
      %p310 = por %p308, %p309
      %p311 = scmp.ne.s32.totalorder %s299, %s300
      %p312 = scmp.eq.s32.totalorder %s36, 3
      %p313 = por %p311, %p312
      %p315 = scmp.ne.s32.totalorder %s300, %s314
      %p316 = scmp.eq.s32.totalorder %s36, 0
      %p317 = por %p315, %p316
      %s319 = sadd.s32 %s318, 1
      %p322 = scmp.eq.s32.totalorder %s30, 3
      %p323 = scmp.ne.s32.totalorder %s318, %s320
      %p324 = scmp.eq.s32.totalorder %s30, 0
      %p325 = por %p323, %p324
      %p326 = scmp.ne.s32.totalorder %s318, %s320
      %p327 = scmp.eq.s32.totalorder %s35, 3
      %p328 = por %p326, %p327
      %p329 = scmp.ne.s32.totalorder %s320, %s321
      %p330 = scmp.eq.s32.totalorder %s35, 0
      %p331 = por %p329, %p330
      %p332 = scmp.ne.s32.totalorder %s320, %s321
      %p333 = scmp.eq.s32.totalorder %s36, 3
      %p334 = por %p332, %p333
      %p336 = scmp.ne.s32.totalorder %s321, %s335
      %p337 = scmp.eq.s32.totalorder %s36, 0
      %p338 = por %p336, %p337
      %s339 = ssub.s32 %s37, %s49
      %s340 = ssub.s32 %s38, %s45
      %s341 = sor.u32 %s339, %s340
      %p342 = scmp.eq.s32.totalorder %s341, 0
      %s344 = sadd.s32 %s343, 1
      %s345 = scalar_select %p342, %s343, %s344
      %p348 = pneg %p342
      %p349 = scmp.eq.s32.totalorder %s30, 3
      %p350 = por %p348, %p349
      %p351 = scmp.ne.s32.totalorder %s343, %s346
      %p352 = scmp.eq.s32.totalorder %s30, 0
      %p353 = por %p351, %p352
      %p354 = scmp.ne.s32.totalorder %s343, %s346
      %p355 = scmp.eq.s32.totalorder %s35, 3
      %p356 = por %p354, %p355
      %p357 = scmp.ne.s32.totalorder %s346, %s347
      %p358 = scmp.eq.s32.totalorder %s35, 0
      %p359 = por %p357, %p358
      %p360 = scmp.ne.s32.totalorder %s346, %s347
      %p361 = scmp.eq.s32.totalorder %s36, 3
      %p362 = por %p360, %p361
      %p364 = scmp.ne.s32.totalorder %s347, %s363
      %p365 = scmp.eq.s32.totalorder %s36, 0
      %p366 = por %p364, %p365
      %p367 = scmp.le.s32.totalorder 1, %s30
      %p368 = scmp.lt.s32.totalorder %s30, 5
      %p369 = pnand %p367, %p368
      %p370 = pneg %p369
      // Predicated region
      $region9: #{tpu_custom_call.1} parent=5 // pred_check
        _
      $region10: #{tpu_custom_call.1} parent=5 // pred_check_branch
        %372 = sbr.rel (%p369) target = $region12
      $region11: #{tpu_custom_call.1} parent=5 // pred_region
        %s373 = ssub.s32 %s30, 1
        // Predicated region
        $region13: #{tpu_custom_call.1} parent=11 // pred_check
          %p374 = pneg %p163
        $region14: #{tpu_custom_call.1} parent=11 // pred_check_branch
          %376 = sbr.rel (%p374) target = $region16
        $region15: #{tpu_custom_call.1} parent=11 // pred_region
          %s378 = ssub.s32 2048, 2048
          %379 = vsyncadd [#allocation10], %s378
          %s380 = sshll.u32 [#allocation9], 4
          %s381 = int_to_ptr.vmem [resolvable:$true] %s380
          %386 = dma.hbm_to_vmem [thread:$0]  %s3, 2048, %s381, [#allocation10], 128, 128, 8
        $region16: #{tpu_custom_call.1} parent=11 // pred_fallthru
          _
        // Predicated region
        $region17: #{tpu_custom_call.1} parent=11 // pred_check
          %p387 = pneg %p184
        $region18: #{tpu_custom_call.1} parent=11 // pred_check_branch
          %389 = sbr.rel (%p387) target = $region20
        $region19: #{tpu_custom_call.1} parent=11 // pred_region
          _
        $region20: #{tpu_custom_call.1} parent=11 // pred_fallthru
          _
        // Predicated region
        $region21: #{tpu_custom_call.1} parent=11 // pred_check
          %p390 = pneg %p205
        $region22: #{tpu_custom_call.1} parent=11 // pred_check_branch
          %392 = sbr.rel (%p390) target = $region24
        $region23: #{tpu_custom_call.1} parent=11 // pred_region
          %s394 = ssub.s32 1024, 1024
          %395 = vsyncadd [#allocation10], %s394
          %s396 = sshll.u32 [#allocation11], 4
          %s397 = int_to_ptr.vmem [resolvable:$true] %s396
          %402 = dma.hbm_to_vmem [thread:$0]  %s5, 1024, %s397, [#allocation10], 64, 64, 4
        $region24: #{tpu_custom_call.1} parent=11 // pred_fallthru
          _
        // Predicated region
        $region25: #{tpu_custom_call.1} parent=11 // pred_check
          %p403 = pneg %p226
        $region26: #{tpu_custom_call.1} parent=11 // pred_check_branch
          %405 = sbr.rel (%p403) target = $region28
        $region27: #{tpu_custom_call.1} parent=11 // pred_region
          _
        $region28: #{tpu_custom_call.1} parent=11 // pred_fallthru
          _
        // Predicated region
        $region29: #{tpu_custom_call.1} parent=11 // pred_check
          %p406 = pneg %p247
        $region30: #{tpu_custom_call.1} parent=11 // pred_check_branch
          %408 = sbr.rel (%p406) target = $region32
        $region31: #{tpu_custom_call.1} parent=11 // pred_region
          %s410 = ssub.s32 9216, 9216
          %411 = vsyncadd [#allocation13], %s410
          %s412 = sshll.u32 [#allocation12], 4
          %s413 = int_to_ptr.vmem [resolvable:$true] %s412
          %418 = dma.hbm_to_vmem [thread:$0]  %s7, 9216, %s413, [#allocation13], 64, 64, 4
        $region32: #{tpu_custom_call.1} parent=11 // pred_fallthru
          _
        // Predicated region
        $region33: #{tpu_custom_call.1} parent=11 // pred_check
          %p419 = pneg %p268
        $region34: #{tpu_custom_call.1} parent=11 // pred_check_branch
          %421 = sbr.rel (%p419) target = $region36
        $region35: #{tpu_custom_call.1} parent=11 // pred_region
          _
        $region36: #{tpu_custom_call.1} parent=11 // pred_fallthru
          _
        // Predicated region
        $region37: #{tpu_custom_call.1} parent=11 // pred_check
          %p422 = pneg %p289
        $region38: #{tpu_custom_call.1} parent=11 // pred_check_branch
          %424 = sbr.rel (%p422) target = $region40
        $region39: #{tpu_custom_call.1} parent=11 // pred_region
          %s426 = ssub.s32 1024, 1024
          %427 = vsyncadd [#allocation13], %s426
          %s428 = sshll.u32 [#allocation14], 4
          %s429 = int_to_ptr.vmem [resolvable:$true] %s428
          %434 = dma.hbm_to_vmem [thread:$0]  %s9, 1024, %s429, [#allocation13], 64, 64, 4
        $region40: #{tpu_custom_call.1} parent=11 // pred_fallthru
          _
        // Predicated region
        $region41: #{tpu_custom_call.1} parent=11 // pred_check
          %p435 = pneg %p310
        $region42: #{tpu_custom_call.1} parent=11 // pred_check_branch
          %437 = sbr.rel (%p435) target = $region44
        $region43: #{tpu_custom_call.1} parent=11 // pred_region
          %s439 = ssub.s32 1024, 1024
          %440 = vsyncadd [#allocation16], %s439
          %s441 = sshll.u32 [#allocation15], 4
          %s442 = int_to_ptr.vmem [resolvable:$true] %s441
          %447 = dma.hbm_to_vmem [thread:$0]  %s10, 1024, %s442, [#allocation16], 64, 64, 4
        $region44: #{tpu_custom_call.1} parent=11 // pred_fallthru
          _
        // Predicated region
        $region45: #{tpu_custom_call.1} parent=11 // pred_check
          %p448 = pneg %p331
        $region46: #{tpu_custom_call.1} parent=11 // pred_check_branch
          %450 = sbr.rel (%p448) target = $region48
        $region47: #{tpu_custom_call.1} parent=11 // pred_region
          _
        $region48: #{tpu_custom_call.1} parent=11 // pred_fallthru
          _
      $region12: #{tpu_custom_call.1} parent=5 // pred_fallthru
        _
      %p451 = scmp.lt.s32.totalorder %s30, 4
      // Predicated region
      $region49: #{tpu_custom_call.1} parent=5 // pred_check
        %p452 = pneg %p451
      $region50: #{tpu_custom_call.1} parent=5 // pred_check_branch
        %454 = sbr.rel (%p452) target = $region52
      $region51: #{tpu_custom_call.1} parent=5 // pred_region
        // Predicated region
        $region53: #{tpu_custom_call.1} parent=51 // pred_check
          %p455 = pneg %p64
        $region54: #{tpu_custom_call.1} parent=51 // pred_check_branch
          %457 = sbr.rel (%p455) target = $region56
        $region55: #{tpu_custom_call.1} parent=51 // pred_region
          %s458 = sand.u32 %s54, 1
          %s459 = scalar_lea.sflag [#allocation4], %s458
          %s460 = sand.u32 %s54, 1
          %s461 = smul.addr %s460, 64
          %s462 = scalar_lea.vmem [#allocation3], %s461
          %s463 = smul.u32 8, %s38
          %s465 = ssub.s32 1024, 1024
          %466 = vsyncadd %s459, %s465
          %s467 = smul.addr %s463, 2
          %s468 = smul.addr %s37, 32
          %s469 = sadd.s32 %s467, %s468
          %s470 = smul.addr %s469, 64
          %s471 = scalar_lea.hbm %s0, %s470
          %s472 = sshll.u32 %s462, 4
          %s473 = int_to_ptr.vmem [resolvable:$true] %s472
          %478 = dma.hbm_to_vmem [thread:$0]  %s471, 1024, %s473, %s459, 64, 64, 4
        $region56: #{tpu_custom_call.1} parent=51 // pred_fallthru
          _
        // Predicated region
        $region57: #{tpu_custom_call.1} parent=51 // pred_check
          %p479 = pneg %p100
        $region58: #{tpu_custom_call.1} parent=51 // pred_check_branch
          %481 = sbr.rel (%p479) target = $region60
        $region59: #{tpu_custom_call.1} parent=51 // pred_region
          %s482 = sand.u32 %s30, 1
          %s483 = scalar_lea.sflag [#allocation7], %s482
          %s484 = sand.u32 %s90, 1
          %s485 = smul.addr %s484, 8
          %s486 = scalar_lea.vmem [#allocation6], %s485
          %s487 = smul.u32 %s38, 8
          %s488 = ssub.s32 %s487, 1
          %p489 = scmp.gt.s32.totalorder %s488, 0
          %s490 = scalar_select %p489, %s488, 0
          %s492 = ssub.s32 128, 128
          %493 = vsyncadd %s483, %s492
          %s494 = smul.addr %s490, 2
          %s495 = smul.addr %s37, 32
          %s496 = sadd.s32 %s494, %s495
          %s497 = smul.addr %s496, 64
          %s498 = scalar_lea.hbm %s1, %s497
          %s499 = sshll.u32 %s486, 4
          %s500 = int_to_ptr.vmem [resolvable:$true] %s499
          %505 = dma.hbm_to_vmem [thread:$0]  %s498, 128, %s500, %s483, 64, 64, 4
        $region60: #{tpu_custom_call.1} parent=51 // pred_fallthru
          _
        // Predicated region
        $region61: #{tpu_custom_call.1} parent=51 // pred_check
          %p506 = pneg %p136
        $region62: #{tpu_custom_call.1} parent=51 // pred_check_branch
          %508 = sbr.rel (%p506) target = $region64
        $region63: #{tpu_custom_call.1} parent=51 // pred_region
          %s509 = sand.u32 %s30, 1
          %s510 = scalar_lea.sflag [#allocation7], %s509
          %s511 = sand.u32 %s126, 1
          %s512 = smul.addr %s511, 8
          %s513 = scalar_lea.vmem [#allocation8], %s512
          %s514 = smul.u32 %s38, 8
          %s515 = sadd.s32 %s514, 8
          %p516 = scmp.lt.s32.totalorder %s515, 15
          %s517 = scalar_select %p516, %s515, 15
          %s519 = ssub.s32 128, 128
          %520 = vsyncadd %s510, %s519
          %s521 = smul.addr %s517, 2
          %s522 = smul.addr %s37, 32
          %s523 = sadd.s32 %s521, %s522
          %s524 = smul.addr %s523, 64
          %s525 = scalar_lea.hbm %s2, %s524
          %s526 = sshll.u32 %s513, 4
          %s527 = int_to_ptr.vmem [resolvable:$true] %s526
          %532 = dma.hbm_to_vmem [thread:$0]  %s525, 128, %s527, %s510, 64, 64, 4
        $region64: #{tpu_custom_call.1} parent=51 // pred_fallthru
          _
      $region52: #{tpu_custom_call.1} parent=5 // pred_fallthru
        _
      %p533 = scmp.le.s32.totalorder 1, %s30
      %p534 = scmp.lt.s32.totalorder %s30, 5
      %p535 = pnand %p533, %p534
      %p536 = pneg %p535
      // Predicated region
      $region65: #{tpu_custom_call.1} parent=5 // pred_check
        _
      $region66: #{tpu_custom_call.1} parent=5 // pred_check_branch
        %538 = sbr.rel (%p535) target = $region68
      $region67: #{tpu_custom_call.1} parent=5 // pred_region
        %s539 = ssub.s32 %s30, 1
        %s540 = sand.u32 %s57, 1
        %s541 = scalar_lea.sflag [#allocation4], %s540
        %s542 = sand.u32 %s57, 1
        %s543 = smul.addr %s542, 64
        %s544 = scalar_lea.vmem [#allocation3], %s543
        // Predicated region
        $region69: #{tpu_custom_call.1} parent=67 // pred_check
          %p545 = pneg %p70
        $region70: #{tpu_custom_call.1} parent=67 // pred_check_branch
          %547 = sbr.rel (%p545) target = $region72
        $region71: #{tpu_custom_call.1} parent=67 // pred_region
          %548 = dma.done %s541, 1024
        $region72: #{tpu_custom_call.1} parent=67 // pred_fallthru
          _
        %s549 = sand.u32 %s35, 1
        %s550 = scalar_lea.sflag [#allocation7], %s549
        %s551 = sand.u32 %s93, 1
        %s552 = smul.addr %s551, 8
        %s553 = scalar_lea.vmem [#allocation6], %s552
        // Predicated region
        $region73: #{tpu_custom_call.1} parent=67 // pred_check
          %p554 = pneg %p106
        $region74: #{tpu_custom_call.1} parent=67 // pred_check_branch
          %556 = sbr.rel (%p554) target = $region76
        $region75: #{tpu_custom_call.1} parent=67 // pred_region
          %557 = dma.done %s550, 128
        $region76: #{tpu_custom_call.1} parent=67 // pred_fallthru
          _
        %s558 = sand.u32 %s35, 1
        %s559 = scalar_lea.sflag [#allocation7], %s558
        %s560 = sand.u32 %s129, 1
        %s561 = smul.addr %s560, 8
        %s562 = scalar_lea.vmem [#allocation8], %s561
        // Predicated region
        $region77: #{tpu_custom_call.1} parent=67 // pred_check
          %p563 = pneg %p142
        $region78: #{tpu_custom_call.1} parent=67 // pred_check_branch
          %565 = sbr.rel (%p563) target = $region80
        $region79: #{tpu_custom_call.1} parent=67 // pred_region
          %566 = dma.done %s559, 128
        $region80: #{tpu_custom_call.1} parent=67 // pred_fallthru
          _
        // Predicated region
        $region81: #{tpu_custom_call.1} parent=67 // pred_check
          %p567 = pneg %p163
        $region82: #{tpu_custom_call.1} parent=67 // pred_check_branch
          %569 = sbr.rel (%p567) target = $region84
        $region83: #{tpu_custom_call.1} parent=67 // pred_region
          %570 = dma.done [#allocation10], 2048
        $region84: #{tpu_custom_call.1} parent=67 // pred_fallthru
          _
        // Predicated region
        $region85: #{tpu_custom_call.1} parent=67 // pred_check
          %p571 = pneg %p205
        $region86: #{tpu_custom_call.1} parent=67 // pred_check_branch
          %573 = sbr.rel (%p571) target = $region88
        $region87: #{tpu_custom_call.1} parent=67 // pred_region
          %574 = dma.done [#allocation10], 1024
        $region88: #{tpu_custom_call.1} parent=67 // pred_fallthru
          _
        // Predicated region
        $region89: #{tpu_custom_call.1} parent=67 // pred_check
          %p575 = pneg %p247
        $region90: #{tpu_custom_call.1} parent=67 // pred_check_branch
          %577 = sbr.rel (%p575) target = $region92
        $region91: #{tpu_custom_call.1} parent=67 // pred_region
          %578 = dma.done [#allocation13], 9216
        $region92: #{tpu_custom_call.1} parent=67 // pred_fallthru
          _
        // Predicated region
        $region93: #{tpu_custom_call.1} parent=67 // pred_check
          %p579 = pneg %p289
        $region94: #{tpu_custom_call.1} parent=67 // pred_check_branch
          %581 = sbr.rel (%p579) target = $region96
        $region95: #{tpu_custom_call.1} parent=67 // pred_region
          %582 = dma.done [#allocation13], 1024
        $region96: #{tpu_custom_call.1} parent=67 // pred_fallthru
          _
        // Predicated region
        $region97: #{tpu_custom_call.1} parent=67 // pred_check
          %p583 = pneg %p310
        $region98: #{tpu_custom_call.1} parent=67 // pred_check_branch
          %585 = sbr.rel (%p583) target = $region100
        $region99: #{tpu_custom_call.1} parent=67 // pred_region
          %586 = dma.done [#allocation16], 1024
        $region100: #{tpu_custom_call.1} parent=67 // pred_fallthru
          _
        %s587 = sand.u32 %s57, 1
        %s588 = scalar_lea.sflag [#allocation4], %s587
        %s589 = sand.u32 %s57, 1
        %s590 = smul.addr %s589, 64
        %s591 = scalar_lea.vmem [#allocation3], %s590
        %p592 = pneg %p70
        %p593 = pneg %p67
        %s594 = sand.u32 %s35, 1
        %s595 = scalar_lea.sflag [#allocation7], %s594
        %s596 = sand.u32 %s93, 1
        %s597 = smul.addr %s596, 8
        %s598 = scalar_lea.vmem [#allocation6], %s597
        %p599 = pneg %p106
        %p600 = pneg %p103
        %s601 = sand.u32 %s35, 1
        %s602 = scalar_lea.sflag [#allocation7], %s601
        %s603 = sand.u32 %s129, 1
        %s604 = smul.addr %s603, 8
        %s605 = scalar_lea.vmem [#allocation8], %s604
        %p606 = pneg %p142
        %p607 = pneg %p139
        %p608 = pneg %p163
        %p609 = pneg %p160
        %p610 = pneg %p184
        %p611 = pneg %p181
        %p612 = pneg %p205
        %p613 = pneg %p202
        %p614 = pneg %p226
        %p615 = pneg %p223
        %p616 = pneg %p247
        %p617 = pneg %p244
        %p618 = pneg %p268
        %p619 = pneg %p265
        %p620 = pneg %p289
        %p621 = pneg %p286
        %p622 = pneg %p310
        %p623 = pneg %p307
        %p624 = pneg %p331
        %p625 = pneg %p328
        %p626 = pneg %p359
        %p627 = pneg %p356
        %s628 = sand.u32 %s346, 1
        %s629 = scalar_lea.sflag [#allocation5], %s628
        %s630 = sand.u32 %s346, 1
        %s631 = smul.addr %s630, 64
        %s632 = scalar_lea.vmem [#allocation17], %s631
        %s633 = smul.u32 8, %s40
        %s634 = smul.u32 %s40, 8
        %s635 = ssub.s32 %s634, 1
        %p636 = scmp.gt.s32.totalorder %s635, 0
        %s637 = scalar_select %p636, %s635, 0
        %s638 = smul.u32 %s40, 8
        %s639 = sadd.s32 %s638, 8
        %p640 = scmp.lt.s32.totalorder %s639, 15
        %s641 = scalar_select %p640, %s639, 15
        %s642 = smul.u32 8, %s40
        %v644 = vld [vmem:[#allocation9] sm:$0xff]
        %v645 = vld [vmem:[#allocation9 + $0x8] sm:$0xff]
        %v646 = vld [vmem:[#allocation9 + $0x10] sm:$0xff]
        %v647 = vld [vmem:[#allocation9 + $0x18] sm:$0xff]
        %v648 = vld [vmem:[#allocation9 + $0x20] sm:$0xff]
        %v649 = vld [vmem:[#allocation9 + $0x28] sm:$0xff]
        %v650 = vld [vmem:[#allocation9 + $0x30] sm:$0xff]
        %v651 = vld [vmem:[#allocation9 + $0x38] sm:$0xff]
        %v652 = vld [vmem:[#allocation9 + $0x40] sm:$0xff]
        %v653 = vld [vmem:[#allocation9 + $0x48] sm:$0xff]
        %v654 = vld [vmem:[#allocation9 + $0x50] sm:$0xff]
        %v655 = vld [vmem:[#allocation9 + $0x58] sm:$0xff]
        %v656 = vld [vmem:[#allocation9 + $0x60] sm:$0xff]
        %v657 = vld [vmem:[#allocation9 + $0x68] sm:$0xff]
        %v658 = vld [vmem:[#allocation9 + $0x70] sm:$0xff]
        %v659 = vld [vmem:[#allocation9 + $0x78] sm:$0xff]
        %v660 = vld [vmem:[%s4] sm:$0x3]
        %v661 = vld [vmem:[#allocation11] sm:$0xf]
        %v662 = vld [vmem:[#allocation11 + $0x4] sm:$0xf]
        %v663 = vld [vmem:[#allocation11 + $0x8] sm:$0xf]
        %v664 = vld [vmem:[#allocation11 + $0xc] sm:$0xf]
        %v665 = vld [vmem:[#allocation11 + $0x10] sm:$0xf]
        %v666 = vld [vmem:[#allocation11 + $0x14] sm:$0xf]
        %v667 = vld [vmem:[#allocation11 + $0x18] sm:$0xf]
        %v668 = vld [vmem:[#allocation11 + $0x1c] sm:$0xf]
        %v669 = vld [vmem:[#allocation11 + $0x20] sm:$0xf]
        %v670 = vld [vmem:[#allocation11 + $0x24] sm:$0xf]
        %v671 = vld [vmem:[#allocation11 + $0x28] sm:$0xf]
        %v672 = vld [vmem:[#allocation11 + $0x2c] sm:$0xf]
        %v673 = vld [vmem:[#allocation11 + $0x30] sm:$0xf]
        %v674 = vld [vmem:[#allocation11 + $0x34] sm:$0xf]
        %v675 = vld [vmem:[#allocation11 + $0x38] sm:$0xf]
        %v676 = vld [vmem:[#allocation11 + $0x3c] sm:$0xf]
        %v677 = vld [vmem:[%s6] sm:$0x1]
        %v678 = vld [vmem:[%s553] sm:$0xf]
        %v679 = vld [vmem:[%s553 + $0x4] sm:$0xf]
        %v681 = vlaneseq
        %v682 = vshrl.u32 %v681, 7
        %v683 = vsub.s32 0, %v682
        %v684 = vrot.slane %v660, %v683
        %v685 = vlaneseq
        %v686 = vshrl.u32 %v685, 7
        %v687 = vsub.s32 1, %v686
        %v688 = vrot.slane %v660, %v687
        %v693 = vunpack.c.l.b16 %v678
        %v694 = vunpack.c.l.b16 %v679
        %v695 = vpack.c.b16 %v694, %v693
        %v713 = vunpack.c.l.b16 %v644
        %v714 = vunpack.c.h.b16 %v644
        %v715 = vunpack.c.l.b16 %v645
        %v716 = vunpack.c.h.b16 %v645
        %v717 = vunpack.c.l.b16 %v646
        %v718 = vunpack.c.h.b16 %v646
        %v719 = vunpack.c.l.b16 %v647
        %v720 = vunpack.c.h.b16 %v647
        %v721 = vunpack.c.l.b16 %v648
        %v722 = vunpack.c.h.b16 %v648
        %v723 = vunpack.c.l.b16 %v649
        %v724 = vunpack.c.h.b16 %v649
        %v725 = vunpack.c.l.b16 %v650
        %v726 = vunpack.c.h.b16 %v650
        %v727 = vunpack.c.l.b16 %v651
        %v728 = vunpack.c.h.b16 %v651
        %v729 = vunpack.c.l.b16 %v652
        %v730 = vunpack.c.h.b16 %v652
        %v731 = vunpack.c.l.b16 %v653
        %v732 = vunpack.c.h.b16 %v653
        %v733 = vunpack.c.l.b16 %v654
        %v734 = vunpack.c.h.b16 %v654
        %v735 = vunpack.c.l.b16 %v655
        %v736 = vunpack.c.h.b16 %v655
        %v737 = vunpack.c.l.b16 %v656
        %v738 = vunpack.c.h.b16 %v656
        %v739 = vunpack.c.l.b16 %v657
        %v740 = vunpack.c.h.b16 %v657
        %v741 = vunpack.c.l.b16 %v658
        %v742 = vunpack.c.h.b16 %v658
        %v743 = vunpack.c.l.b16 %v659
        %v744 = vunpack.c.h.b16 %v659
        %v745 = vpack.c.b16 %v715, %v713
        %v746 = vpack.c.b16 %v716, %v714
        %v747 = vpack.c.b16 %v719, %v717
        %v748 = vpack.c.b16 %v720, %v718
        %v749 = vpack.c.b16 %v723, %v721
        %v750 = vpack.c.b16 %v724, %v722
        %v751 = vpack.c.b16 %v727, %v725
        %v752 = vpack.c.b16 %v728, %v726
        %v753 = vpack.c.b16 %v731, %v729
        %v754 = vpack.c.b16 %v732, %v730
        %v755 = vpack.c.b16 %v735, %v733
        %v756 = vpack.c.b16 %v736, %v734
        %v757 = vpack.c.b16 %v739, %v737
        %v758 = vpack.c.b16 %v740, %v738
        %v759 = vpack.c.b16 %v743, %v741
        %v760 = vpack.c.b16 %v744, %v742
        %777 = vmatprep.subr.bf16.mxu0 %v760
        %778 = vmatpush1.bf16.msra.mxu0 %v759
        %779 = vmatprep.subr.bf16.mxu0 %v758
        %780 = vmatpush1.bf16.msra.mxu0 %v757
        %781 = vmatprep.subr.bf16.mxu0 %v756
        %782 = vmatpush1.bf16.msra.mxu0 %v755
        %783 = vmatprep.subr.bf16.mxu0 %v754
        %784 = vmatpush1.bf16.msra.mxu0 %v753
        %785 = vmatprep.subr.bf16.mxu0 %v752
        %786 = vmatpush1.bf16.msra.mxu0 %v751
        %787 = vmatprep.subr.bf16.mxu0 %v750
        %788 = vmatpush1.bf16.msra.mxu0 %v749
        %789 = vmatprep.subr.bf16.mxu0 %v748
        %790 = vmatpush1.bf16.msra.mxu0 %v747
        %791 = vmatprep.subr.bf16.mxu0 %v746
        %792 = vmatpush1.bf16.msra.mxu0 %v745
        %793 = vmatprep.subr.bf16.mxu0 0
        %794 = vmatpush2.bf16.msra.mxu0 0
        %795 = vmatprep.subr.bf16.mxu0 0
        %796 = vmatpush2.bf16.msra.mxu0 0
        %797 = vmatprep.subr.bf16.mxu0 0
        %798 = vmatpush2.bf16.msra.mxu0 0
        %799 = vmatprep.subr.bf16.mxu0 0
        %800 = vmatpush2.bf16.msra.mxu0 0
        %801 = vmatprep.subr.bf16.mxu0 0
        %802 = vmatpush2.bf16.msra.mxu0 0
        %803 = vmatprep.subr.bf16.mxu0 0
        %804 = vmatpush2.bf16.msra.mxu0 0
        %805 = vmatprep.subr.bf16.mxu0 0
        %806 = vmatpush2.bf16.msra.mxu0 0
        %807 = vmatprep.subr.bf16.mxu0 0
        %808 = vmatpush2.bf16.msra.mxu0 0
        %809 = vmatprep.mubr.bf16.mxu0 0
        %810 = vmatmul.mubr.bf16.gmra.mxu0 %v695
        %v811 = vpop.f32.mrf.mxu0
        %v812 = vadd.f32 %v684, %v811
        %v813 = vpop.f32.mrf.mxu0
        %v814 = vpop.f32.mrf.mxu0
        %v815 = vadd.f32 %v684, %v814
        %v816 = vpop.f32.mrf.mxu0
        %817 = vdwg.mxu0
        %v818 = vmax.f32 %v812, 0.0
        %v819 = vmax.f32 %v815, 0.0
        %v820 = vpack.c.bf16 %v819, %v818
        %v822 = vlaneseq
        %v823 = vshrl.u32 %v822, 7
        %v824 = vsub.s32 0, %v823
        %v825 = vrot.slane %v677, %v824
        %v843 = vunpack.c.l.b16 %v661
        %v844 = vunpack.c.l.b16 %v662
        %v845 = vunpack.c.l.b16 %v663
        %v846 = vunpack.c.l.b16 %v664
        %v847 = vunpack.c.l.b16 %v665
        %v848 = vunpack.c.l.b16 %v666
        %v849 = vunpack.c.l.b16 %v667
        %v850 = vunpack.c.l.b16 %v668
        %v851 = vunpack.c.l.b16 %v669
        %v852 = vunpack.c.l.b16 %v670
        %v853 = vunpack.c.l.b16 %v671
        %v854 = vunpack.c.l.b16 %v672
        %v855 = vunpack.c.l.b16 %v673
        %v856 = vunpack.c.l.b16 %v674
        %v857 = vunpack.c.l.b16 %v675
        %v858 = vunpack.c.l.b16 %v676
        %v859 = vpack.c.b16 %v844, %v843
        %v860 = vpack.c.b16 %v846, %v845
        %v861 = vpack.c.b16 %v848, %v847
        %v862 = vpack.c.b16 %v850, %v849
        %v863 = vpack.c.b16 %v852, %v851
        %v864 = vpack.c.b16 %v854, %v853
        %v865 = vpack.c.b16 %v856, %v855
        %v866 = vpack.c.b16 %v858, %v857
        %875 = vmatprep.subr.bf16.mxu0 0
        %876 = vmatpush1.bf16.msra.mxu0 %v866
        %877 = vmatprep.subr.bf16.mxu0 0
        %878 = vmatpush1.bf16.msra.mxu0 %v865
        %879 = vmatprep.subr.bf16.mxu0 0
        %880 = vmatpush1.bf16.msra.mxu0 %v864
        %881 = vmatprep.subr.bf16.mxu0 0
        %882 = vmatpush1.bf16.msra.mxu0 %v863
        %883 = vmatprep.subr.bf16.mxu0 0
        %884 = vmatpush1.bf16.msra.mxu0 %v862
        %885 = vmatprep.subr.bf16.mxu0 0
        %886 = vmatpush1.bf16.msra.mxu0 %v861
        %887 = vmatprep.subr.bf16.mxu0 0
        %888 = vmatpush1.bf16.msra.mxu0 %v860
        %889 = vmatprep.subr.bf16.mxu0 0
        %890 = vmatpush1.bf16.msra.mxu0 %v859
        %891 = vmatprep.subr.bf16.mxu0 0
        %892 = vmatpush2.bf16.msra.mxu0 0
        %893 = vmatprep.subr.bf16.mxu0 0
        %894 = vmatpush2.bf16.msra.mxu0 0
        %895 = vmatprep.subr.bf16.mxu0 0
        %896 = vmatpush2.bf16.msra.mxu0 0
        %897 = vmatprep.subr.bf16.mxu0 0
        %898 = vmatpush2.bf16.msra.mxu0 0
        %899 = vmatprep.subr.bf16.mxu0 0
        %900 = vmatpush2.bf16.msra.mxu0 0
        %901 = vmatprep.subr.bf16.mxu0 0
        %902 = vmatpush2.bf16.msra.mxu0 0
        %903 = vmatprep.subr.bf16.mxu0 0
        %904 = vmatpush2.bf16.msra.mxu0 0
        %905 = vmatprep.subr.bf16.mxu0 0
        %906 = vmatpush2.bf16.msra.mxu0 0
        %907 = vmatprep.mubr.bf16.mxu0 0
        %908 = vmatmul.mubr.bf16.gmra.mxu0 %v820
        %v909 = vpop.f32.mrf.mxu0
        %v910 = vadd.f32 %v825, %v909
        %v911 = vpop.f32.mrf.mxu0
        %v912 = vpop.f32.mrf.mxu0
        %v913 = vadd.f32 %v825, %v912
        %v914 = vpop.f32.mrf.mxu0
        %915 = vdwg.mxu0
        %v916 = vmax.f32 %v910, 0.0
        %v917 = vmax.f32 %v913, 0.0
        %p918 = scmp.eq.s32.totalorder %s40, 0
        %s919 = scalar_select %p918, 1, 0
        %v920 = vstv %s919
        %vm921 = vcmp.eq.s32.totalorder %v920, 1
        %v922 = vsel %vm921, 0.0, %v916
        %v923 = vsel %vm921, 0.0, %v917
        %v924 = vpack.c.bf16 %v923, %v922
        %v926 = vunpack.c.l.b16 %v924
        %v927 = vunpack.c.h.b16 %v924
        %v928 = vpack.c.b16 %v926, %v926
        %v929 = vpack.c.b16 %v927, %v927
        %vm930 = vsmask.f32 256
        %vm931 = vsmask.f32 4368
        %vm932 = vmor %vm930, %vm931
        %v934 = vshrl.u32 %v928, 16
        %v936 = vrot.slane %v934, 7
        %v937 = vshll.u32 %v928, 16
        %v939 = vor.u32 %v936, %v937
        %v940 = vrot.slane %v936, 4
        %v942 = vshrl.u32 %v929, 16
        %v944 = vrot.slane %v942, 7
        %v945 = vshll.u32 %v929, 16
        %v947 = vor.u32 %v944, %v945
        %v948 = vsel %vm932, %v940, %v947
        %v949 = vrot.slane %v944, 4
        %vm953 = vcmask 1043456
        %vm954 = vsmask.f32 7938
        %vm955 = vmand %vm953, %vm954
        %v956 = vld [vmem:[#allocation2] sm:$0xf]
        %v957 = vsel %vm955, %v939, %v956
        %958 = vst [vmem:[#allocation2] sm:$0xf] %v957
        %959 = vst [vmem:[#allocation2 + $0x4] sm:$0xf] %v948
        %vm960 = vcmask 1040384
        %vm961 = vmand %vm960, %vm930
        %v962 = vld [vmem:[#allocation2 + $0x8] sm:$0x1]
        %v963 = vsel %vm961, %v949, %v962
        %964 = vst [vmem:[#allocation2 + $0x8] sm:$0x1] %v963
        %v965 = vld [vmem:[%s562] sm:$0xf]
        %v966 = vld [vmem:[%s562 + $0x4] sm:$0xf]
        %v969 = vunpack.c.l.b16 %v965
        %v970 = vunpack.c.l.b16 %v966
        %v971 = vpack.c.b16 %v970, %v969
        %973 = vmatprep.subr.bf16.mxu0 %v760
        %974 = vmatpush1.bf16.msra.mxu0 %v759
        %975 = vmatprep.subr.bf16.mxu0 %v758
        %976 = vmatpush1.bf16.msra.mxu0 %v757
        %977 = vmatprep.subr.bf16.mxu0 %v756
        %978 = vmatpush1.bf16.msra.mxu0 %v755
        %979 = vmatprep.subr.bf16.mxu0 %v754
        %980 = vmatpush1.bf16.msra.mxu0 %v753
        %981 = vmatprep.subr.bf16.mxu0 %v752
        %982 = vmatpush1.bf16.msra.mxu0 %v751
        %983 = vmatprep.subr.bf16.mxu0 %v750
        %984 = vmatpush1.bf16.msra.mxu0 %v749
        %985 = vmatprep.subr.bf16.mxu0 %v748
        %986 = vmatpush1.bf16.msra.mxu0 %v747
        %987 = vmatprep.subr.bf16.mxu0 %v746
        %988 = vmatpush1.bf16.msra.mxu0 %v745
        %989 = vmatprep.subr.bf16.mxu0 0
        %990 = vmatpush2.bf16.msra.mxu0 0
        %991 = vmatprep.subr.bf16.mxu0 0
        %992 = vmatpush2.bf16.msra.mxu0 0
        %993 = vmatprep.subr.bf16.mxu0 0
        %994 = vmatpush2.bf16.msra.mxu0 0
        %995 = vmatprep.subr.bf16.mxu0 0
        %996 = vmatpush2.bf16.msra.mxu0 0
        %997 = vmatprep.subr.bf16.mxu0 0
        %998 = vmatpush2.bf16.msra.mxu0 0
        %999 = vmatprep.subr.bf16.mxu0 0
        %1000 = vmatpush2.bf16.msra.mxu0 0
        %1001 = vmatprep.subr.bf16.mxu0 0
        %1002 = vmatpush2.bf16.msra.mxu0 0
        %1003 = vmatprep.subr.bf16.mxu0 0
        %1004 = vmatpush2.bf16.msra.mxu0 0
        %1005 = vmatprep.mubr.bf16.mxu0 0
        %1006 = vmatmul.mubr.bf16.gmra.mxu0 %v971
        %v1007 = vpop.f32.mrf.mxu0
        %v1008 = vadd.f32 %v684, %v1007
        %v1009 = vpop.f32.mrf.mxu0
        %v1010 = vpop.f32.mrf.mxu0
        %v1011 = vadd.f32 %v684, %v1010
        %v1012 = vpop.f32.mrf.mxu0
        %1013 = vdwg.mxu0
        %v1014 = vmax.f32 %v1008, 0.0
        %v1015 = vmax.f32 %v1011, 0.0
        %v1016 = vpack.c.bf16 %v1015, %v1014
        %1017 = vmatprep.subr.bf16.mxu0 0
        %1018 = vmatpush1.bf16.msra.mxu0 %v866
        %1019 = vmatprep.subr.bf16.mxu0 0
        %1020 = vmatpush1.bf16.msra.mxu0 %v865
        %1021 = vmatprep.subr.bf16.mxu0 0
        %1022 = vmatpush1.bf16.msra.mxu0 %v864
        %1023 = vmatprep.subr.bf16.mxu0 0
        %1024 = vmatpush1.bf16.msra.mxu0 %v863
        %1025 = vmatprep.subr.bf16.mxu0 0
        %1026 = vmatpush1.bf16.msra.mxu0 %v862
        %1027 = vmatprep.subr.bf16.mxu0 0
        %1028 = vmatpush1.bf16.msra.mxu0 %v861
        %1029 = vmatprep.subr.bf16.mxu0 0
        %1030 = vmatpush1.bf16.msra.mxu0 %v860
        %1031 = vmatprep.subr.bf16.mxu0 0
        %1032 = vmatpush1.bf16.msra.mxu0 %v859
        %1033 = vmatprep.subr.bf16.mxu0 0
        %1034 = vmatpush2.bf16.msra.mxu0 0
        %1035 = vmatprep.subr.bf16.mxu0 0
        %1036 = vmatpush2.bf16.msra.mxu0 0
        %1037 = vmatprep.subr.bf16.mxu0 0
        %1038 = vmatpush2.bf16.msra.mxu0 0
        %1039 = vmatprep.subr.bf16.mxu0 0
        %1040 = vmatpush2.bf16.msra.mxu0 0
        %1041 = vmatprep.subr.bf16.mxu0 0
        %1042 = vmatpush2.bf16.msra.mxu0 0
        %1043 = vmatprep.subr.bf16.mxu0 0
        %1044 = vmatpush2.bf16.msra.mxu0 0
        %1045 = vmatprep.subr.bf16.mxu0 0
        %1046 = vmatpush2.bf16.msra.mxu0 0
        %1047 = vmatprep.subr.bf16.mxu0 0
        %1048 = vmatpush2.bf16.msra.mxu0 0
        %1049 = vmatprep.mubr.bf16.mxu0 0
        %1050 = vmatmul.mubr.bf16.gmra.mxu0 %v1016
        %v1051 = vpop.f32.mrf.mxu0
        %v1052 = vadd.f32 %v825, %v1051
        %v1053 = vpop.f32.mrf.mxu0
        %v1054 = vpop.f32.mrf.mxu0
        %v1055 = vadd.f32 %v825, %v1054
        %v1056 = vpop.f32.mrf.mxu0
        %1057 = vdwg.mxu0
        %v1058 = vmax.f32 %v1052, 0.0
        %v1059 = vmax.f32 %v1055, 0.0
        %p1060 = scmp.eq.s32.totalorder %s40, 1
        %s1061 = scalar_select %p1060, 1, 0
        %v1062 = vstv %s1061
        %vm1063 = vcmp.eq.s32.totalorder %v1062, 1
        %v1064 = vsel %vm1063, 0.0, %v1058
        %v1065 = vsel %vm1063, 0.0, %v1059
        %v1066 = vpack.c.bf16 %v1065, %v1064
        %v1068 = vunpack.c.l.b16 %v1066
        %v1069 = vunpack.c.h.b16 %v1066
        %v1070 = vpack.c.b16 %v1068, %v1068
        %v1071 = vpack.c.b16 %v1069, %v1069
        %v1073 = vshrl.u32 %v1070, 16
        %v1075 = vrot.slane %v1073, 7
        %v1076 = vshll.u32 %v1070, 16
        %v1078 = vor.u32 %v1075, %v1076
        %v1079 = vrot.slane %v1075, 4
        %v1081 = vshrl.u32 %v1071, 16
        %v1083 = vrot.slane %v1081, 7
        %v1084 = vshll.u32 %v1071, 16
        %v1086 = vor.u32 %v1083, %v1084
        %v1087 = vsel %vm932, %v1079, %v1086
        %v1088 = vrot.slane %v1083, 4
        %s1092 = scalar_lea.vmem [#allocation2], 108
        %v1093 = vld [vmem:[%s1092] sm:$0xf]
        %v1094 = vsel %vm955, %v1078, %v1093
        %1095 = vst [vmem:[%s1092] sm:$0xf] %v1094
        %1096 = vst [vmem:[%s1092 + $0x4] sm:$0xf] %v1087
        %v1097 = vld [vmem:[%s1092 + $0x8] sm:$0x1]
        %v1098 = vsel %vm961, %v1088, %v1097
        %1099 = vst [vmem:[%s1092 + $0x8] sm:$0x1] %v1098
        %v1100 = vld [vmem:[%s544] sm:$0xf]
        %v1101 = vld [vmem:[%s544 + $0x4] sm:$0xf]
        %v1102 = vld [vmem:[%s544 + $0x8] sm:$0xf]
        %v1103 = vld [vmem:[%s544 + $0xc] sm:$0xf]
        %v1104 = vld [vmem:[%s544 + $0x10] sm:$0xf]
        %v1105 = vld [vmem:[%s544 + $0x14] sm:$0xf]
        %v1106 = vld [vmem:[%s544 + $0x18] sm:$0xf]
        %v1107 = vld [vmem:[%s544 + $0x1c] sm:$0xf]
        %v1108 = vld [vmem:[%s544 + $0x20] sm:$0xf]
        %v1109 = vld [vmem:[%s544 + $0x24] sm:$0xf]
        %v1110 = vld [vmem:[%s544 + $0x28] sm:$0xf]
        %v1111 = vld [vmem:[%s544 + $0x2c] sm:$0xf]
        %v1112 = vld [vmem:[%s544 + $0x30] sm:$0xf]
        %v1113 = vld [vmem:[%s544 + $0x34] sm:$0xf]
        %v1114 = vld [vmem:[%s544 + $0x38] sm:$0xf]
        %v1115 = vld [vmem:[%s544 + $0x3c] sm:$0xf]
        %v1132 = vunpack.c.l.b16 %v1100
        %v1133 = vunpack.c.l.b16 %v1101
        %v1134 = vunpack.c.l.b16 %v1102
        %v1135 = vunpack.c.l.b16 %v1103
        %v1136 = vunpack.c.l.b16 %v1104
        %v1137 = vunpack.c.l.b16 %v1105
        %v1138 = vunpack.c.l.b16 %v1106
        %v1139 = vunpack.c.l.b16 %v1107
        %v1140 = vunpack.c.l.b16 %v1108
        %v1141 = vunpack.c.l.b16 %v1109
        %v1142 = vunpack.c.l.b16 %v1110
        %v1143 = vunpack.c.l.b16 %v1111
        %v1144 = vunpack.c.l.b16 %v1112
        %v1145 = vunpack.c.l.b16 %v1113
        %v1146 = vunpack.c.l.b16 %v1114
        %v1147 = vunpack.c.l.b16 %v1115
        %v1148 = vpack.c.b16 %v1133, %v1132
        %v1149 = vpack.c.b16 %v1135, %v1134
        %v1150 = vpack.c.b16 %v1137, %v1136
        %v1151 = vpack.c.b16 %v1139, %v1138
        %v1152 = vpack.c.b16 %v1141, %v1140
        %v1153 = vpack.c.b16 %v1143, %v1142
        %v1154 = vpack.c.b16 %v1145, %v1144
        %v1155 = vpack.c.b16 %v1147, %v1146
        %1164 = vmatprep.subr.bf16.mxu0 %v760
        %1165 = vmatpush1.bf16.msra.mxu0 %v759
        %1166 = vmatprep.subr.bf16.mxu0 %v758
        %1167 = vmatpush1.bf16.msra.mxu0 %v757
        %1168 = vmatprep.subr.bf16.mxu0 %v756
        %1169 = vmatpush1.bf16.msra.mxu0 %v755
        %1170 = vmatprep.subr.bf16.mxu0 %v754
        %1171 = vmatpush1.bf16.msra.mxu0 %v753
        %1172 = vmatprep.subr.bf16.mxu0 %v752
        %1173 = vmatpush1.bf16.msra.mxu0 %v751
        %1174 = vmatprep.subr.bf16.mxu0 %v750
        %1175 = vmatpush1.bf16.msra.mxu0 %v749
        %1176 = vmatprep.subr.bf16.mxu0 %v748
        %1177 = vmatpush1.bf16.msra.mxu0 %v747
        %1178 = vmatprep.subr.bf16.mxu0 %v746
        %1179 = vmatpush1.bf16.msra.mxu0 %v745
        %1180 = vmatprep.subr.bf16.mxu0 0
        %1181 = vmatpush2.bf16.msra.mxu0 0
        %1182 = vmatprep.subr.bf16.mxu0 0
        %1183 = vmatpush2.bf16.msra.mxu0 0
        %1184 = vmatprep.subr.bf16.mxu0 0
        %1185 = vmatpush2.bf16.msra.mxu0 0
        %1186 = vmatprep.subr.bf16.mxu0 0
        %1187 = vmatpush2.bf16.msra.mxu0 0
        %1188 = vmatprep.subr.bf16.mxu0 0
        %1189 = vmatpush2.bf16.msra.mxu0 0
        %1190 = vmatprep.subr.bf16.mxu0 0
        %1191 = vmatpush2.bf16.msra.mxu0 0
        %1192 = vmatprep.subr.bf16.mxu0 0
        %1193 = vmatpush2.bf16.msra.mxu0 0
        %1194 = vmatprep.subr.bf16.mxu0 0
        %1195 = vmatpush2.bf16.msra.mxu0 0
        %1196 = vmatprep.mubr.bf16.mxu0 0
        %1197 = vmatmul.mubr.bf16.gmra.mxu0 %v1148
        %v1198 = vpop.f32.mrf.mxu0
        %v1199 = vadd.f32 %v684, %v1198
        %v1200 = vpop.f32.mrf.mxu0
        %v1201 = vadd.f32 %v688, %v1200
        %v1202 = vpop.f32.mrf.mxu0
        %v1203 = vadd.f32 %v684, %v1202
        %v1204 = vpop.f32.mrf.mxu0
        %v1205 = vadd.f32 %v688, %v1204
        %1206 = vmatprep.mubr.bf16.mxu0 0
        %1207 = vmatmul.mubr.bf16.gmra.mxu0 %v1149
        %v1208 = vpop.f32.mrf.mxu0
        %v1209 = vadd.f32 %v684, %v1208
        %v1210 = vpop.f32.mrf.mxu0
        %v1211 = vadd.f32 %v688, %v1210
        %v1212 = vpop.f32.mrf.mxu0
        %v1213 = vadd.f32 %v684, %v1212
        %v1214 = vpop.f32.mrf.mxu0
        %v1215 = vadd.f32 %v688, %v1214
        %1216 = vmatprep.mubr.bf16.mxu0 0
        %1217 = vmatmul.mubr.bf16.gmra.mxu0 %v1150
        %v1218 = vpop.f32.mrf.mxu0
        %v1219 = vadd.f32 %v684, %v1218
        %v1220 = vpop.f32.mrf.mxu0
        %v1221 = vadd.f32 %v688, %v1220
        %v1222 = vpop.f32.mrf.mxu0
        %v1223 = vadd.f32 %v684, %v1222
        %v1224 = vpop.f32.mrf.mxu0
        %v1225 = vadd.f32 %v688, %v1224
        %1226 = vmatprep.mubr.bf16.mxu0 0
        %1227 = vmatmul.mubr.bf16.gmra.mxu0 %v1151
        %v1228 = vpop.f32.mrf.mxu0
        %v1229 = vadd.f32 %v684, %v1228
        %v1230 = vpop.f32.mrf.mxu0
        %v1231 = vadd.f32 %v688, %v1230
        %v1232 = vpop.f32.mrf.mxu0
        %v1233 = vadd.f32 %v684, %v1232
        %v1234 = vpop.f32.mrf.mxu0
        %v1235 = vadd.f32 %v688, %v1234
        %1236 = vmatprep.mubr.bf16.mxu0 0
        %1237 = vmatmul.mubr.bf16.gmra.mxu0 %v1152
        %v1238 = vpop.f32.mrf.mxu0
        %v1239 = vadd.f32 %v684, %v1238
        %v1240 = vpop.f32.mrf.mxu0
        %v1241 = vadd.f32 %v688, %v1240
        %v1242 = vpop.f32.mrf.mxu0
        %v1243 = vadd.f32 %v684, %v1242
        %v1244 = vpop.f32.mrf.mxu0
        %v1245 = vadd.f32 %v688, %v1244
        %1246 = vmatprep.mubr.bf16.mxu0 0
        %1247 = vmatmul.mubr.bf16.gmra.mxu0 %v1153
        %v1248 = vpop.f32.mrf.mxu0
        %v1249 = vadd.f32 %v684, %v1248
        %v1250 = vpop.f32.mrf.mxu0
        %v1251 = vadd.f32 %v688, %v1250
        %v1252 = vpop.f32.mrf.mxu0
        %v1253 = vadd.f32 %v684, %v1252
        %v1254 = vpop.f32.mrf.mxu0
        %v1255 = vadd.f32 %v688, %v1254
        %1256 = vmatprep.mubr.bf16.mxu0 0
        %1257 = vmatmul.mubr.bf16.gmra.mxu0 %v1154
        %v1258 = vpop.f32.mrf.mxu0
        %v1259 = vadd.f32 %v684, %v1258
        %v1260 = vpop.f32.mrf.mxu0
        %v1261 = vadd.f32 %v688, %v1260
        %v1262 = vpop.f32.mrf.mxu0
        %v1263 = vadd.f32 %v684, %v1262
        %v1264 = vpop.f32.mrf.mxu0
        %v1265 = vadd.f32 %v688, %v1264
        %1266 = vmatprep.mubr.bf16.mxu0 0
        %1267 = vmatmul.mubr.bf16.gmra.mxu0 %v1155
        %v1268 = vpop.f32.mrf.mxu0
        %v1269 = vadd.f32 %v684, %v1268
        %v1270 = vpop.f32.mrf.mxu0
        %v1271 = vadd.f32 %v688, %v1270
        %v1272 = vpop.f32.mrf.mxu0
        %v1273 = vadd.f32 %v684, %v1272
        %v1274 = vpop.f32.mrf.mxu0
        %v1275 = vadd.f32 %v688, %v1274
        %1276 = vdwg.mxu0
        %v1277 = vmax.f32 %v1199, 0.0
        %v1278 = vmax.f32 %v1201, 0.0
        %v1279 = vmax.f32 %v1203, 0.0
        %v1280 = vmax.f32 %v1205, 0.0
        %v1281 = vmax.f32 %v1209, 0.0
        %v1282 = vmax.f32 %v1211, 0.0
        %v1283 = vmax.f32 %v1213, 0.0
        %v1284 = vmax.f32 %v1215, 0.0
        %v1285 = vmax.f32 %v1219, 0.0
        %v1286 = vmax.f32 %v1221, 0.0
        %v1287 = vmax.f32 %v1223, 0.0
        %v1288 = vmax.f32 %v1225, 0.0
        %v1289 = vmax.f32 %v1229, 0.0
        %v1290 = vmax.f32 %v1231, 0.0
        %v1291 = vmax.f32 %v1233, 0.0
        %v1292 = vmax.f32 %v1235, 0.0
        %v1293 = vmax.f32 %v1239, 0.0
        %v1294 = vmax.f32 %v1241, 0.0
        %v1295 = vmax.f32 %v1243, 0.0
        %v1296 = vmax.f32 %v1245, 0.0
        %v1297 = vmax.f32 %v1249, 0.0
        %v1298 = vmax.f32 %v1251, 0.0
        %v1299 = vmax.f32 %v1253, 0.0
        %v1300 = vmax.f32 %v1255, 0.0
        %v1301 = vmax.f32 %v1259, 0.0
        %v1302 = vmax.f32 %v1261, 0.0
        %v1303 = vmax.f32 %v1263, 0.0
        %v1304 = vmax.f32 %v1265, 0.0
        %v1305 = vmax.f32 %v1269, 0.0
        %v1306 = vmax.f32 %v1271, 0.0
        %v1307 = vmax.f32 %v1273, 0.0
        %v1308 = vmax.f32 %v1275, 0.0
        %v1309 = vpack.c.bf16 %v1279, %v1277
        %v1310 = vpack.c.bf16 %v1283, %v1281
        %v1311 = vpack.c.bf16 %v1287, %v1285
        %v1312 = vpack.c.bf16 %v1291, %v1289
        %v1313 = vpack.c.bf16 %v1295, %v1293
        %v1314 = vpack.c.bf16 %v1299, %v1297
        %v1315 = vpack.c.bf16 %v1303, %v1301
        %v1316 = vpack.c.bf16 %v1307, %v1305
        %1317 = vmatprep.subr.bf16.mxu0 0
        %1318 = vmatpush1.bf16.msra.mxu0 %v866
        %1319 = vmatprep.subr.bf16.mxu0 0
        %1320 = vmatpush1.bf16.msra.mxu0 %v865
        %1321 = vmatprep.subr.bf16.mxu0 0
        %1322 = vmatpush1.bf16.msra.mxu0 %v864
        %1323 = vmatprep.subr.bf16.mxu0 0
        %1324 = vmatpush1.bf16.msra.mxu0 %v863
        %1325 = vmatprep.subr.bf16.mxu0 0
        %1326 = vmatpush1.bf16.msra.mxu0 %v862
        %1327 = vmatprep.subr.bf16.mxu0 0
        %1328 = vmatpush1.bf16.msra.mxu0 %v861
        %1329 = vmatprep.subr.bf16.mxu0 0
        %1330 = vmatpush1.bf16.msra.mxu0 %v860
        %1331 = vmatprep.subr.bf16.mxu0 0
        %1332 = vmatpush1.bf16.msra.mxu0 %v859
        %1333 = vmatprep.subr.bf16.mxu0 0
        %1334 = vmatpush2.bf16.msra.mxu0 0
        %1335 = vmatprep.subr.bf16.mxu0 0
        %1336 = vmatpush2.bf16.msra.mxu0 0
        %1337 = vmatprep.subr.bf16.mxu0 0
        %1338 = vmatpush2.bf16.msra.mxu0 0
        %1339 = vmatprep.subr.bf16.mxu0 0
        %1340 = vmatpush2.bf16.msra.mxu0 0
        %1341 = vmatprep.subr.bf16.mxu0 0
        %1342 = vmatpush2.bf16.msra.mxu0 0
        %1343 = vmatprep.subr.bf16.mxu0 0
        %1344 = vmatpush2.bf16.msra.mxu0 0
        %1345 = vmatprep.subr.bf16.mxu0 0
        %1346 = vmatpush2.bf16.msra.mxu0 0
        %1347 = vmatprep.subr.bf16.mxu0 0
        %1348 = vmatpush2.bf16.msra.mxu0 0
        %1349 = vmatprep.mubr.bf16.mxu0 0
        %1350 = vmatmul.mubr.bf16.gmra.mxu0 %v1309
        %v1351 = vpop.f32.mrf.mxu0
        %v1352 = vadd.f32 %v825, %v1351
        %v1353 = vpop.f32.mrf.mxu0
        %v1354 = vpop.f32.mrf.mxu0
        %v1355 = vadd.f32 %v825, %v1354
        %v1356 = vpop.f32.mrf.mxu0
        %1357 = vmatprep.mubr.bf16.mxu0 0
        %1358 = vmatmul.mubr.bf16.gmra.mxu0 %v1310
        %v1359 = vpop.f32.mrf.mxu0
        %v1360 = vadd.f32 %v825, %v1359
        %v1361 = vpop.f32.mrf.mxu0
        %v1362 = vpop.f32.mrf.mxu0
        %v1363 = vadd.f32 %v825, %v1362
        %v1364 = vpop.f32.mrf.mxu0
        %1365 = vmatprep.mubr.bf16.mxu0 0
        %1366 = vmatmul.mubr.bf16.gmra.mxu0 %v1311
        %v1367 = vpop.f32.mrf.mxu0
        %v1368 = vadd.f32 %v825, %v1367
        %v1369 = vpop.f32.mrf.mxu0
        %v1370 = vpop.f32.mrf.mxu0
        %v1371 = vadd.f32 %v825, %v1370
        %v1372 = vpop.f32.mrf.mxu0
        %1373 = vmatprep.mubr.bf16.mxu0 0
        %1374 = vmatmul.mubr.bf16.gmra.mxu0 %v1312
        %v1375 = vpop.f32.mrf.mxu0
        %v1376 = vadd.f32 %v825, %v1375
        %v1377 = vpop.f32.mrf.mxu0
        %v1378 = vpop.f32.mrf.mxu0
        %v1379 = vadd.f32 %v825, %v1378
        %v1380 = vpop.f32.mrf.mxu0
        %1381 = vmatprep.mubr.bf16.mxu0 0
        %1382 = vmatmul.mubr.bf16.gmra.mxu0 %v1313
        %v1383 = vpop.f32.mrf.mxu0
        %v1384 = vadd.f32 %v825, %v1383
        %v1385 = vpop.f32.mrf.mxu0
        %v1386 = vpop.f32.mrf.mxu0
        %v1387 = vadd.f32 %v825, %v1386
        %v1388 = vpop.f32.mrf.mxu0
        %1389 = vmatprep.mubr.bf16.mxu0 0
        %1390 = vmatmul.mubr.bf16.gmra.mxu0 %v1314
        %v1391 = vpop.f32.mrf.mxu0
        %v1392 = vadd.f32 %v825, %v1391
        %v1393 = vpop.f32.mrf.mxu0
        %v1394 = vpop.f32.mrf.mxu0
        %v1395 = vadd.f32 %v825, %v1394
        %v1396 = vpop.f32.mrf.mxu0
        %1397 = vmatprep.mubr.bf16.mxu0 0
        %1398 = vmatmul.mubr.bf16.gmra.mxu0 %v1315
        %v1399 = vpop.f32.mrf.mxu0
        %v1400 = vadd.f32 %v825, %v1399
        %v1401 = vpop.f32.mrf.mxu0
        %v1402 = vpop.f32.mrf.mxu0
        %v1403 = vadd.f32 %v825, %v1402
        %v1404 = vpop.f32.mrf.mxu0
        %1405 = vmatprep.mubr.bf16.mxu0 0
        %1406 = vmatmul.mubr.bf16.gmra.mxu0 %v1316
        %v1407 = vpop.f32.mrf.mxu0
        %v1408 = vadd.f32 %v825, %v1407
        %v1409 = vpop.f32.mrf.mxu0
        %v1410 = vpop.f32.mrf.mxu0
        %v1411 = vadd.f32 %v825, %v1410
        %v1412 = vpop.f32.mrf.mxu0
        %1413 = vdwg.mxu0
        %v1414 = vmax.f32 %v1352, 0.0
        %v1415 = vmax.f32 %v1355, 0.0
        %v1416 = vmax.f32 %v1360, 0.0
        %v1417 = vmax.f32 %v1363, 0.0
        %v1418 = vmax.f32 %v1368, 0.0
        %v1419 = vmax.f32 %v1371, 0.0
        %v1420 = vmax.f32 %v1376, 0.0
        %v1421 = vmax.f32 %v1379, 0.0
        %v1422 = vmax.f32 %v1384, 0.0
        %v1423 = vmax.f32 %v1387, 0.0
        %v1424 = vmax.f32 %v1392, 0.0
        %v1425 = vmax.f32 %v1395, 0.0
        %v1426 = vmax.f32 %v1400, 0.0
        %v1427 = vmax.f32 %v1403, 0.0
        %v1428 = vmax.f32 %v1408, 0.0
        %v1429 = vmax.f32 %v1411, 0.0
        %v1430 = vpack.c.bf16 %v1415, %v1414
        %v1431 = vpack.c.bf16 %v1417, %v1416
        %v1432 = vpack.c.bf16 %v1419, %v1418
        %v1433 = vpack.c.bf16 %v1421, %v1420
        %v1434 = vpack.c.bf16 %v1423, %v1422
        %v1435 = vpack.c.bf16 %v1425, %v1424
        %v1436 = vpack.c.bf16 %v1427, %v1426
        %v1437 = vpack.c.bf16 %v1429, %v1428
        %v1446 = vunpack.c.l.b16 %v1430
        %v1447 = vunpack.c.h.b16 %v1430
        %v1448 = vunpack.c.l.b16 %v1431
        %v1449 = vunpack.c.h.b16 %v1431
        %v1450 = vunpack.c.l.b16 %v1432
        %v1451 = vunpack.c.h.b16 %v1432
        %v1452 = vunpack.c.l.b16 %v1433
        %v1453 = vunpack.c.h.b16 %v1433
        %v1454 = vunpack.c.l.b16 %v1434
        %v1455 = vunpack.c.h.b16 %v1434
        %v1456 = vunpack.c.l.b16 %v1435
        %v1457 = vunpack.c.h.b16 %v1435
        %v1458 = vunpack.c.l.b16 %v1436
        %v1459 = vunpack.c.h.b16 %v1436
        %v1460 = vunpack.c.l.b16 %v1437
        %v1461 = vunpack.c.h.b16 %v1437
        %v1462 = vpack.c.b16 %v1446, %v1446
        %v1463 = vpack.c.b16 %v1447, %v1447
        %v1464 = vpack.c.b16 %v1448, %v1448
        %v1465 = vpack.c.b16 %v1449, %v1449
        %v1466 = vpack.c.b16 %v1450, %v1450
        %v1467 = vpack.c.b16 %v1451, %v1451
        %v1468 = vpack.c.b16 %v1452, %v1452
        %v1469 = vpack.c.b16 %v1453, %v1453
        %v1470 = vpack.c.b16 %v1454, %v1454
        %v1471 = vpack.c.b16 %v1455, %v1455
        %v1472 = vpack.c.b16 %v1456, %v1456
        %v1473 = vpack.c.b16 %v1457, %v1457
        %v1474 = vpack.c.b16 %v1458, %v1458
        %v1475 = vpack.c.b16 %v1459, %v1459
        %v1476 = vpack.c.b16 %v1460, %v1460
        %v1477 = vpack.c.b16 %v1461, %v1461
        %v1479 = vshrl.u32 %v1462, 16
        %v1481 = vrot.slane %v1479, 7
        %v1482 = vshll.u32 %v1462, 16
        %v1484 = vor.u32 %v1481, %v1482
        %v1485 = vrot.slane %v1481, 4
        %v1487 = vshrl.u32 %v1463, 16
        %v1489 = vrot.slane %v1487, 7
        %v1490 = vshll.u32 %v1463, 16
        %v1492 = vor.u32 %v1489, %v1490
        %v1493 = vsel %vm932, %v1485, %v1492
        %v1494 = vrot.slane %v1489, 4
        %v1496 = vshrl.u32 %v1464, 16
        %v1498 = vrot.slane %v1496, 7
        %v1499 = vshll.u32 %v1464, 16
        %v1501 = vor.u32 %v1498, %v1499
        %v1502 = vrot.slane %v1498, 4
        %v1504 = vshrl.u32 %v1465, 16
        %v1506 = vrot.slane %v1504, 7
        %v1507 = vshll.u32 %v1465, 16
        %v1509 = vor.u32 %v1506, %v1507
        %v1510 = vsel %vm932, %v1502, %v1509
        %v1511 = vrot.slane %v1506, 4
        %v1513 = vshrl.u32 %v1466, 16
        %v1515 = vrot.slane %v1513, 7
        %v1516 = vshll.u32 %v1466, 16
        %v1518 = vor.u32 %v1515, %v1516
        %v1519 = vrot.slane %v1515, 4
        %v1521 = vshrl.u32 %v1467, 16
        %v1523 = vrot.slane %v1521, 7
        %v1524 = vshll.u32 %v1467, 16
        %v1526 = vor.u32 %v1523, %v1524
        %v1527 = vsel %vm932, %v1519, %v1526
        %v1528 = vrot.slane %v1523, 4
        %v1530 = vshrl.u32 %v1468, 16
        %v1532 = vrot.slane %v1530, 7
        %v1533 = vshll.u32 %v1468, 16
        %v1535 = vor.u32 %v1532, %v1533
        %v1536 = vrot.slane %v1532, 4
        %v1538 = vshrl.u32 %v1469, 16
        %v1540 = vrot.slane %v1538, 7
        %v1541 = vshll.u32 %v1469, 16
        %v1543 = vor.u32 %v1540, %v1541
        %v1544 = vsel %vm932, %v1536, %v1543
        %v1545 = vrot.slane %v1540, 4
        %v1547 = vshrl.u32 %v1470, 16
        %v1549 = vrot.slane %v1547, 7
        %v1550 = vshll.u32 %v1470, 16
        %v1552 = vor.u32 %v1549, %v1550
        %v1553 = vrot.slane %v1549, 4
        %v1555 = vshrl.u32 %v1471, 16
        %v1557 = vrot.slane %v1555, 7
        %v1558 = vshll.u32 %v1471, 16
        %v1560 = vor.u32 %v1557, %v1558
        %v1561 = vsel %vm932, %v1553, %v1560
        %v1562 = vrot.slane %v1557, 4
        %v1564 = vshrl.u32 %v1472, 16
        %v1566 = vrot.slane %v1564, 7
        %v1567 = vshll.u32 %v1472, 16
        %v1569 = vor.u32 %v1566, %v1567
        %v1570 = vrot.slane %v1566, 4
        %v1572 = vshrl.u32 %v1473, 16
        %v1574 = vrot.slane %v1572, 7
        %v1575 = vshll.u32 %v1473, 16
        %v1577 = vor.u32 %v1574, %v1575
        %v1578 = vsel %vm932, %v1570, %v1577
        %v1579 = vrot.slane %v1574, 4
        %v1581 = vshrl.u32 %v1474, 16
        %v1583 = vrot.slane %v1581, 7
        %v1584 = vshll.u32 %v1474, 16
        %v1586 = vor.u32 %v1583, %v1584
        %v1587 = vrot.slane %v1583, 4
        %v1589 = vshrl.u32 %v1475, 16
        %v1591 = vrot.slane %v1589, 7
        %v1592 = vshll.u32 %v1475, 16
        %v1594 = vor.u32 %v1591, %v1592
        %v1595 = vsel %vm932, %v1587, %v1594
        %v1596 = vrot.slane %v1591, 4
        %v1598 = vshrl.u32 %v1476, 16
        %v1600 = vrot.slane %v1598, 7
        %v1601 = vshll.u32 %v1476, 16
        %v1603 = vor.u32 %v1600, %v1601
        %v1604 = vrot.slane %v1600, 4
        %v1606 = vshrl.u32 %v1477, 16
        %v1608 = vrot.slane %v1606, 7
        %v1609 = vshll.u32 %v1477, 16
        %v1611 = vor.u32 %v1608, %v1609
        %v1612 = vsel %vm932, %v1604, %v1611
        %v1613 = vrot.slane %v1608, 4
        %s1638 = scalar_lea.vmem [#allocation2], 12
        %v1639 = vld [vmem:[%s1638] sm:$0xf]
        %v1640 = vsel %vm955, %v1484, %v1639
        %1641 = vst [vmem:[%s1638] sm:$0xf] %v1640
        %1642 = vst [vmem:[%s1638 + $0x4] sm:$0xf] %v1493
        %v1643 = vld [vmem:[%s1638 + $0x8] sm:$0x1]
        %v1644 = vsel %vm961, %v1494, %v1643
        %1645 = vst [vmem:[%s1638 + $0x8] sm:$0x1] %v1644
        %v1646 = vld [vmem:[%s1638 + $0xc] sm:$0xf]
        %v1647 = vsel %vm955, %v1501, %v1646
        %1648 = vst [vmem:[%s1638 + $0xc] sm:$0xf] %v1647
        %1649 = vst [vmem:[%s1638 + $0x10] sm:$0xf] %v1510
        %v1650 = vld [vmem:[%s1638 + $0x14] sm:$0x1]
        %v1651 = vsel %vm961, %v1511, %v1650
        %1652 = vst [vmem:[%s1638 + $0x14] sm:$0x1] %v1651
        %v1653 = vld [vmem:[%s1638 + $0x18] sm:$0xf]
        %v1654 = vsel %vm955, %v1518, %v1653
        %1655 = vst [vmem:[%s1638 + $0x18] sm:$0xf] %v1654
        %1656 = vst [vmem:[%s1638 + $0x1c] sm:$0xf] %v1527
        %v1657 = vld [vmem:[%s1638 + $0x20] sm:$0x1]
        %v1658 = vsel %vm961, %v1528, %v1657
        %1659 = vst [vmem:[%s1638 + $0x20] sm:$0x1] %v1658
        %v1660 = vld [vmem:[%s1638 + $0x24] sm:$0xf]
        %v1661 = vsel %vm955, %v1535, %v1660
        %1662 = vst [vmem:[%s1638 + $0x24] sm:$0xf] %v1661
        %1663 = vst [vmem:[%s1638 + $0x28] sm:$0xf] %v1544
        %v1664 = vld [vmem:[%s1638 + $0x2c] sm:$0x1]
        %v1665 = vsel %vm961, %v1545, %v1664
        %1666 = vst [vmem:[%s1638 + $0x2c] sm:$0x1] %v1665
        %v1667 = vld [vmem:[%s1638 + $0x30] sm:$0xf]
        %v1668 = vsel %vm955, %v1552, %v1667
        %1669 = vst [vmem:[%s1638 + $0x30] sm:$0xf] %v1668
        %1670 = vst [vmem:[%s1638 + $0x34] sm:$0xf] %v1561
        %v1671 = vld [vmem:[%s1638 + $0x38] sm:$0x1]
        %v1672 = vsel %vm961, %v1562, %v1671
        %1673 = vst [vmem:[%s1638 + $0x38] sm:$0x1] %v1672
        %v1674 = vld [vmem:[%s1638 + $0x3c] sm:$0xf]
        %v1675 = vsel %vm955, %v1569, %v1674
        %1676 = vst [vmem:[%s1638 + $0x3c] sm:$0xf] %v1675
        %1677 = vst [vmem:[%s1638 + $0x40] sm:$0xf] %v1578
        %v1678 = vld [vmem:[%s1638 + $0x44] sm:$0x1]
        %v1679 = vsel %vm961, %v1579, %v1678
        %1680 = vst [vmem:[%s1638 + $0x44] sm:$0x1] %v1679
        %v1681 = vld [vmem:[%s1638 + $0x48] sm:$0xf]
        %v1682 = vsel %vm955, %v1586, %v1681
        %1683 = vst [vmem:[%s1638 + $0x48] sm:$0xf] %v1682
        %1684 = vst [vmem:[%s1638 + $0x4c] sm:$0xf] %v1595
        %v1685 = vld [vmem:[%s1638 + $0x50] sm:$0x1]
        %v1686 = vsel %vm961, %v1596, %v1685
        %1687 = vst [vmem:[%s1638 + $0x50] sm:$0x1] %v1686
        %v1688 = vld [vmem:[%s1638 + $0x54] sm:$0xf]
        %v1689 = vsel %vm955, %v1603, %v1688
        %1690 = vst [vmem:[%s1638 + $0x54] sm:$0xf] %v1689
        %1691 = vst [vmem:[%s1638 + $0x58] sm:$0xf] %v1612
        %v1692 = vld [vmem:[%s1638 + $0x5c] sm:$0x1]
        %v1693 = vsel %vm961, %v1613, %v1692
        %1694 = vst [vmem:[%s1638 + $0x5c] sm:$0x1] %v1693
        %v1695 = vld [vmem:[#allocation2] sm:$0x1]
        %v1696 = vsel %vm961, 0, %v1695
        %1697 = vst [vmem:[#allocation2] sm:$0x1] %v1696
        %v1698 = vld [vmem:[#allocation2 + $0xc] sm:$0x1]
        %v1699 = vsel %vm961, 0, %v1698
        %1700 = vst [vmem:[#allocation2 + $0xc] sm:$0x1] %v1699
        %v1701 = vld [vmem:[#allocation2 + $0x18] sm:$0x1]
        %v1702 = vsel %vm961, 0, %v1701
        %1703 = vst [vmem:[#allocation2 + $0x18] sm:$0x1] %v1702
        %v1704 = vld [vmem:[#allocation2 + $0x24] sm:$0x1]
        %v1705 = vsel %vm961, 0, %v1704
        %1706 = vst [vmem:[#allocation2 + $0x24] sm:$0x1] %v1705
        %v1707 = vld [vmem:[#allocation2 + $0x30] sm:$0x1]
        %v1708 = vsel %vm961, 0, %v1707
        %1709 = vst [vmem:[#allocation2 + $0x30] sm:$0x1] %v1708
        %v1710 = vld [vmem:[#allocation2 + $0x3c] sm:$0x1]
        %v1711 = vsel %vm961, 0, %v1710
        %1712 = vst [vmem:[#allocation2 + $0x3c] sm:$0x1] %v1711
        %v1713 = vld [vmem:[#allocation2 + $0x48] sm:$0x1]
        %v1714 = vsel %vm961, 0, %v1713
        %1715 = vst [vmem:[#allocation2 + $0x48] sm:$0x1] %v1714
        %v1716 = vld [vmem:[#allocation2 + $0x54] sm:$0x1]
        %v1717 = vsel %vm961, 0, %v1716
        %1718 = vst [vmem:[#allocation2 + $0x54] sm:$0x1] %v1717
        %v1719 = vld [vmem:[#allocation2 + $0x60] sm:$0x1]
        %v1720 = vsel %vm961, 0, %v1719
        %1721 = vst [vmem:[#allocation2 + $0x60] sm:$0x1] %v1720
        %v1722 = vld [vmem:[#allocation2 + $0x6c] sm:$0x1]
        %v1723 = vsel %vm961, 0, %v1722
        %1724 = vst [vmem:[#allocation2 + $0x6c] sm:$0x1] %v1723
        %vm1725 = vmand %vm960, %vm954
        %v1726 = vld [vmem:[#allocation2 + $0x8] sm:$0x1]
        %v1727 = vsel %vm1725, 0, %v1726
        %1728 = vst [vmem:[#allocation2 + $0x8] sm:$0x1] %v1727
        %v1729 = vld [vmem:[#allocation2 + $0x14] sm:$0x1]
        %v1730 = vsel %vm1725, 0, %v1729
        %1731 = vst [vmem:[#allocation2 + $0x14] sm:$0x1] %v1730
        %v1732 = vld [vmem:[#allocation2 + $0x20] sm:$0x1]
        %v1733 = vsel %vm1725, 0, %v1732
        %1734 = vst [vmem:[#allocation2 + $0x20] sm:$0x1] %v1733
        %v1735 = vld [vmem:[#allocation2 + $0x2c] sm:$0x1]
        %v1736 = vsel %vm1725, 0, %v1735
        %1737 = vst [vmem:[#allocation2 + $0x2c] sm:$0x1] %v1736
        %v1738 = vld [vmem:[#allocation2 + $0x38] sm:$0x1]
        %v1739 = vsel %vm1725, 0, %v1738
        %1740 = vst [vmem:[#allocation2 + $0x38] sm:$0x1] %v1739
        %v1741 = vld [vmem:[#allocation2 + $0x44] sm:$0x1]
        %v1742 = vsel %vm1725, 0, %v1741
        %1743 = vst [vmem:[#allocation2 + $0x44] sm:$0x1] %v1742
        %v1744 = vld [vmem:[#allocation2 + $0x50] sm:$0x1]
        %v1745 = vsel %vm1725, 0, %v1744
        %1746 = vst [vmem:[#allocation2 + $0x50] sm:$0x1] %v1745
        %v1747 = vld [vmem:[#allocation2 + $0x5c] sm:$0x1]
        %v1748 = vsel %vm1725, 0, %v1747
        %1749 = vst [vmem:[#allocation2 + $0x5c] sm:$0x1] %v1748
        %v1750 = vld [vmem:[#allocation2 + $0x68] sm:$0x1]
        %v1751 = vsel %vm1725, 0, %v1750
        %1752 = vst [vmem:[#allocation2 + $0x68] sm:$0x1] %v1751
        %v1753 = vld [vmem:[#allocation2 + $0x74] sm:$0x1]
        %v1754 = vsel %vm1725, 0, %v1753
        %1755 = vst [vmem:[#allocation2 + $0x74] sm:$0x1] %v1754
        %v1756 = vld [vmem:[%s8] sm:$0x1]
        %v1757 = vld [vmem:[#allocation2] sm:$0xf]
        %v1758 = vld [vmem:[#allocation2 + $0x4] sm:$0xf]
        %v1759 = vld [vmem:[#allocation2 + $0xc] sm:$0xf]
        %v1760 = vld [vmem:[#allocation2 + $0x10] sm:$0xf]
        %v1761 = vld [vmem:[#allocation2 + $0x18] sm:$0xf]
        %v1762 = vld [vmem:[#allocation2 + $0x1c] sm:$0xf]
        %v1763 = vld [vmem:[#allocation2 + $0x24] sm:$0xf]
        %v1764 = vld [vmem:[#allocation2 + $0x28] sm:$0xf]
        %v1765 = vld [vmem:[#allocation2 + $0x30] sm:$0xf]
        %v1766 = vld [vmem:[#allocation2 + $0x34] sm:$0xf]
        %v1767 = vld [vmem:[#allocation2 + $0x3c] sm:$0xf]
        %v1768 = vld [vmem:[#allocation2 + $0x40] sm:$0xf]
        %v1769 = vld [vmem:[#allocation2 + $0x48] sm:$0xf]
        %v1770 = vld [vmem:[#allocation2 + $0x4c] sm:$0xf]
        %v1771 = vld [vmem:[#allocation2 + $0x54] sm:$0xf]
        %v1772 = vld [vmem:[#allocation2 + $0x58] sm:$0xf]
        %v1773 = vld [vmem:[#allocation12] sm:$0xf]
        %v1774 = vld [vmem:[#allocation12 + $0x4] sm:$0xf]
        %v1775 = vld [vmem:[#allocation12 + $0x8] sm:$0xf]
        %v1776 = vld [vmem:[#allocation12 + $0xc] sm:$0xf]
        %v1777 = vld [vmem:[#allocation12 + $0x10] sm:$0xf]
        %v1778 = vld [vmem:[#allocation12 + $0x14] sm:$0xf]
        %v1779 = vld [vmem:[#allocation12 + $0x18] sm:$0xf]
        %v1780 = vld [vmem:[#allocation12 + $0x1c] sm:$0xf]
        %v1781 = vld [vmem:[#allocation12 + $0x20] sm:$0xf]
        %v1782 = vld [vmem:[#allocation12 + $0x24] sm:$0xf]
        %v1783 = vld [vmem:[#allocation12 + $0x28] sm:$0xf]
        %v1784 = vld [vmem:[#allocation12 + $0x2c] sm:$0xf]
        %v1785 = vld [vmem:[#allocation12 + $0x30] sm:$0xf]
        %v1786 = vld [vmem:[#allocation12 + $0x34] sm:$0xf]
        %v1787 = vld [vmem:[#allocation12 + $0x38] sm:$0xf]
        %v1788 = vld [vmem:[#allocation12 + $0x3c] sm:$0xf]
        %v1805 = vunpack.c.l.b16 %v1757
        %v1806 = vunpack.c.l.b16 %v1758
        %v1807 = vunpack.c.l.b16 %v1759
        %v1808 = vunpack.c.l.b16 %v1760
        %v1809 = vunpack.c.l.b16 %v1761
        %v1810 = vunpack.c.l.b16 %v1762
        %v1811 = vunpack.c.l.b16 %v1763
        %v1812 = vunpack.c.l.b16 %v1764
        %v1813 = vunpack.c.l.b16 %v1765
        %v1814 = vunpack.c.l.b16 %v1766
        %v1815 = vunpack.c.l.b16 %v1767
        %v1816 = vunpack.c.l.b16 %v1768
        %v1817 = vunpack.c.l.b16 %v1769
        %v1818 = vunpack.c.l.b16 %v1770
        %v1819 = vunpack.c.l.b16 %v1771
        %v1820 = vunpack.c.l.b16 %v1772
        %v1821 = vpack.c.b16 %v1806, %v1805
        %v1822 = vpack.c.b16 %v1808, %v1807
        %v1823 = vpack.c.b16 %v1810, %v1809
        %v1824 = vpack.c.b16 %v1812, %v1811
        %v1825 = vpack.c.b16 %v1814, %v1813
        %v1826 = vpack.c.b16 %v1816, %v1815
        %v1827 = vpack.c.b16 %v1818, %v1817
        %v1828 = vpack.c.b16 %v1820, %v1819
        %v1853 = vunpack.c.l.b16 %v1773
        %v1854 = vunpack.c.l.b16 %v1774
        %v1855 = vunpack.c.l.b16 %v1775
        %v1856 = vunpack.c.l.b16 %v1776
        %v1857 = vunpack.c.l.b16 %v1777
        %v1858 = vunpack.c.l.b16 %v1778
        %v1859 = vunpack.c.l.b16 %v1779
        %v1860 = vunpack.c.l.b16 %v1780
        %v1861 = vunpack.c.l.b16 %v1781
        %v1862 = vunpack.c.l.b16 %v1782
        %v1863 = vunpack.c.l.b16 %v1783
        %v1864 = vunpack.c.l.b16 %v1784
        %v1865 = vunpack.c.l.b16 %v1785
        %v1866 = vunpack.c.l.b16 %v1786
        %v1867 = vunpack.c.l.b16 %v1787
        %v1868 = vunpack.c.l.b16 %v1788
        %v1869 = vpack.c.b16 %v1854, %v1853
        %v1870 = vpack.c.b16 %v1856, %v1855
        %v1871 = vpack.c.b16 %v1858, %v1857
        %v1872 = vpack.c.b16 %v1860, %v1859
        %v1873 = vpack.c.b16 %v1862, %v1861
        %v1874 = vpack.c.b16 %v1864, %v1863
        %v1875 = vpack.c.b16 %v1866, %v1865
        %v1876 = vpack.c.b16 %v1868, %v1867
        %1885 = vmatprep.subr.bf16.mxu0 0
        %1886 = vmatpush1.bf16.msra.mxu0 %v1876
        %1887 = vmatprep.subr.bf16.mxu0 0
        %1888 = vmatpush1.bf16.msra.mxu0 %v1875
        %1889 = vmatprep.subr.bf16.mxu0 0
        %1890 = vmatpush1.bf16.msra.mxu0 %v1874
        %1891 = vmatprep.subr.bf16.mxu0 0
        %1892 = vmatpush1.bf16.msra.mxu0 %v1873
        %1893 = vmatprep.subr.bf16.mxu0 0
        %1894 = vmatpush1.bf16.msra.mxu0 %v1872
        %1895 = vmatprep.subr.bf16.mxu0 0
        %1896 = vmatpush1.bf16.msra.mxu0 %v1871
        %1897 = vmatprep.subr.bf16.mxu0 0
        %1898 = vmatpush1.bf16.msra.mxu0 %v1870
        %1899 = vmatprep.subr.bf16.mxu0 0
        %1900 = vmatpush1.bf16.msra.mxu0 %v1869
        %1901 = vmatprep.subr.bf16.mxu0 0
        %1902 = vmatpush2.bf16.msra.mxu0 0
        %1903 = vmatprep.subr.bf16.mxu0 0
        %1904 = vmatpush2.bf16.msra.mxu0 0
        %1905 = vmatprep.subr.bf16.mxu0 0
        %1906 = vmatpush2.bf16.msra.mxu0 0
        %1907 = vmatprep.subr.bf16.mxu0 0
        %1908 = vmatpush2.bf16.msra.mxu0 0
        %1909 = vmatprep.subr.bf16.mxu0 0
        %1910 = vmatpush2.bf16.msra.mxu0 0
        %1911 = vmatprep.subr.bf16.mxu0 0
        %1912 = vmatpush2.bf16.msra.mxu0 0
        %1913 = vmatprep.subr.bf16.mxu0 0
        %1914 = vmatpush2.bf16.msra.mxu0 0
        %1915 = vmatprep.subr.bf16.mxu0 0
        %1916 = vmatpush2.bf16.msra.mxu0 0
        %1917 = vmatprep.mubr.bf16.mxu0 0
        %1918 = vmatmul.mubr.bf16.gmra.mxu0 %v1821
        %v1919 = vpop.f32.mrf.mxu0
        %v1920 = vadd.f32 0.0, %v1919
        %v1921 = vpop.f32.mrf.mxu0
        %v1922 = vpop.f32.mrf.mxu0
        %v1923 = vadd.f32 0.0, %v1922
        %v1924 = vpop.f32.mrf.mxu0
        %1925 = vmatprep.mubr.bf16.mxu0 0
        %1926 = vmatmul.mubr.bf16.gmra.mxu0 %v1822
        %v1927 = vpop.f32.mrf.mxu0
        %v1928 = vadd.f32 0.0, %v1927
        %v1929 = vpop.f32.mrf.mxu0
        %v1930 = vpop.f32.mrf.mxu0
        %v1931 = vadd.f32 0.0, %v1930
        %v1932 = vpop.f32.mrf.mxu0
        %1933 = vmatprep.mubr.bf16.mxu0 0
        %1934 = vmatmul.mubr.bf16.gmra.mxu0 %v1823
        %v1935 = vpop.f32.mrf.mxu0
        %v1936 = vadd.f32 0.0, %v1935
        %v1937 = vpop.f32.mrf.mxu0
        %v1938 = vpop.f32.mrf.mxu0
        %v1939 = vadd.f32 0.0, %v1938
        %v1940 = vpop.f32.mrf.mxu0
        %1941 = vmatprep.mubr.bf16.mxu0 0
        %1942 = vmatmul.mubr.bf16.gmra.mxu0 %v1824
        %v1943 = vpop.f32.mrf.mxu0
        %v1944 = vadd.f32 0.0, %v1943
        %v1945 = vpop.f32.mrf.mxu0
        %v1946 = vpop.f32.mrf.mxu0
        %v1947 = vadd.f32 0.0, %v1946
        %v1948 = vpop.f32.mrf.mxu0
        %1949 = vmatprep.mubr.bf16.mxu0 0
        %1950 = vmatmul.mubr.bf16.gmra.mxu0 %v1825
        %v1951 = vpop.f32.mrf.mxu0
        %v1952 = vadd.f32 0.0, %v1951
        %v1953 = vpop.f32.mrf.mxu0
        %v1954 = vpop.f32.mrf.mxu0
        %v1955 = vadd.f32 0.0, %v1954
        %v1956 = vpop.f32.mrf.mxu0
        %1957 = vmatprep.mubr.bf16.mxu0 0
        %1958 = vmatmul.mubr.bf16.gmra.mxu0 %v1826
        %v1959 = vpop.f32.mrf.mxu0
        %v1960 = vadd.f32 0.0, %v1959
        %v1961 = vpop.f32.mrf.mxu0
        %v1962 = vpop.f32.mrf.mxu0
        %v1963 = vadd.f32 0.0, %v1962
        %v1964 = vpop.f32.mrf.mxu0
        %1965 = vmatprep.mubr.bf16.mxu0 0
        %1966 = vmatmul.mubr.bf16.gmra.mxu0 %v1827
        %v1967 = vpop.f32.mrf.mxu0
        %v1968 = vadd.f32 0.0, %v1967
        %v1969 = vpop.f32.mrf.mxu0
        %v1970 = vpop.f32.mrf.mxu0
        %v1971 = vadd.f32 0.0, %v1970
        %v1972 = vpop.f32.mrf.mxu0
        %1973 = vmatprep.mubr.bf16.mxu0 0
        %1974 = vmatmul.mubr.bf16.gmra.mxu0 %v1828
        %v1975 = vpop.f32.mrf.mxu0
        %v1976 = vadd.f32 0.0, %v1975
        %v1977 = vpop.f32.mrf.mxu0
        %v1978 = vpop.f32.mrf.mxu0
        %v1979 = vadd.f32 0.0, %v1978
        %v1980 = vpop.f32.mrf.mxu0
        %1981 = vdwg.mxu0
        %v1983 = vlaneseq
        %v1984 = vshrl.u32 %v1983, 7
        %v1985 = vsub.s32 0, %v1984
        %v1986 = vrot.slane %v1756, %v1985
        %v1988 = vadd.f32 %v1986, %v1920
        %v1989 = vadd.f32 %v1986, %v1923
        %v1990 = vadd.f32 %v1986, %v1928
        %v1991 = vadd.f32 %v1986, %v1931
        %v1992 = vadd.f32 %v1986, %v1936
        %v1993 = vadd.f32 %v1986, %v1939
        %v1994 = vadd.f32 %v1986, %v1944
        %v1995 = vadd.f32 %v1986, %v1947
        %v1996 = vadd.f32 %v1986, %v1952
        %v1997 = vadd.f32 %v1986, %v1955
        %v1998 = vadd.f32 %v1986, %v1960
        %v1999 = vadd.f32 %v1986, %v1963
        %v2000 = vadd.f32 %v1986, %v1968
        %v2001 = vadd.f32 %v1986, %v1971
        %v2002 = vadd.f32 %v1986, %v1976
        %v2003 = vadd.f32 %v1986, %v1979
        %v2004 = vld [vmem:[#allocation2] sm:$0xf]
        %v2005 = vld [vmem:[#allocation2 + $0x4] sm:$0xf]
        %v2006 = vld [vmem:[#allocation2 + $0x8] sm:$0x1]
        %v2007 = vld [vmem:[#allocation2 + $0xc] sm:$0xf]
        %v2008 = vld [vmem:[#allocation2 + $0x10] sm:$0xf]
        %v2009 = vld [vmem:[#allocation2 + $0x14] sm:$0x1]
        %v2010 = vld [vmem:[#allocation2 + $0x18] sm:$0xf]
        %v2011 = vld [vmem:[#allocation2 + $0x1c] sm:$0xf]
        %v2012 = vld [vmem:[#allocation2 + $0x20] sm:$0x1]
        %v2013 = vld [vmem:[#allocation2 + $0x24] sm:$0xf]
        %v2014 = vld [vmem:[#allocation2 + $0x28] sm:$0xf]
        %v2015 = vld [vmem:[#allocation2 + $0x2c] sm:$0x1]
        %v2016 = vld [vmem:[#allocation2 + $0x30] sm:$0xf]
        %v2017 = vld [vmem:[#allocation2 + $0x34] sm:$0xf]
        %v2018 = vld [vmem:[#allocation2 + $0x38] sm:$0x1]
        %v2019 = vld [vmem:[#allocation2 + $0x3c] sm:$0xf]
        %v2020 = vld [vmem:[#allocation2 + $0x40] sm:$0xf]
        %v2021 = vld [vmem:[#allocation2 + $0x44] sm:$0x1]
        %v2022 = vld [vmem:[#allocation2 + $0x48] sm:$0xf]
        %v2023 = vld [vmem:[#allocation2 + $0x4c] sm:$0xf]
        %v2024 = vld [vmem:[#allocation2 + $0x50] sm:$0x1]
        %v2025 = vld [vmem:[#allocation2 + $0x54] sm:$0xf]
        %v2026 = vld [vmem:[#allocation2 + $0x58] sm:$0xf]
        %v2027 = vld [vmem:[#allocation2 + $0x5c] sm:$0x1]
        %vm2028 = vsmask.f32 3328
        %vm2029 = vsmask.f32 7440
        %vm2030 = vmor %vm2028, %vm2029
        %v2032 = vshrl.u32 %v2004, 16
        %v2034 = vrot.slane %v2032, 4
        %v2035 = vshll.u32 %v2004, 16
        %v2037 = vrot.slane %v2035, 5
        %v2038 = vor.u32 %v2034, %v2037
        %v2039 = vrot.slane %v2038, 4
        %v2041 = vshll.u32 %v2005, 16
        %v2043 = vrot.slane %v2041, 5
        %v2044 = vsel %vm2030, %v2039, %v2043
        %v2045 = vshrl.u32 %v2005, 16
        %v2047 = vrot.slane %v2045, 4
        %v2048 = vor.u32 %v2047, %v2043
        %v2049 = vrot.slane %v2048, 4
        %v2051 = vshll.u32 %v2006, 16
        %v2053 = vrot.slane %v2051, 5
        %v2054 = vsel %vm2030, %v2049, %v2053
        %v2056 = vshrl.u32 %v2007, 16
        %v2058 = vrot.slane %v2056, 4
        %v2059 = vshll.u32 %v2007, 16
        %v2061 = vrot.slane %v2059, 5
        %v2062 = vor.u32 %v2058, %v2061
        %v2063 = vrot.slane %v2062, 4
        %v2065 = vshll.u32 %v2008, 16
        %v2067 = vrot.slane %v2065, 5
        %v2068 = vsel %vm2030, %v2063, %v2067
        %v2069 = vshrl.u32 %v2008, 16
        %v2071 = vrot.slane %v2069, 4
        %v2072 = vor.u32 %v2071, %v2067
        %v2073 = vrot.slane %v2072, 4
        %v2075 = vshll.u32 %v2009, 16
        %v2077 = vrot.slane %v2075, 5
        %v2078 = vsel %vm2030, %v2073, %v2077
        %v2080 = vshrl.u32 %v2010, 16
        %v2082 = vrot.slane %v2080, 4
        %v2083 = vshll.u32 %v2010, 16
        %v2085 = vrot.slane %v2083, 5
        %v2086 = vor.u32 %v2082, %v2085
        %v2087 = vrot.slane %v2086, 4
        %v2089 = vshll.u32 %v2011, 16
        %v2091 = vrot.slane %v2089, 5
        %v2092 = vsel %vm2030, %v2087, %v2091
        %v2093 = vshrl.u32 %v2011, 16
        %v2095 = vrot.slane %v2093, 4
        %v2096 = vor.u32 %v2095, %v2091
        %v2097 = vrot.slane %v2096, 4
        %v2099 = vshll.u32 %v2012, 16
        %v2101 = vrot.slane %v2099, 5
        %v2102 = vsel %vm2030, %v2097, %v2101
        %v2104 = vshrl.u32 %v2013, 16
        %v2106 = vrot.slane %v2104, 4
        %v2107 = vshll.u32 %v2013, 16
        %v2109 = vrot.slane %v2107, 5
        %v2110 = vor.u32 %v2106, %v2109
        %v2111 = vrot.slane %v2110, 4
        %v2113 = vshll.u32 %v2014, 16
        %v2115 = vrot.slane %v2113, 5
        %v2116 = vsel %vm2030, %v2111, %v2115
        %v2117 = vshrl.u32 %v2014, 16
        %v2119 = vrot.slane %v2117, 4
        %v2120 = vor.u32 %v2119, %v2115
        %v2121 = vrot.slane %v2120, 4
        %v2123 = vshll.u32 %v2015, 16
        %v2125 = vrot.slane %v2123, 5
        %v2126 = vsel %vm2030, %v2121, %v2125
        %v2128 = vshrl.u32 %v2016, 16
        %v2130 = vrot.slane %v2128, 4
        %v2131 = vshll.u32 %v2016, 16
        %v2133 = vrot.slane %v2131, 5
        %v2134 = vor.u32 %v2130, %v2133
        %v2135 = vrot.slane %v2134, 4
        %v2137 = vshll.u32 %v2017, 16
        %v2139 = vrot.slane %v2137, 5
        %v2140 = vsel %vm2030, %v2135, %v2139
        %v2141 = vshrl.u32 %v2017, 16
        %v2143 = vrot.slane %v2141, 4
        %v2144 = vor.u32 %v2143, %v2139
        %v2145 = vrot.slane %v2144, 4
        %v2147 = vshll.u32 %v2018, 16
        %v2149 = vrot.slane %v2147, 5
        %v2150 = vsel %vm2030, %v2145, %v2149
        %v2152 = vshrl.u32 %v2019, 16
        %v2154 = vrot.slane %v2152, 4
        %v2155 = vshll.u32 %v2019, 16
        %v2157 = vrot.slane %v2155, 5
        %v2158 = vor.u32 %v2154, %v2157
        %v2159 = vrot.slane %v2158, 4
        %v2161 = vshll.u32 %v2020, 16
        %v2163 = vrot.slane %v2161, 5
        %v2164 = vsel %vm2030, %v2159, %v2163
        %v2165 = vshrl.u32 %v2020, 16
        %v2167 = vrot.slane %v2165, 4
        %v2168 = vor.u32 %v2167, %v2163
        %v2169 = vrot.slane %v2168, 4
        %v2171 = vshll.u32 %v2021, 16
        %v2173 = vrot.slane %v2171, 5
        %v2174 = vsel %vm2030, %v2169, %v2173
        %v2176 = vshrl.u32 %v2022, 16
        %v2178 = vrot.slane %v2176, 4
        %v2179 = vshll.u32 %v2022, 16
        %v2181 = vrot.slane %v2179, 5
        %v2182 = vor.u32 %v2178, %v2181
        %v2183 = vrot.slane %v2182, 4
        %v2185 = vshll.u32 %v2023, 16
        %v2187 = vrot.slane %v2185, 5
        %v2188 = vsel %vm2030, %v2183, %v2187
        %v2189 = vshrl.u32 %v2023, 16
        %v2191 = vrot.slane %v2189, 4
        %v2192 = vor.u32 %v2191, %v2187
        %v2193 = vrot.slane %v2192, 4
        %v2195 = vshll.u32 %v2024, 16
        %v2197 = vrot.slane %v2195, 5
        %v2198 = vsel %vm2030, %v2193, %v2197
        %v2200 = vshrl.u32 %v2025, 16
        %v2202 = vrot.slane %v2200, 4
        %v2203 = vshll.u32 %v2025, 16
        %v2205 = vrot.slane %v2203, 5
        %v2206 = vor.u32 %v2202, %v2205
        %v2207 = vrot.slane %v2206, 4
        %v2209 = vshll.u32 %v2026, 16
        %v2211 = vrot.slane %v2209, 5
        %v2212 = vsel %vm2030, %v2207, %v2211
        %v2213 = vshrl.u32 %v2026, 16
        %v2215 = vrot.slane %v2213, 4
        %v2216 = vor.u32 %v2215, %v2211
        %v2217 = vrot.slane %v2216, 4
        %v2219 = vshll.u32 %v2027, 16
        %v2221 = vrot.slane %v2219, 5
        %v2222 = vsel %vm2030, %v2217, %v2221
        %s2223 = scalar_lea.vmem [#allocation12], 64
        %v2224 = vld [vmem:[%s2223] sm:$0xf]
        %v2225 = vld [vmem:[%s2223 + $0x4] sm:$0xf]
        %v2226 = vld [vmem:[%s2223 + $0x8] sm:$0xf]
        %v2227 = vld [vmem:[%s2223 + $0xc] sm:$0xf]
        %v2228 = vld [vmem:[%s2223 + $0x10] sm:$0xf]
        %v2229 = vld [vmem:[%s2223 + $0x14] sm:$0xf]
        %v2230 = vld [vmem:[%s2223 + $0x18] sm:$0xf]
        %v2231 = vld [vmem:[%s2223 + $0x1c] sm:$0xf]
        %v2232 = vld [vmem:[%s2223 + $0x20] sm:$0xf]
        %v2233 = vld [vmem:[%s2223 + $0x24] sm:$0xf]
        %v2234 = vld [vmem:[%s2223 + $0x28] sm:$0xf]
        %v2235 = vld [vmem:[%s2223 + $0x2c] sm:$0xf]
        %v2236 = vld [vmem:[%s2223 + $0x30] sm:$0xf]
        %v2237 = vld [vmem:[%s2223 + $0x34] sm:$0xf]
        %v2238 = vld [vmem:[%s2223 + $0x38] sm:$0xf]
        %v2239 = vld [vmem:[%s2223 + $0x3c] sm:$0xf]
        %v2240 = vunpack.c.l.b16 %v2044
        %v2241 = vunpack.c.l.b16 %v2054
        %v2242 = vunpack.c.l.b16 %v2068
        %v2243 = vunpack.c.l.b16 %v2078
        %v2244 = vunpack.c.l.b16 %v2092
        %v2245 = vunpack.c.l.b16 %v2102
        %v2246 = vunpack.c.l.b16 %v2116
        %v2247 = vunpack.c.l.b16 %v2126
        %v2248 = vunpack.c.l.b16 %v2140
        %v2249 = vunpack.c.l.b16 %v2150
        %v2250 = vunpack.c.l.b16 %v2164
        %v2251 = vunpack.c.l.b16 %v2174
        %v2252 = vunpack.c.l.b16 %v2188
        %v2253 = vunpack.c.l.b16 %v2198
        %v2254 = vunpack.c.l.b16 %v2212
        %v2255 = vunpack.c.l.b16 %v2222
        %v2256 = vpack.c.b16 %v2241, %v2240
        %v2257 = vpack.c.b16 %v2243, %v2242
        %v2258 = vpack.c.b16 %v2245, %v2244
        %v2259 = vpack.c.b16 %v2247, %v2246
        %v2260 = vpack.c.b16 %v2249, %v2248
        %v2261 = vpack.c.b16 %v2251, %v2250
        %v2262 = vpack.c.b16 %v2253, %v2252
        %v2263 = vpack.c.b16 %v2255, %v2254
        %v2288 = vunpack.c.l.b16 %v2224
        %v2289 = vunpack.c.l.b16 %v2225
        %v2290 = vunpack.c.l.b16 %v2226
        %v2291 = vunpack.c.l.b16 %v2227
        %v2292 = vunpack.c.l.b16 %v2228
        %v2293 = vunpack.c.l.b16 %v2229
        %v2294 = vunpack.c.l.b16 %v2230
        %v2295 = vunpack.c.l.b16 %v2231
        %v2296 = vunpack.c.l.b16 %v2232
        %v2297 = vunpack.c.l.b16 %v2233
        %v2298 = vunpack.c.l.b16 %v2234
        %v2299 = vunpack.c.l.b16 %v2235
        %v2300 = vunpack.c.l.b16 %v2236
        %v2301 = vunpack.c.l.b16 %v2237
        %v2302 = vunpack.c.l.b16 %v2238
        %v2303 = vunpack.c.l.b16 %v2239
        %v2304 = vpack.c.b16 %v2289, %v2288
        %v2305 = vpack.c.b16 %v2291, %v2290
        %v2306 = vpack.c.b16 %v2293, %v2292
        %v2307 = vpack.c.b16 %v2295, %v2294
        %v2308 = vpack.c.b16 %v2297, %v2296
        %v2309 = vpack.c.b16 %v2299, %v2298
        %v2310 = vpack.c.b16 %v2301, %v2300
        %v2311 = vpack.c.b16 %v2303, %v2302
        %2320 = vmatprep.subr.bf16.mxu0 0
        %2321 = vmatpush1.bf16.msra.mxu0 %v2311
        %2322 = vmatprep.subr.bf16.mxu0 0
        %2323 = vmatpush1.bf16.msra.mxu0 %v2310
        %2324 = vmatprep.subr.bf16.mxu0 0
        %2325 = vmatpush1.bf16.msra.mxu0 %v2309
        %2326 = vmatprep.subr.bf16.mxu0 0
        %2327 = vmatpush1.bf16.msra.mxu0 %v2308
        %2328 = vmatprep.subr.bf16.mxu0 0
        %2329 = vmatpush1.bf16.msra.mxu0 %v2307
        %2330 = vmatprep.subr.bf16.mxu0 0
        %2331 = vmatpush1.bf16.msra.mxu0 %v2306
        %2332 = vmatprep.subr.bf16.mxu0 0
        %2333 = vmatpush1.bf16.msra.mxu0 %v2305
        %2334 = vmatprep.subr.bf16.mxu0 0
        %2335 = vmatpush1.bf16.msra.mxu0 %v2304
        %2336 = vmatprep.subr.bf16.mxu0 0
        %2337 = vmatpush2.bf16.msra.mxu0 0
        %2338 = vmatprep.subr.bf16.mxu0 0
        %2339 = vmatpush2.bf16.msra.mxu0 0
        %2340 = vmatprep.subr.bf16.mxu0 0
        %2341 = vmatpush2.bf16.msra.mxu0 0
        %2342 = vmatprep.subr.bf16.mxu0 0
        %2343 = vmatpush2.bf16.msra.mxu0 0
        %2344 = vmatprep.subr.bf16.mxu0 0
        %2345 = vmatpush2.bf16.msra.mxu0 0
        %2346 = vmatprep.subr.bf16.mxu0 0
        %2347 = vmatpush2.bf16.msra.mxu0 0
        %2348 = vmatprep.subr.bf16.mxu0 0
        %2349 = vmatpush2.bf16.msra.mxu0 0
        %2350 = vmatprep.subr.bf16.mxu0 0
        %2351 = vmatpush2.bf16.msra.mxu0 0
        %2352 = vmatprep.mubr.bf16.mxu0 0
        %2353 = vmatmul.mubr.bf16.gmra.mxu0 %v2256
        %v2354 = vpop.f32.mrf.mxu0
        %v2355 = vadd.f32 0.0, %v2354
        %v2356 = vpop.f32.mrf.mxu0
        %v2357 = vpop.f32.mrf.mxu0
        %v2358 = vadd.f32 0.0, %v2357
        %v2359 = vpop.f32.mrf.mxu0
        %2360 = vmatprep.mubr.bf16.mxu0 0
        %2361 = vmatmul.mubr.bf16.gmra.mxu0 %v2257
        %v2362 = vpop.f32.mrf.mxu0
        %v2363 = vadd.f32 0.0, %v2362
        %v2364 = vpop.f32.mrf.mxu0
        %v2365 = vpop.f32.mrf.mxu0
        %v2366 = vadd.f32 0.0, %v2365
        %v2367 = vpop.f32.mrf.mxu0
        %2368 = vmatprep.mubr.bf16.mxu0 0
        %2369 = vmatmul.mubr.bf16.gmra.mxu0 %v2258
        %v2370 = vpop.f32.mrf.mxu0
        %v2371 = vadd.f32 0.0, %v2370
        %v2372 = vpop.f32.mrf.mxu0
        %v2373 = vpop.f32.mrf.mxu0
        %v2374 = vadd.f32 0.0, %v2373
        %v2375 = vpop.f32.mrf.mxu0
        %2376 = vmatprep.mubr.bf16.mxu0 0
        %2377 = vmatmul.mubr.bf16.gmra.mxu0 %v2259
        %v2378 = vpop.f32.mrf.mxu0
        %v2379 = vadd.f32 0.0, %v2378
        %v2380 = vpop.f32.mrf.mxu0
        %v2381 = vpop.f32.mrf.mxu0
        %v2382 = vadd.f32 0.0, %v2381
        %v2383 = vpop.f32.mrf.mxu0
        %2384 = vmatprep.mubr.bf16.mxu0 0
        %2385 = vmatmul.mubr.bf16.gmra.mxu0 %v2260
        %v2386 = vpop.f32.mrf.mxu0
        %v2387 = vadd.f32 0.0, %v2386
        %v2388 = vpop.f32.mrf.mxu0
        %v2389 = vpop.f32.mrf.mxu0
        %v2390 = vadd.f32 0.0, %v2389
        %v2391 = vpop.f32.mrf.mxu0
        %2392 = vmatprep.mubr.bf16.mxu0 0
        %2393 = vmatmul.mubr.bf16.gmra.mxu0 %v2261
        %v2394 = vpop.f32.mrf.mxu0
        %v2395 = vadd.f32 0.0, %v2394
        %v2396 = vpop.f32.mrf.mxu0
        %v2397 = vpop.f32.mrf.mxu0
        %v2398 = vadd.f32 0.0, %v2397
        %v2399 = vpop.f32.mrf.mxu0
        %2400 = vmatprep.mubr.bf16.mxu0 0
        %2401 = vmatmul.mubr.bf16.gmra.mxu0 %v2262
        %v2402 = vpop.f32.mrf.mxu0
        %v2403 = vadd.f32 0.0, %v2402
        %v2404 = vpop.f32.mrf.mxu0
        %v2405 = vpop.f32.mrf.mxu0
        %v2406 = vadd.f32 0.0, %v2405
        %v2407 = vpop.f32.mrf.mxu0
        %2408 = vmatprep.mubr.bf16.mxu0 0
        %2409 = vmatmul.mubr.bf16.gmra.mxu0 %v2263
        %v2410 = vpop.f32.mrf.mxu0
        %v2411 = vadd.f32 0.0, %v2410
        %v2412 = vpop.f32.mrf.mxu0
        %v2413 = vpop.f32.mrf.mxu0
        %v2414 = vadd.f32 0.0, %v2413
        %v2415 = vpop.f32.mrf.mxu0
        %2416 = vdwg.mxu0
        %v2417 = vadd.f32 %v1988, %v2355
        %v2418 = vadd.f32 %v1989, %v2358
        %v2419 = vadd.f32 %v1990, %v2363
        %v2420 = vadd.f32 %v1991, %v2366
        %v2421 = vadd.f32 %v1992, %v2371
        %v2422 = vadd.f32 %v1993, %v2374
        %v2423 = vadd.f32 %v1994, %v2379
        %v2424 = vadd.f32 %v1995, %v2382
        %v2425 = vadd.f32 %v1996, %v2387
        %v2426 = vadd.f32 %v1997, %v2390
        %v2427 = vadd.f32 %v1998, %v2395
        %v2428 = vadd.f32 %v1999, %v2398
        %v2429 = vadd.f32 %v2000, %v2403
        %v2430 = vadd.f32 %v2001, %v2406
        %v2431 = vadd.f32 %v2002, %v2411
        %v2432 = vadd.f32 %v2003, %v2414
        %v2433 = vld [vmem:[#allocation2] sm:$0xe]
        %v2434 = vld [vmem:[#allocation2 + $0xc] sm:$0xe]
        %v2435 = vld [vmem:[#allocation2 + $0x18] sm:$0xe]
        %v2436 = vld [vmem:[#allocation2 + $0x24] sm:$0xe]
        %v2437 = vld [vmem:[#allocation2 + $0x30] sm:$0xe]
        %v2438 = vld [vmem:[#allocation2 + $0x3c] sm:$0xe]
        %v2439 = vld [vmem:[#allocation2 + $0x48] sm:$0xe]
        %v2440 = vld [vmem:[#allocation2 + $0x54] sm:$0xe]
        %vm2465 = vcmask 1042432
        %vm2466 = vcmask 1046532
        %vm2467 = vmor %vm2465, %vm2466
        %v2468 = vrot.slane %v2433, 5
        %v2469 = vrot.slane %v2468, 4
        %v2470 = vrot.slane %v2005, 5
        %v2471 = vsel %vm2467, %v2469, %v2470
        %v2472 = vrot.slane %v2470, 4
        %v2473 = vrot.slane %v2006, 5
        %v2474 = vsel %vm2467, %v2472, %v2473
        %v2475 = vrot.slane %v2434, 5
        %v2476 = vrot.slane %v2475, 4
        %v2477 = vrot.slane %v2008, 5
        %v2478 = vsel %vm2467, %v2476, %v2477
        %v2479 = vrot.slane %v2477, 4
        %v2480 = vrot.slane %v2009, 5
        %v2481 = vsel %vm2467, %v2479, %v2480
        %v2482 = vrot.slane %v2435, 5
        %v2483 = vrot.slane %v2482, 4
        %v2484 = vrot.slane %v2011, 5
        %v2485 = vsel %vm2467, %v2483, %v2484
        %v2486 = vrot.slane %v2484, 4
        %v2487 = vrot.slane %v2012, 5
        %v2488 = vsel %vm2467, %v2486, %v2487
        %v2489 = vrot.slane %v2436, 5
        %v2490 = vrot.slane %v2489, 4
        %v2491 = vrot.slane %v2014, 5
        %v2492 = vsel %vm2467, %v2490, %v2491
        %v2493 = vrot.slane %v2491, 4
        %v2494 = vrot.slane %v2015, 5
        %v2495 = vsel %vm2467, %v2493, %v2494
        %v2496 = vrot.slane %v2437, 5
        %v2497 = vrot.slane %v2496, 4
        %v2498 = vrot.slane %v2017, 5
        %v2499 = vsel %vm2467, %v2497, %v2498
        %v2500 = vrot.slane %v2498, 4
        %v2501 = vrot.slane %v2018, 5
        %v2502 = vsel %vm2467, %v2500, %v2501
        %v2503 = vrot.slane %v2438, 5
        %v2504 = vrot.slane %v2503, 4
        %v2505 = vrot.slane %v2020, 5
        %v2506 = vsel %vm2467, %v2504, %v2505
        %v2507 = vrot.slane %v2505, 4
        %v2508 = vrot.slane %v2021, 5
        %v2509 = vsel %vm2467, %v2507, %v2508
        %v2510 = vrot.slane %v2439, 5
        %v2511 = vrot.slane %v2510, 4
        %v2512 = vrot.slane %v2023, 5
        %v2513 = vsel %vm2467, %v2511, %v2512
        %v2514 = vrot.slane %v2512, 4
        %v2515 = vrot.slane %v2024, 5
        %v2516 = vsel %vm2467, %v2514, %v2515
        %v2517 = vrot.slane %v2440, 5
        %v2518 = vrot.slane %v2517, 4
        %v2519 = vrot.slane %v2026, 5
        %v2520 = vsel %vm2467, %v2518, %v2519
        %v2521 = vrot.slane %v2519, 4
        %v2522 = vrot.slane %v2027, 5
        %v2523 = vsel %vm2467, %v2521, %v2522
        %s2524 = scalar_lea.vmem [#allocation12], 128
        %v2525 = vld [vmem:[%s2524] sm:$0xf]
        %v2526 = vld [vmem:[%s2524 + $0x4] sm:$0xf]
        %v2527 = vld [vmem:[%s2524 + $0x8] sm:$0xf]
        %v2528 = vld [vmem:[%s2524 + $0xc] sm:$0xf]
        %v2529 = vld [vmem:[%s2524 + $0x10] sm:$0xf]
        %v2530 = vld [vmem:[%s2524 + $0x14] sm:$0xf]
        %v2531 = vld [vmem:[%s2524 + $0x18] sm:$0xf]
        %v2532 = vld [vmem:[%s2524 + $0x1c] sm:$0xf]
        %v2533 = vld [vmem:[%s2524 + $0x20] sm:$0xf]
        %v2534 = vld [vmem:[%s2524 + $0x24] sm:$0xf]
        %v2535 = vld [vmem:[%s2524 + $0x28] sm:$0xf]
        %v2536 = vld [vmem:[%s2524 + $0x2c] sm:$0xf]
        %v2537 = vld [vmem:[%s2524 + $0x30] sm:$0xf]
        %v2538 = vld [vmem:[%s2524 + $0x34] sm:$0xf]
        %v2539 = vld [vmem:[%s2524 + $0x38] sm:$0xf]
        %v2540 = vld [vmem:[%s2524 + $0x3c] sm:$0xf]
        %v2541 = vunpack.c.l.b16 %v2471
        %v2542 = vunpack.c.l.b16 %v2474
        %v2543 = vunpack.c.l.b16 %v2478
        %v2544 = vunpack.c.l.b16 %v2481
        %v2545 = vunpack.c.l.b16 %v2485
        %v2546 = vunpack.c.l.b16 %v2488
        %v2547 = vunpack.c.l.b16 %v2492
        %v2548 = vunpack.c.l.b16 %v2495
        %v2549 = vunpack.c.l.b16 %v2499
        %v2550 = vunpack.c.l.b16 %v2502
        %v2551 = vunpack.c.l.b16 %v2506
        %v2552 = vunpack.c.l.b16 %v2509
        %v2553 = vunpack.c.l.b16 %v2513
        %v2554 = vunpack.c.l.b16 %v2516
        %v2555 = vunpack.c.l.b16 %v2520
        %v2556 = vunpack.c.l.b16 %v2523
        %v2557 = vpack.c.b16 %v2542, %v2541
        %v2558 = vpack.c.b16 %v2544, %v2543
        %v2559 = vpack.c.b16 %v2546, %v2545
        %v2560 = vpack.c.b16 %v2548, %v2547
        %v2561 = vpack.c.b16 %v2550, %v2549
        %v2562 = vpack.c.b16 %v2552, %v2551
        %v2563 = vpack.c.b16 %v2554, %v2553
        %v2564 = vpack.c.b16 %v2556, %v2555
        %v2589 = vunpack.c.l.b16 %v2525
        %v2590 = vunpack.c.l.b16 %v2526
        %v2591 = vunpack.c.l.b16 %v2527
        %v2592 = vunpack.c.l.b16 %v2528
        %v2593 = vunpack.c.l.b16 %v2529
        %v2594 = vunpack.c.l.b16 %v2530
        %v2595 = vunpack.c.l.b16 %v2531
        %v2596 = vunpack.c.l.b16 %v2532
        %v2597 = vunpack.c.l.b16 %v2533
        %v2598 = vunpack.c.l.b16 %v2534
        %v2599 = vunpack.c.l.b16 %v2535
        %v2600 = vunpack.c.l.b16 %v2536
        %v2601 = vunpack.c.l.b16 %v2537
        %v2602 = vunpack.c.l.b16 %v2538
        %v2603 = vunpack.c.l.b16 %v2539
        %v2604 = vunpack.c.l.b16 %v2540
        %v2605 = vpack.c.b16 %v2590, %v2589
        %v2606 = vpack.c.b16 %v2592, %v2591
        %v2607 = vpack.c.b16 %v2594, %v2593
        %v2608 = vpack.c.b16 %v2596, %v2595
        %v2609 = vpack.c.b16 %v2598, %v2597
        %v2610 = vpack.c.b16 %v2600, %v2599
        %v2611 = vpack.c.b16 %v2602, %v2601
        %v2612 = vpack.c.b16 %v2604, %v2603
        %2621 = vmatprep.subr.bf16.mxu0 0
        %2622 = vmatpush1.bf16.msra.mxu0 %v2612
        %2623 = vmatprep.subr.bf16.mxu0 0
        %2624 = vmatpush1.bf16.msra.mxu0 %v2611
        %2625 = vmatprep.subr.bf16.mxu0 0
        %2626 = vmatpush1.bf16.msra.mxu0 %v2610
        %2627 = vmatprep.subr.bf16.mxu0 0
        %2628 = vmatpush1.bf16.msra.mxu0 %v2609
        %2629 = vmatprep.subr.bf16.mxu0 0
        %2630 = vmatpush1.bf16.msra.mxu0 %v2608
        %2631 = vmatprep.subr.bf16.mxu0 0
        %2632 = vmatpush1.bf16.msra.mxu0 %v2607
        %2633 = vmatprep.subr.bf16.mxu0 0
        %2634 = vmatpush1.bf16.msra.mxu0 %v2606
        %2635 = vmatprep.subr.bf16.mxu0 0
        %2636 = vmatpush1.bf16.msra.mxu0 %v2605
        %2637 = vmatprep.subr.bf16.mxu0 0
        %2638 = vmatpush2.bf16.msra.mxu0 0
        %2639 = vmatprep.subr.bf16.mxu0 0
        %2640 = vmatpush2.bf16.msra.mxu0 0
        %2641 = vmatprep.subr.bf16.mxu0 0
        %2642 = vmatpush2.bf16.msra.mxu0 0
        %2643 = vmatprep.subr.bf16.mxu0 0
        %2644 = vmatpush2.bf16.msra.mxu0 0
        %2645 = vmatprep.subr.bf16.mxu0 0
        %2646 = vmatpush2.bf16.msra.mxu0 0
        %2647 = vmatprep.subr.bf16.mxu0 0
        %2648 = vmatpush2.bf16.msra.mxu0 0
        %2649 = vmatprep.subr.bf16.mxu0 0
        %2650 = vmatpush2.bf16.msra.mxu0 0
        %2651 = vmatprep.subr.bf16.mxu0 0
        %2652 = vmatpush2.bf16.msra.mxu0 0
        %2653 = vmatprep.mubr.bf16.mxu0 0
        %2654 = vmatmul.mubr.bf16.gmra.mxu0 %v2557
        %v2655 = vpop.f32.mrf.mxu0
        %v2656 = vadd.f32 0.0, %v2655
        %v2657 = vpop.f32.mrf.mxu0
        %v2658 = vpop.f32.mrf.mxu0
        %v2659 = vadd.f32 0.0, %v2658
        %v2660 = vpop.f32.mrf.mxu0
        %2661 = vmatprep.mubr.bf16.mxu0 0
        %2662 = vmatmul.mubr.bf16.gmra.mxu0 %v2558
        %v2663 = vpop.f32.mrf.mxu0
        %v2664 = vadd.f32 0.0, %v2663
        %v2665 = vpop.f32.mrf.mxu0
        %v2666 = vpop.f32.mrf.mxu0
        %v2667 = vadd.f32 0.0, %v2666
        %v2668 = vpop.f32.mrf.mxu0
        %2669 = vmatprep.mubr.bf16.mxu0 0
        %2670 = vmatmul.mubr.bf16.gmra.mxu0 %v2559
        %v2671 = vpop.f32.mrf.mxu0
        %v2672 = vadd.f32 0.0, %v2671
        %v2673 = vpop.f32.mrf.mxu0
        %v2674 = vpop.f32.mrf.mxu0
        %v2675 = vadd.f32 0.0, %v2674
        %v2676 = vpop.f32.mrf.mxu0
        %2677 = vmatprep.mubr.bf16.mxu0 0
        %2678 = vmatmul.mubr.bf16.gmra.mxu0 %v2560
        %v2679 = vpop.f32.mrf.mxu0
        %v2680 = vadd.f32 0.0, %v2679
        %v2681 = vpop.f32.mrf.mxu0
        %v2682 = vpop.f32.mrf.mxu0
        %v2683 = vadd.f32 0.0, %v2682
        %v2684 = vpop.f32.mrf.mxu0
        %2685 = vmatprep.mubr.bf16.mxu0 0
        %2686 = vmatmul.mubr.bf16.gmra.mxu0 %v2561
        %v2687 = vpop.f32.mrf.mxu0
        %v2688 = vadd.f32 0.0, %v2687
        %v2689 = vpop.f32.mrf.mxu0
        %v2690 = vpop.f32.mrf.mxu0
        %v2691 = vadd.f32 0.0, %v2690
        %v2692 = vpop.f32.mrf.mxu0
        %2693 = vmatprep.mubr.bf16.mxu0 0
        %2694 = vmatmul.mubr.bf16.gmra.mxu0 %v2562
        %v2695 = vpop.f32.mrf.mxu0
        %v2696 = vadd.f32 0.0, %v2695
        %v2697 = vpop.f32.mrf.mxu0
        %v2698 = vpop.f32.mrf.mxu0
        %v2699 = vadd.f32 0.0, %v2698
        %v2700 = vpop.f32.mrf.mxu0
        %2701 = vmatprep.mubr.bf16.mxu0 0
        %2702 = vmatmul.mubr.bf16.gmra.mxu0 %v2563
        %v2703 = vpop.f32.mrf.mxu0
        %v2704 = vadd.f32 0.0, %v2703
        %v2705 = vpop.f32.mrf.mxu0
        %v2706 = vpop.f32.mrf.mxu0
        %v2707 = vadd.f32 0.0, %v2706
        %v2708 = vpop.f32.mrf.mxu0
        %2709 = vmatprep.mubr.bf16.mxu0 0
        %2710 = vmatmul.mubr.bf16.gmra.mxu0 %v2564
        %v2711 = vpop.f32.mrf.mxu0
        %v2712 = vadd.f32 0.0, %v2711
        %v2713 = vpop.f32.mrf.mxu0
        %v2714 = vpop.f32.mrf.mxu0
        %v2715 = vadd.f32 0.0, %v2714
        %v2716 = vpop.f32.mrf.mxu0
        %2717 = vdwg.mxu0
        %v2718 = vadd.f32 %v2417, %v2656
        %v2719 = vadd.f32 %v2418, %v2659
        %v2720 = vadd.f32 %v2419, %v2664
        %v2721 = vadd.f32 %v2420, %v2667
        %v2722 = vadd.f32 %v2421, %v2672
        %v2723 = vadd.f32 %v2422, %v2675
        %v2724 = vadd.f32 %v2423, %v2680
        %v2725 = vadd.f32 %v2424, %v2683
        %v2726 = vadd.f32 %v2425, %v2688
        %v2727 = vadd.f32 %v2426, %v2691
        %v2728 = vadd.f32 %v2427, %v2696
        %v2729 = vadd.f32 %v2428, %v2699
        %v2730 = vadd.f32 %v2429, %v2704
        %v2731 = vadd.f32 %v2430, %v2707
        %v2732 = vadd.f32 %v2431, %v2712
        %v2733 = vadd.f32 %v2432, %v2715
        %v2734 = vld [vmem:[%s1638] sm:$0xf]
        %v2735 = vld [vmem:[%s1638 + $0x4] sm:$0xf]
        %v2736 = vld [vmem:[%s1638 + $0xc] sm:$0xf]
        %v2737 = vld [vmem:[%s1638 + $0x10] sm:$0xf]
        %v2738 = vld [vmem:[%s1638 + $0x18] sm:$0xf]
        %v2739 = vld [vmem:[%s1638 + $0x1c] sm:$0xf]
        %v2740 = vld [vmem:[%s1638 + $0x24] sm:$0xf]
        %v2741 = vld [vmem:[%s1638 + $0x28] sm:$0xf]
        %v2742 = vld [vmem:[%s1638 + $0x30] sm:$0xf]
        %v2743 = vld [vmem:[%s1638 + $0x34] sm:$0xf]
        %v2744 = vld [vmem:[%s1638 + $0x3c] sm:$0xf]
        %v2745 = vld [vmem:[%s1638 + $0x40] sm:$0xf]
        %v2746 = vld [vmem:[%s1638 + $0x48] sm:$0xf]
        %v2747 = vld [vmem:[%s1638 + $0x4c] sm:$0xf]
        %v2748 = vld [vmem:[%s1638 + $0x54] sm:$0xf]
        %v2749 = vld [vmem:[%s1638 + $0x58] sm:$0xf]
        %s2750 = scalar_lea.vmem [#allocation12], 192
        %v2751 = vld [vmem:[%s2750] sm:$0xf]
        %v2752 = vld [vmem:[%s2750 + $0x4] sm:$0xf]
        %v2753 = vld [vmem:[%s2750 + $0x8] sm:$0xf]
        %v2754 = vld [vmem:[%s2750 + $0xc] sm:$0xf]
        %v2755 = vld [vmem:[%s2750 + $0x10] sm:$0xf]
        %v2756 = vld [vmem:[%s2750 + $0x14] sm:$0xf]
        %v2757 = vld [vmem:[%s2750 + $0x18] sm:$0xf]
        %v2758 = vld [vmem:[%s2750 + $0x1c] sm:$0xf]
        %v2759 = vld [vmem:[%s2750 + $0x20] sm:$0xf]
        %v2760 = vld [vmem:[%s2750 + $0x24] sm:$0xf]
        %v2761 = vld [vmem:[%s2750 + $0x28] sm:$0xf]
        %v2762 = vld [vmem:[%s2750 + $0x2c] sm:$0xf]
        %v2763 = vld [vmem:[%s2750 + $0x30] sm:$0xf]
        %v2764 = vld [vmem:[%s2750 + $0x34] sm:$0xf]
        %v2765 = vld [vmem:[%s2750 + $0x38] sm:$0xf]
        %v2766 = vld [vmem:[%s2750 + $0x3c] sm:$0xf]
        %v2783 = vunpack.c.l.b16 %v2734
        %v2784 = vunpack.c.l.b16 %v2735
        %v2785 = vunpack.c.l.b16 %v2736
        %v2786 = vunpack.c.l.b16 %v2737
        %v2787 = vunpack.c.l.b16 %v2738
        %v2788 = vunpack.c.l.b16 %v2739
        %v2789 = vunpack.c.l.b16 %v2740
        %v2790 = vunpack.c.l.b16 %v2741
        %v2791 = vunpack.c.l.b16 %v2742
        %v2792 = vunpack.c.l.b16 %v2743
        %v2793 = vunpack.c.l.b16 %v2744
        %v2794 = vunpack.c.l.b16 %v2745
        %v2795 = vunpack.c.l.b16 %v2746
        %v2796 = vunpack.c.l.b16 %v2747
        %v2797 = vunpack.c.l.b16 %v2748
        %v2798 = vunpack.c.l.b16 %v2749
        %v2799 = vpack.c.b16 %v2784, %v2783
        %v2800 = vpack.c.b16 %v2786, %v2785
        %v2801 = vpack.c.b16 %v2788, %v2787
        %v2802 = vpack.c.b16 %v2790, %v2789
        %v2803 = vpack.c.b16 %v2792, %v2791
        %v2804 = vpack.c.b16 %v2794, %v2793
        %v2805 = vpack.c.b16 %v2796, %v2795
        %v2806 = vpack.c.b16 %v2798, %v2797
        %v2831 = vunpack.c.l.b16 %v2751
        %v2832 = vunpack.c.l.b16 %v2752
        %v2833 = vunpack.c.l.b16 %v2753
        %v2834 = vunpack.c.l.b16 %v2754
        %v2835 = vunpack.c.l.b16 %v2755
        %v2836 = vunpack.c.l.b16 %v2756
        %v2837 = vunpack.c.l.b16 %v2757
        %v2838 = vunpack.c.l.b16 %v2758
        %v2839 = vunpack.c.l.b16 %v2759
        %v2840 = vunpack.c.l.b16 %v2760
        %v2841 = vunpack.c.l.b16 %v2761
        %v2842 = vunpack.c.l.b16 %v2762
        %v2843 = vunpack.c.l.b16 %v2763
        %v2844 = vunpack.c.l.b16 %v2764
        %v2845 = vunpack.c.l.b16 %v2765
        %v2846 = vunpack.c.l.b16 %v2766
        %v2847 = vpack.c.b16 %v2832, %v2831
        %v2848 = vpack.c.b16 %v2834, %v2833
        %v2849 = vpack.c.b16 %v2836, %v2835
        %v2850 = vpack.c.b16 %v2838, %v2837
        %v2851 = vpack.c.b16 %v2840, %v2839
        %v2852 = vpack.c.b16 %v2842, %v2841
        %v2853 = vpack.c.b16 %v2844, %v2843
        %v2854 = vpack.c.b16 %v2846, %v2845
        %2863 = vmatprep.subr.bf16.mxu0 0
        %2864 = vmatpush1.bf16.msra.mxu0 %v2854
        %2865 = vmatprep.subr.bf16.mxu0 0
        %2866 = vmatpush1.bf16.msra.mxu0 %v2853
        %2867 = vmatprep.subr.bf16.mxu0 0
        %2868 = vmatpush1.bf16.msra.mxu0 %v2852
        %2869 = vmatprep.subr.bf16.mxu0 0
        %2870 = vmatpush1.bf16.msra.mxu0 %v2851
        %2871 = vmatprep.subr.bf16.mxu0 0
        %2872 = vmatpush1.bf16.msra.mxu0 %v2850
        %2873 = vmatprep.subr.bf16.mxu0 0
        %2874 = vmatpush1.bf16.msra.mxu0 %v2849
        %2875 = vmatprep.subr.bf16.mxu0 0
        %2876 = vmatpush1.bf16.msra.mxu0 %v2848
        %2877 = vmatprep.subr.bf16.mxu0 0
        %2878 = vmatpush1.bf16.msra.mxu0 %v2847
        %2879 = vmatprep.subr.bf16.mxu0 0
        %2880 = vmatpush2.bf16.msra.mxu0 0
        %2881 = vmatprep.subr.bf16.mxu0 0
        %2882 = vmatpush2.bf16.msra.mxu0 0
        %2883 = vmatprep.subr.bf16.mxu0 0
        %2884 = vmatpush2.bf16.msra.mxu0 0
        %2885 = vmatprep.subr.bf16.mxu0 0
        %2886 = vmatpush2.bf16.msra.mxu0 0
        %2887 = vmatprep.subr.bf16.mxu0 0
        %2888 = vmatpush2.bf16.msra.mxu0 0
        %2889 = vmatprep.subr.bf16.mxu0 0
        %2890 = vmatpush2.bf16.msra.mxu0 0
        %2891 = vmatprep.subr.bf16.mxu0 0
        %2892 = vmatpush2.bf16.msra.mxu0 0
        %2893 = vmatprep.subr.bf16.mxu0 0
        %2894 = vmatpush2.bf16.msra.mxu0 0
        %2895 = vmatprep.mubr.bf16.mxu0 0
        %2896 = vmatmul.mubr.bf16.gmra.mxu0 %v2799
        %v2897 = vpop.f32.mrf.mxu0
        %v2898 = vadd.f32 0.0, %v2897
        %v2899 = vpop.f32.mrf.mxu0
        %v2900 = vpop.f32.mrf.mxu0
        %v2901 = vadd.f32 0.0, %v2900
        %v2902 = vpop.f32.mrf.mxu0
        %2903 = vmatprep.mubr.bf16.mxu0 0
        %2904 = vmatmul.mubr.bf16.gmra.mxu0 %v2800
        %v2905 = vpop.f32.mrf.mxu0
        %v2906 = vadd.f32 0.0, %v2905
        %v2907 = vpop.f32.mrf.mxu0
        %v2908 = vpop.f32.mrf.mxu0
        %v2909 = vadd.f32 0.0, %v2908
        %v2910 = vpop.f32.mrf.mxu0
        %2911 = vmatprep.mubr.bf16.mxu0 0
        %2912 = vmatmul.mubr.bf16.gmra.mxu0 %v2801
        %v2913 = vpop.f32.mrf.mxu0
        %v2914 = vadd.f32 0.0, %v2913
        %v2915 = vpop.f32.mrf.mxu0
        %v2916 = vpop.f32.mrf.mxu0
        %v2917 = vadd.f32 0.0, %v2916
        %v2918 = vpop.f32.mrf.mxu0
        %2919 = vmatprep.mubr.bf16.mxu0 0
        %2920 = vmatmul.mubr.bf16.gmra.mxu0 %v2802
        %v2921 = vpop.f32.mrf.mxu0
        %v2922 = vadd.f32 0.0, %v2921
        %v2923 = vpop.f32.mrf.mxu0
        %v2924 = vpop.f32.mrf.mxu0
        %v2925 = vadd.f32 0.0, %v2924
        %v2926 = vpop.f32.mrf.mxu0
        %2927 = vmatprep.mubr.bf16.mxu0 0
        %2928 = vmatmul.mubr.bf16.gmra.mxu0 %v2803
        %v2929 = vpop.f32.mrf.mxu0
        %v2930 = vadd.f32 0.0, %v2929
        %v2931 = vpop.f32.mrf.mxu0
        %v2932 = vpop.f32.mrf.mxu0
        %v2933 = vadd.f32 0.0, %v2932
        %v2934 = vpop.f32.mrf.mxu0
        %2935 = vmatprep.mubr.bf16.mxu0 0
        %2936 = vmatmul.mubr.bf16.gmra.mxu0 %v2804
        %v2937 = vpop.f32.mrf.mxu0
        %v2938 = vadd.f32 0.0, %v2937
        %v2939 = vpop.f32.mrf.mxu0
        %v2940 = vpop.f32.mrf.mxu0
        %v2941 = vadd.f32 0.0, %v2940
        %v2942 = vpop.f32.mrf.mxu0
        %2943 = vmatprep.mubr.bf16.mxu0 0
        %2944 = vmatmul.mubr.bf16.gmra.mxu0 %v2805
        %v2945 = vpop.f32.mrf.mxu0
        %v2946 = vadd.f32 0.0, %v2945
        %v2947 = vpop.f32.mrf.mxu0
        %v2948 = vpop.f32.mrf.mxu0
        %v2949 = vadd.f32 0.0, %v2948
        %v2950 = vpop.f32.mrf.mxu0
        %2951 = vmatprep.mubr.bf16.mxu0 0
        %2952 = vmatmul.mubr.bf16.gmra.mxu0 %v2806
        %v2953 = vpop.f32.mrf.mxu0
        %v2954 = vadd.f32 0.0, %v2953
        %v2955 = vpop.f32.mrf.mxu0
        %v2956 = vpop.f32.mrf.mxu0
        %v2957 = vadd.f32 0.0, %v2956
        %v2958 = vpop.f32.mrf.mxu0
        %2959 = vdwg.mxu0
        %v2960 = vadd.f32 %v2718, %v2898
        %v2961 = vadd.f32 %v2719, %v2901
        %v2962 = vadd.f32 %v2720, %v2906
        %v2963 = vadd.f32 %v2721, %v2909
        %v2964 = vadd.f32 %v2722, %v2914
        %v2965 = vadd.f32 %v2723, %v2917
        %v2966 = vadd.f32 %v2724, %v2922
        %v2967 = vadd.f32 %v2725, %v2925
        %v2968 = vadd.f32 %v2726, %v2930
        %v2969 = vadd.f32 %v2727, %v2933
        %v2970 = vadd.f32 %v2728, %v2938
        %v2971 = vadd.f32 %v2729, %v2941
        %v2972 = vadd.f32 %v2730, %v2946
        %v2973 = vadd.f32 %v2731, %v2949
        %v2974 = vadd.f32 %v2732, %v2954
        %v2975 = vadd.f32 %v2733, %v2957
        %v2976 = vld [vmem:[%s1638] sm:$0xf]
        %v2977 = vld [vmem:[%s1638 + $0x4] sm:$0xf]
        %v2978 = vld [vmem:[%s1638 + $0x8] sm:$0x1]
        %v2979 = vld [vmem:[%s1638 + $0xc] sm:$0xf]
        %v2980 = vld [vmem:[%s1638 + $0x10] sm:$0xf]
        %v2981 = vld [vmem:[%s1638 + $0x14] sm:$0x1]
        %v2982 = vld [vmem:[%s1638 + $0x18] sm:$0xf]
        %v2983 = vld [vmem:[%s1638 + $0x1c] sm:$0xf]
        %v2984 = vld [vmem:[%s1638 + $0x20] sm:$0x1]
        %v2985 = vld [vmem:[%s1638 + $0x24] sm:$0xf]
        %v2986 = vld [vmem:[%s1638 + $0x28] sm:$0xf]
        %v2987 = vld [vmem:[%s1638 + $0x2c] sm:$0x1]
        %v2988 = vld [vmem:[%s1638 + $0x30] sm:$0xf]
        %v2989 = vld [vmem:[%s1638 + $0x34] sm:$0xf]
        %v2990 = vld [vmem:[%s1638 + $0x38] sm:$0x1]
        %v2991 = vld [vmem:[%s1638 + $0x3c] sm:$0xf]
        %v2992 = vld [vmem:[%s1638 + $0x40] sm:$0xf]
        %v2993 = vld [vmem:[%s1638 + $0x44] sm:$0x1]
        %v2994 = vld [vmem:[%s1638 + $0x48] sm:$0xf]
        %v2995 = vld [vmem:[%s1638 + $0x4c] sm:$0xf]
        %v2996 = vld [vmem:[%s1638 + $0x50] sm:$0x1]
        %v2997 = vld [vmem:[%s1638 + $0x54] sm:$0xf]
        %v2998 = vld [vmem:[%s1638 + $0x58] sm:$0xf]
        %v2999 = vld [vmem:[%s1638 + $0x5c] sm:$0x1]
        %v3001 = vshrl.u32 %v2976, 16
        %v3003 = vrot.slane %v3001, 4
        %v3004 = vshll.u32 %v2976, 16
        %v3006 = vrot.slane %v3004, 5
        %v3007 = vor.u32 %v3003, %v3006
        %v3008 = vrot.slane %v3007, 4
        %v3010 = vshll.u32 %v2977, 16
        %v3012 = vrot.slane %v3010, 5
        %v3013 = vsel %vm2030, %v3008, %v3012
        %v3014 = vshrl.u32 %v2977, 16
        %v3016 = vrot.slane %v3014, 4
        %v3017 = vor.u32 %v3016, %v3012
        %v3018 = vrot.slane %v3017, 4
        %v3020 = vshll.u32 %v2978, 16
        %v3022 = vrot.slane %v3020, 5
        %v3023 = vsel %vm2030, %v3018, %v3022
        %v3025 = vshrl.u32 %v2979, 16
        %v3027 = vrot.slane %v3025, 4
        %v3028 = vshll.u32 %v2979, 16
        %v3030 = vrot.slane %v3028, 5
        %v3031 = vor.u32 %v3027, %v3030
        %v3032 = vrot.slane %v3031, 4
        %v3034 = vshll.u32 %v2980, 16
        %v3036 = vrot.slane %v3034, 5
        %v3037 = vsel %vm2030, %v3032, %v3036
        %v3038 = vshrl.u32 %v2980, 16
        %v3040 = vrot.slane %v3038, 4
        %v3041 = vor.u32 %v3040, %v3036
        %v3042 = vrot.slane %v3041, 4
        %v3044 = vshll.u32 %v2981, 16
        %v3046 = vrot.slane %v3044, 5
        %v3047 = vsel %vm2030, %v3042, %v3046
        %v3049 = vshrl.u32 %v2982, 16
        %v3051 = vrot.slane %v3049, 4
        %v3052 = vshll.u32 %v2982, 16
        %v3054 = vrot.slane %v3052, 5
        %v3055 = vor.u32 %v3051, %v3054
        %v3056 = vrot.slane %v3055, 4
        %v3058 = vshll.u32 %v2983, 16
        %v3060 = vrot.slane %v3058, 5
        %v3061 = vsel %vm2030, %v3056, %v3060
        %v3062 = vshrl.u32 %v2983, 16
        %v3064 = vrot.slane %v3062, 4
        %v3065 = vor.u32 %v3064, %v3060
        %v3066 = vrot.slane %v3065, 4
        %v3068 = vshll.u32 %v2984, 16
        %v3070 = vrot.slane %v3068, 5
        %v3071 = vsel %vm2030, %v3066, %v3070
        %v3073 = vshrl.u32 %v2985, 16
        %v3075 = vrot.slane %v3073, 4
        %v3076 = vshll.u32 %v2985, 16
        %v3078 = vrot.slane %v3076, 5
        %v3079 = vor.u32 %v3075, %v3078
        %v3080 = vrot.slane %v3079, 4
        %v3082 = vshll.u32 %v2986, 16
        %v3084 = vrot.slane %v3082, 5
        %v3085 = vsel %vm2030, %v3080, %v3084
        %v3086 = vshrl.u32 %v2986, 16
        %v3088 = vrot.slane %v3086, 4
        %v3089 = vor.u32 %v3088, %v3084
        %v3090 = vrot.slane %v3089, 4
        %v3092 = vshll.u32 %v2987, 16
        %v3094 = vrot.slane %v3092, 5
        %v3095 = vsel %vm2030, %v3090, %v3094
        %v3097 = vshrl.u32 %v2988, 16
        %v3099 = vrot.slane %v3097, 4
        %v3100 = vshll.u32 %v2988, 16
        %v3102 = vrot.slane %v3100, 5
        %v3103 = vor.u32 %v3099, %v3102
        %v3104 = vrot.slane %v3103, 4
        %v3106 = vshll.u32 %v2989, 16
        %v3108 = vrot.slane %v3106, 5
        %v3109 = vsel %vm2030, %v3104, %v3108
        %v3110 = vshrl.u32 %v2989, 16
        %v3112 = vrot.slane %v3110, 4
        %v3113 = vor.u32 %v3112, %v3108
        %v3114 = vrot.slane %v3113, 4
        %v3116 = vshll.u32 %v2990, 16
        %v3118 = vrot.slane %v3116, 5
        %v3119 = vsel %vm2030, %v3114, %v3118
        %v3121 = vshrl.u32 %v2991, 16
        %v3123 = vrot.slane %v3121, 4
        %v3124 = vshll.u32 %v2991, 16
        %v3126 = vrot.slane %v3124, 5
        %v3127 = vor.u32 %v3123, %v3126
        %v3128 = vrot.slane %v3127, 4
        %v3130 = vshll.u32 %v2992, 16
        %v3132 = vrot.slane %v3130, 5
        %v3133 = vsel %vm2030, %v3128, %v3132
        %v3134 = vshrl.u32 %v2992, 16
        %v3136 = vrot.slane %v3134, 4
        %v3137 = vor.u32 %v3136, %v3132
        %v3138 = vrot.slane %v3137, 4
        %v3140 = vshll.u32 %v2993, 16
        %v3142 = vrot.slane %v3140, 5
        %v3143 = vsel %vm2030, %v3138, %v3142
        %v3145 = vshrl.u32 %v2994, 16
        %v3147 = vrot.slane %v3145, 4
        %v3148 = vshll.u32 %v2994, 16
        %v3150 = vrot.slane %v3148, 5
        %v3151 = vor.u32 %v3147, %v3150
        %v3152 = vrot.slane %v3151, 4
        %v3154 = vshll.u32 %v2995, 16
        %v3156 = vrot.slane %v3154, 5
        %v3157 = vsel %vm2030, %v3152, %v3156
        %v3158 = vshrl.u32 %v2995, 16
        %v3160 = vrot.slane %v3158, 4
        %v3161 = vor.u32 %v3160, %v3156
        %v3162 = vrot.slane %v3161, 4
        %v3164 = vshll.u32 %v2996, 16
        %v3166 = vrot.slane %v3164, 5
        %v3167 = vsel %vm2030, %v3162, %v3166
        %v3169 = vshrl.u32 %v2997, 16
        %v3171 = vrot.slane %v3169, 4
        %v3172 = vshll.u32 %v2997, 16
        %v3174 = vrot.slane %v3172, 5
        %v3175 = vor.u32 %v3171, %v3174
        %v3176 = vrot.slane %v3175, 4
        %v3178 = vshll.u32 %v2998, 16
        %v3180 = vrot.slane %v3178, 5
        %v3181 = vsel %vm2030, %v3176, %v3180
        %v3182 = vshrl.u32 %v2998, 16
        %v3184 = vrot.slane %v3182, 4
        %v3185 = vor.u32 %v3184, %v3180
        %v3186 = vrot.slane %v3185, 4
        %v3188 = vshll.u32 %v2999, 16
        %v3190 = vrot.slane %v3188, 5
        %v3191 = vsel %vm2030, %v3186, %v3190
        %s3192 = scalar_lea.vmem [#allocation12], 256
        %v3193 = vld [vmem:[%s3192] sm:$0xf]
        %v3194 = vld [vmem:[%s3192 + $0x4] sm:$0xf]
        %v3195 = vld [vmem:[%s3192 + $0x8] sm:$0xf]
        %v3196 = vld [vmem:[%s3192 + $0xc] sm:$0xf]
        %v3197 = vld [vmem:[%s3192 + $0x10] sm:$0xf]
        %v3198 = vld [vmem:[%s3192 + $0x14] sm:$0xf]
        %v3199 = vld [vmem:[%s3192 + $0x18] sm:$0xf]
        %v3200 = vld [vmem:[%s3192 + $0x1c] sm:$0xf]
        %v3201 = vld [vmem:[%s3192 + $0x20] sm:$0xf]
        %v3202 = vld [vmem:[%s3192 + $0x24] sm:$0xf]
        %v3203 = vld [vmem:[%s3192 + $0x28] sm:$0xf]
        %v3204 = vld [vmem:[%s3192 + $0x2c] sm:$0xf]
        %v3205 = vld [vmem:[%s3192 + $0x30] sm:$0xf]
        %v3206 = vld [vmem:[%s3192 + $0x34] sm:$0xf]
        %v3207 = vld [vmem:[%s3192 + $0x38] sm:$0xf]
        %v3208 = vld [vmem:[%s3192 + $0x3c] sm:$0xf]
        %v3209 = vunpack.c.l.b16 %v3013
        %v3210 = vunpack.c.l.b16 %v3023
        %v3211 = vunpack.c.l.b16 %v3037
        %v3212 = vunpack.c.l.b16 %v3047
        %v3213 = vunpack.c.l.b16 %v3061
        %v3214 = vunpack.c.l.b16 %v3071
        %v3215 = vunpack.c.l.b16 %v3085
        %v3216 = vunpack.c.l.b16 %v3095
        %v3217 = vunpack.c.l.b16 %v3109
        %v3218 = vunpack.c.l.b16 %v3119
        %v3219 = vunpack.c.l.b16 %v3133
        %v3220 = vunpack.c.l.b16 %v3143
        %v3221 = vunpack.c.l.b16 %v3157
        %v3222 = vunpack.c.l.b16 %v3167
        %v3223 = vunpack.c.l.b16 %v3181
        %v3224 = vunpack.c.l.b16 %v3191
        %v3225 = vpack.c.b16 %v3210, %v3209
        %v3226 = vpack.c.b16 %v3212, %v3211
        %v3227 = vpack.c.b16 %v3214, %v3213
        %v3228 = vpack.c.b16 %v3216, %v3215
        %v3229 = vpack.c.b16 %v3218, %v3217
        %v3230 = vpack.c.b16 %v3220, %v3219
        %v3231 = vpack.c.b16 %v3222, %v3221
        %v3232 = vpack.c.b16 %v3224, %v3223
        %v3257 = vunpack.c.l.b16 %v3193
        %v3258 = vunpack.c.l.b16 %v3194
        %v3259 = vunpack.c.l.b16 %v3195
        %v3260 = vunpack.c.l.b16 %v3196
        %v3261 = vunpack.c.l.b16 %v3197
        %v3262 = vunpack.c.l.b16 %v3198
        %v3263 = vunpack.c.l.b16 %v3199
        %v3264 = vunpack.c.l.b16 %v3200
        %v3265 = vunpack.c.l.b16 %v3201
        %v3266 = vunpack.c.l.b16 %v3202
        %v3267 = vunpack.c.l.b16 %v3203
        %v3268 = vunpack.c.l.b16 %v3204
        %v3269 = vunpack.c.l.b16 %v3205
        %v3270 = vunpack.c.l.b16 %v3206
        %v3271 = vunpack.c.l.b16 %v3207
        %v3272 = vunpack.c.l.b16 %v3208
        %v3273 = vpack.c.b16 %v3258, %v3257
        %v3274 = vpack.c.b16 %v3260, %v3259
        %v3275 = vpack.c.b16 %v3262, %v3261
        %v3276 = vpack.c.b16 %v3264, %v3263
        %v3277 = vpack.c.b16 %v3266, %v3265
        %v3278 = vpack.c.b16 %v3268, %v3267
        %v3279 = vpack.c.b16 %v3270, %v3269
        %v3280 = vpack.c.b16 %v3272, %v3271
        %3289 = vmatprep.subr.bf16.mxu0 0
        %3290 = vmatpush1.bf16.msra.mxu0 %v3280
        %3291 = vmatprep.subr.bf16.mxu0 0
        %3292 = vmatpush1.bf16.msra.mxu0 %v3279
        %3293 = vmatprep.subr.bf16.mxu0 0
        %3294 = vmatpush1.bf16.msra.mxu0 %v3278
        %3295 = vmatprep.subr.bf16.mxu0 0
        %3296 = vmatpush1.bf16.msra.mxu0 %v3277
        %3297 = vmatprep.subr.bf16.mxu0 0
        %3298 = vmatpush1.bf16.msra.mxu0 %v3276
        %3299 = vmatprep.subr.bf16.mxu0 0
        %3300 = vmatpush1.bf16.msra.mxu0 %v3275
        %3301 = vmatprep.subr.bf16.mxu0 0
        %3302 = vmatpush1.bf16.msra.mxu0 %v3274
        %3303 = vmatprep.subr.bf16.mxu0 0
        %3304 = vmatpush1.bf16.msra.mxu0 %v3273
        %3305 = vmatprep.subr.bf16.mxu0 0
        %3306 = vmatpush2.bf16.msra.mxu0 0
        %3307 = vmatprep.subr.bf16.mxu0 0
        %3308 = vmatpush2.bf16.msra.mxu0 0
        %3309 = vmatprep.subr.bf16.mxu0 0
        %3310 = vmatpush2.bf16.msra.mxu0 0
        %3311 = vmatprep.subr.bf16.mxu0 0
        %3312 = vmatpush2.bf16.msra.mxu0 0
        %3313 = vmatprep.subr.bf16.mxu0 0
        %3314 = vmatpush2.bf16.msra.mxu0 0
        %3315 = vmatprep.subr.bf16.mxu0 0
        %3316 = vmatpush2.bf16.msra.mxu0 0
        %3317 = vmatprep.subr.bf16.mxu0 0
        %3318 = vmatpush2.bf16.msra.mxu0 0
        %3319 = vmatprep.subr.bf16.mxu0 0
        %3320 = vmatpush2.bf16.msra.mxu0 0
        %3321 = vmatprep.mubr.bf16.mxu0 0
        %3322 = vmatmul.mubr.bf16.gmra.mxu0 %v3225
        %v3323 = vpop.f32.mrf.mxu0
        %v3324 = vadd.f32 0.0, %v3323
        %v3325 = vpop.f32.mrf.mxu0
        %v3326 = vpop.f32.mrf.mxu0
        %v3327 = vadd.f32 0.0, %v3326
        %v3328 = vpop.f32.mrf.mxu0
        %3329 = vmatprep.mubr.bf16.mxu0 0
        %3330 = vmatmul.mubr.bf16.gmra.mxu0 %v3226
        %v3331 = vpop.f32.mrf.mxu0
        %v3332 = vadd.f32 0.0, %v3331
        %v3333 = vpop.f32.mrf.mxu0
        %v3334 = vpop.f32.mrf.mxu0
        %v3335 = vadd.f32 0.0, %v3334
        %v3336 = vpop.f32.mrf.mxu0
        %3337 = vmatprep.mubr.bf16.mxu0 0
        %3338 = vmatmul.mubr.bf16.gmra.mxu0 %v3227
        %v3339 = vpop.f32.mrf.mxu0
        %v3340 = vadd.f32 0.0, %v3339
        %v3341 = vpop.f32.mrf.mxu0
        %v3342 = vpop.f32.mrf.mxu0
        %v3343 = vadd.f32 0.0, %v3342
        %v3344 = vpop.f32.mrf.mxu0
        %3345 = vmatprep.mubr.bf16.mxu0 0
        %3346 = vmatmul.mubr.bf16.gmra.mxu0 %v3228
        %v3347 = vpop.f32.mrf.mxu0
        %v3348 = vadd.f32 0.0, %v3347
        %v3349 = vpop.f32.mrf.mxu0
        %v3350 = vpop.f32.mrf.mxu0
        %v3351 = vadd.f32 0.0, %v3350
        %v3352 = vpop.f32.mrf.mxu0
        %3353 = vmatprep.mubr.bf16.mxu0 0
        %3354 = vmatmul.mubr.bf16.gmra.mxu0 %v3229
        %v3355 = vpop.f32.mrf.mxu0
        %v3356 = vadd.f32 0.0, %v3355
        %v3357 = vpop.f32.mrf.mxu0
        %v3358 = vpop.f32.mrf.mxu0
        %v3359 = vadd.f32 0.0, %v3358
        %v3360 = vpop.f32.mrf.mxu0
        %3361 = vmatprep.mubr.bf16.mxu0 0
        %3362 = vmatmul.mubr.bf16.gmra.mxu0 %v3230
        %v3363 = vpop.f32.mrf.mxu0
        %v3364 = vadd.f32 0.0, %v3363
        %v3365 = vpop.f32.mrf.mxu0
        %v3366 = vpop.f32.mrf.mxu0
        %v3367 = vadd.f32 0.0, %v3366
        %v3368 = vpop.f32.mrf.mxu0
        %3369 = vmatprep.mubr.bf16.mxu0 0
        %3370 = vmatmul.mubr.bf16.gmra.mxu0 %v3231
        %v3371 = vpop.f32.mrf.mxu0
        %v3372 = vadd.f32 0.0, %v3371
        %v3373 = vpop.f32.mrf.mxu0
        %v3374 = vpop.f32.mrf.mxu0
        %v3375 = vadd.f32 0.0, %v3374
        %v3376 = vpop.f32.mrf.mxu0
        %3377 = vmatprep.mubr.bf16.mxu0 0
        %3378 = vmatmul.mubr.bf16.gmra.mxu0 %v3232
        %v3379 = vpop.f32.mrf.mxu0
        %v3380 = vadd.f32 0.0, %v3379
        %v3381 = vpop.f32.mrf.mxu0
        %v3382 = vpop.f32.mrf.mxu0
        %v3383 = vadd.f32 0.0, %v3382
        %v3384 = vpop.f32.mrf.mxu0
        %3385 = vdwg.mxu0
        %v3386 = vadd.f32 %v2960, %v3324
        %v3387 = vadd.f32 %v2961, %v3327
        %v3388 = vadd.f32 %v2962, %v3332
        %v3389 = vadd.f32 %v2963, %v3335
        %v3390 = vadd.f32 %v2964, %v3340
        %v3391 = vadd.f32 %v2965, %v3343
        %v3392 = vadd.f32 %v2966, %v3348
        %v3393 = vadd.f32 %v2967, %v3351
        %v3394 = vadd.f32 %v2968, %v3356
        %v3395 = vadd.f32 %v2969, %v3359
        %v3396 = vadd.f32 %v2970, %v3364
        %v3397 = vadd.f32 %v2971, %v3367
        %v3398 = vadd.f32 %v2972, %v3372
        %v3399 = vadd.f32 %v2973, %v3375
        %v3400 = vadd.f32 %v2974, %v3380
        %v3401 = vadd.f32 %v2975, %v3383
        %v3402 = vld [vmem:[%s1638] sm:$0xe]
        %v3403 = vld [vmem:[%s1638 + $0xc] sm:$0xe]
        %v3404 = vld [vmem:[%s1638 + $0x18] sm:$0xe]
        %v3405 = vld [vmem:[%s1638 + $0x24] sm:$0xe]
        %v3406 = vld [vmem:[%s1638 + $0x30] sm:$0xe]
        %v3407 = vld [vmem:[%s1638 + $0x3c] sm:$0xe]
        %v3408 = vld [vmem:[%s1638 + $0x48] sm:$0xe]
        %v3409 = vld [vmem:[%s1638 + $0x54] sm:$0xe]
        %v3434 = vrot.slane %v3402, 5
        %v3435 = vrot.slane %v3434, 4
        %v3436 = vrot.slane %v2977, 5
        %v3437 = vsel %vm2467, %v3435, %v3436
        %v3438 = vrot.slane %v3436, 4
        %v3439 = vrot.slane %v2978, 5
        %v3440 = vsel %vm2467, %v3438, %v3439
        %v3441 = vrot.slane %v3403, 5
        %v3442 = vrot.slane %v3441, 4
        %v3443 = vrot.slane %v2980, 5
        %v3444 = vsel %vm2467, %v3442, %v3443
        %v3445 = vrot.slane %v3443, 4
        %v3446 = vrot.slane %v2981, 5
        %v3447 = vsel %vm2467, %v3445, %v3446
        %v3448 = vrot.slane %v3404, 5
        %v3449 = vrot.slane %v3448, 4
        %v3450 = vrot.slane %v2983, 5
        %v3451 = vsel %vm2467, %v3449, %v3450
        %v3452 = vrot.slane %v3450, 4
        %v3453 = vrot.slane %v2984, 5
        %v3454 = vsel %vm2467, %v3452, %v3453
        %v3455 = vrot.slane %v3405, 5
        %v3456 = vrot.slane %v3455, 4
        %v3457 = vrot.slane %v2986, 5
        %v3458 = vsel %vm2467, %v3456, %v3457
        %v3459 = vrot.slane %v3457, 4
        %v3460 = vrot.slane %v2987, 5
        %v3461 = vsel %vm2467, %v3459, %v3460
        %v3462 = vrot.slane %v3406, 5
        %v3463 = vrot.slane %v3462, 4
        %v3464 = vrot.slane %v2989, 5
        %v3465 = vsel %vm2467, %v3463, %v3464
        %v3466 = vrot.slane %v3464, 4
        %v3467 = vrot.slane %v2990, 5
        %v3468 = vsel %vm2467, %v3466, %v3467
        %v3469 = vrot.slane %v3407, 5
        %v3470 = vrot.slane %v3469, 4
        %v3471 = vrot.slane %v2992, 5
        %v3472 = vsel %vm2467, %v3470, %v3471
        %v3473 = vrot.slane %v3471, 4
        %v3474 = vrot.slane %v2993, 5
        %v3475 = vsel %vm2467, %v3473, %v3474
        %v3476 = vrot.slane %v3408, 5
        %v3477 = vrot.slane %v3476, 4
        %v3478 = vrot.slane %v2995, 5
        %v3479 = vsel %vm2467, %v3477, %v3478
        %v3480 = vrot.slane %v3478, 4
        %v3481 = vrot.slane %v2996, 5
        %v3482 = vsel %vm2467, %v3480, %v3481
        %v3483 = vrot.slane %v3409, 5
        %v3484 = vrot.slane %v3483, 4
        %v3485 = vrot.slane %v2998, 5
        %v3486 = vsel %vm2467, %v3484, %v3485
        %v3487 = vrot.slane %v3485, 4
        %v3488 = vrot.slane %v2999, 5
        %v3489 = vsel %vm2467, %v3487, %v3488
        %s3490 = scalar_lea.vmem [#allocation12], 320
        %v3491 = vld [vmem:[%s3490] sm:$0xf]
        %v3492 = vld [vmem:[%s3490 + $0x4] sm:$0xf]
        %v3493 = vld [vmem:[%s3490 + $0x8] sm:$0xf]
        %v3494 = vld [vmem:[%s3490 + $0xc] sm:$0xf]
        %v3495 = vld [vmem:[%s3490 + $0x10] sm:$0xf]
        %v3496 = vld [vmem:[%s3490 + $0x14] sm:$0xf]
        %v3497 = vld [vmem:[%s3490 + $0x18] sm:$0xf]
        %v3498 = vld [vmem:[%s3490 + $0x1c] sm:$0xf]
        %v3499 = vld [vmem:[%s3490 + $0x20] sm:$0xf]
        %v3500 = vld [vmem:[%s3490 + $0x24] sm:$0xf]
        %v3501 = vld [vmem:[%s3490 + $0x28] sm:$0xf]
        %v3502 = vld [vmem:[%s3490 + $0x2c] sm:$0xf]
        %v3503 = vld [vmem:[%s3490 + $0x30] sm:$0xf]
        %v3504 = vld [vmem:[%s3490 + $0x34] sm:$0xf]
        %v3505 = vld [vmem:[%s3490 + $0x38] sm:$0xf]
        %v3506 = vld [vmem:[%s3490 + $0x3c] sm:$0xf]
        %v3507 = vunpack.c.l.b16 %v3437
        %v3508 = vunpack.c.l.b16 %v3440
        %v3509 = vunpack.c.l.b16 %v3444
        %v3510 = vunpack.c.l.b16 %v3447
        %v3511 = vunpack.c.l.b16 %v3451
        %v3512 = vunpack.c.l.b16 %v3454
        %v3513 = vunpack.c.l.b16 %v3458
        %v3514 = vunpack.c.l.b16 %v3461
        %v3515 = vunpack.c.l.b16 %v3465
        %v3516 = vunpack.c.l.b16 %v3468
        %v3517 = vunpack.c.l.b16 %v3472
        %v3518 = vunpack.c.l.b16 %v3475
        %v3519 = vunpack.c.l.b16 %v3479
        %v3520 = vunpack.c.l.b16 %v3482
        %v3521 = vunpack.c.l.b16 %v3486
        %v3522 = vunpack.c.l.b16 %v3489
        %v3523 = vpack.c.b16 %v3508, %v3507
        %v3524 = vpack.c.b16 %v3510, %v3509
        %v3525 = vpack.c.b16 %v3512, %v3511
        %v3526 = vpack.c.b16 %v3514, %v3513
        %v3527 = vpack.c.b16 %v3516, %v3515
        %v3528 = vpack.c.b16 %v3518, %v3517
        %v3529 = vpack.c.b16 %v3520, %v3519
        %v3530 = vpack.c.b16 %v3522, %v3521
        %v3555 = vunpack.c.l.b16 %v3491
        %v3556 = vunpack.c.l.b16 %v3492
        %v3557 = vunpack.c.l.b16 %v3493
        %v3558 = vunpack.c.l.b16 %v3494
        %v3559 = vunpack.c.l.b16 %v3495
        %v3560 = vunpack.c.l.b16 %v3496
        %v3561 = vunpack.c.l.b16 %v3497
        %v3562 = vunpack.c.l.b16 %v3498
        %v3563 = vunpack.c.l.b16 %v3499
        %v3564 = vunpack.c.l.b16 %v3500
        %v3565 = vunpack.c.l.b16 %v3501
        %v3566 = vunpack.c.l.b16 %v3502
        %v3567 = vunpack.c.l.b16 %v3503
        %v3568 = vunpack.c.l.b16 %v3504
        %v3569 = vunpack.c.l.b16 %v3505
        %v3570 = vunpack.c.l.b16 %v3506
        %v3571 = vpack.c.b16 %v3556, %v3555
        %v3572 = vpack.c.b16 %v3558, %v3557
        %v3573 = vpack.c.b16 %v3560, %v3559
        %v3574 = vpack.c.b16 %v3562, %v3561
        %v3575 = vpack.c.b16 %v3564, %v3563
        %v3576 = vpack.c.b16 %v3566, %v3565
        %v3577 = vpack.c.b16 %v3568, %v3567
        %v3578 = vpack.c.b16 %v3570, %v3569
        %3587 = vmatprep.subr.bf16.mxu0 0
        %3588 = vmatpush1.bf16.msra.mxu0 %v3578
        %3589 = vmatprep.subr.bf16.mxu0 0
        %3590 = vmatpush1.bf16.msra.mxu0 %v3577
        %3591 = vmatprep.subr.bf16.mxu0 0
        %3592 = vmatpush1.bf16.msra.mxu0 %v3576
        %3593 = vmatprep.subr.bf16.mxu0 0
        %3594 = vmatpush1.bf16.msra.mxu0 %v3575
        %3595 = vmatprep.subr.bf16.mxu0 0
        %3596 = vmatpush1.bf16.msra.mxu0 %v3574
        %3597 = vmatprep.subr.bf16.mxu0 0
        %3598 = vmatpush1.bf16.msra.mxu0 %v3573
        %3599 = vmatprep.subr.bf16.mxu0 0
        %3600 = vmatpush1.bf16.msra.mxu0 %v3572
        %3601 = vmatprep.subr.bf16.mxu0 0
        %3602 = vmatpush1.bf16.msra.mxu0 %v3571
        %3603 = vmatprep.subr.bf16.mxu0 0
        %3604 = vmatpush2.bf16.msra.mxu0 0
        %3605 = vmatprep.subr.bf16.mxu0 0
        %3606 = vmatpush2.bf16.msra.mxu0 0
        %3607 = vmatprep.subr.bf16.mxu0 0
        %3608 = vmatpush2.bf16.msra.mxu0 0
        %3609 = vmatprep.subr.bf16.mxu0 0
        %3610 = vmatpush2.bf16.msra.mxu0 0
        %3611 = vmatprep.subr.bf16.mxu0 0
        %3612 = vmatpush2.bf16.msra.mxu0 0
        %3613 = vmatprep.subr.bf16.mxu0 0
        %3614 = vmatpush2.bf16.msra.mxu0 0
        %3615 = vmatprep.subr.bf16.mxu0 0
        %3616 = vmatpush2.bf16.msra.mxu0 0
        %3617 = vmatprep.subr.bf16.mxu0 0
        %3618 = vmatpush2.bf16.msra.mxu0 0
        %3619 = vmatprep.mubr.bf16.mxu0 0
        %3620 = vmatmul.mubr.bf16.gmra.mxu0 %v3523
        %v3621 = vpop.f32.mrf.mxu0
        %v3622 = vadd.f32 0.0, %v3621
        %v3623 = vpop.f32.mrf.mxu0
        %v3624 = vpop.f32.mrf.mxu0
        %v3625 = vadd.f32 0.0, %v3624
        %v3626 = vpop.f32.mrf.mxu0
        %3627 = vmatprep.mubr.bf16.mxu0 0
        %3628 = vmatmul.mubr.bf16.gmra.mxu0 %v3524
        %v3629 = vpop.f32.mrf.mxu0
        %v3630 = vadd.f32 0.0, %v3629
        %v3631 = vpop.f32.mrf.mxu0
        %v3632 = vpop.f32.mrf.mxu0
        %v3633 = vadd.f32 0.0, %v3632
        %v3634 = vpop.f32.mrf.mxu0
        %3635 = vmatprep.mubr.bf16.mxu0 0
        %3636 = vmatmul.mubr.bf16.gmra.mxu0 %v3525
        %v3637 = vpop.f32.mrf.mxu0
        %v3638 = vadd.f32 0.0, %v3637
        %v3639 = vpop.f32.mrf.mxu0
        %v3640 = vpop.f32.mrf.mxu0
        %v3641 = vadd.f32 0.0, %v3640
        %v3642 = vpop.f32.mrf.mxu0
        %3643 = vmatprep.mubr.bf16.mxu0 0
        %3644 = vmatmul.mubr.bf16.gmra.mxu0 %v3526
        %v3645 = vpop.f32.mrf.mxu0
        %v3646 = vadd.f32 0.0, %v3645
        %v3647 = vpop.f32.mrf.mxu0
        %v3648 = vpop.f32.mrf.mxu0
        %v3649 = vadd.f32 0.0, %v3648
        %v3650 = vpop.f32.mrf.mxu0
        %3651 = vmatprep.mubr.bf16.mxu0 0
        %3652 = vmatmul.mubr.bf16.gmra.mxu0 %v3527
        %v3653 = vpop.f32.mrf.mxu0
        %v3654 = vadd.f32 0.0, %v3653
        %v3655 = vpop.f32.mrf.mxu0
        %v3656 = vpop.f32.mrf.mxu0
        %v3657 = vadd.f32 0.0, %v3656
        %v3658 = vpop.f32.mrf.mxu0
        %3659 = vmatprep.mubr.bf16.mxu0 0
        %3660 = vmatmul.mubr.bf16.gmra.mxu0 %v3528
        %v3661 = vpop.f32.mrf.mxu0
        %v3662 = vadd.f32 0.0, %v3661
        %v3663 = vpop.f32.mrf.mxu0
        %v3664 = vpop.f32.mrf.mxu0
        %v3665 = vadd.f32 0.0, %v3664
        %v3666 = vpop.f32.mrf.mxu0
        %3667 = vmatprep.mubr.bf16.mxu0 0
        %3668 = vmatmul.mubr.bf16.gmra.mxu0 %v3529
        %v3669 = vpop.f32.mrf.mxu0
        %v3670 = vadd.f32 0.0, %v3669
        %v3671 = vpop.f32.mrf.mxu0
        %v3672 = vpop.f32.mrf.mxu0
        %v3673 = vadd.f32 0.0, %v3672
        %v3674 = vpop.f32.mrf.mxu0
        %3675 = vmatprep.mubr.bf16.mxu0 0
        %3676 = vmatmul.mubr.bf16.gmra.mxu0 %v3530
        %v3677 = vpop.f32.mrf.mxu0
        %v3678 = vadd.f32 0.0, %v3677
        %v3679 = vpop.f32.mrf.mxu0
        %v3680 = vpop.f32.mrf.mxu0
        %v3681 = vadd.f32 0.0, %v3680
        %v3682 = vpop.f32.mrf.mxu0
        %3683 = vdwg.mxu0
        %v3684 = vadd.f32 %v3386, %v3622
        %v3685 = vadd.f32 %v3387, %v3625
        %v3686 = vadd.f32 %v3388, %v3630
        %v3687 = vadd.f32 %v3389, %v3633
        %v3688 = vadd.f32 %v3390, %v3638
        %v3689 = vadd.f32 %v3391, %v3641
        %v3690 = vadd.f32 %v3392, %v3646
        %v3691 = vadd.f32 %v3393, %v3649
        %v3692 = vadd.f32 %v3394, %v3654
        %v3693 = vadd.f32 %v3395, %v3657
        %v3694 = vadd.f32 %v3396, %v3662
        %v3695 = vadd.f32 %v3397, %v3665
        %v3696 = vadd.f32 %v3398, %v3670
        %v3697 = vadd.f32 %v3399, %v3673
        %v3698 = vadd.f32 %v3400, %v3678
        %v3699 = vadd.f32 %v3401, %v3681
        %s3700 = scalar_lea.vmem [#allocation2], 24
        %v3701 = vld [vmem:[%s3700] sm:$0xf]
        %v3702 = vld [vmem:[%s3700 + $0x4] sm:$0xf]
        %v3703 = vld [vmem:[%s3700 + $0xc] sm:$0xf]
        %v3704 = vld [vmem:[%s3700 + $0x10] sm:$0xf]
        %v3705 = vld [vmem:[%s3700 + $0x18] sm:$0xf]
        %v3706 = vld [vmem:[%s3700 + $0x1c] sm:$0xf]
        %v3707 = vld [vmem:[%s3700 + $0x24] sm:$0xf]
        %v3708 = vld [vmem:[%s3700 + $0x28] sm:$0xf]
        %v3709 = vld [vmem:[%s3700 + $0x30] sm:$0xf]
        %v3710 = vld [vmem:[%s3700 + $0x34] sm:$0xf]
        %v3711 = vld [vmem:[%s3700 + $0x3c] sm:$0xf]
        %v3712 = vld [vmem:[%s3700 + $0x40] sm:$0xf]
        %v3713 = vld [vmem:[%s3700 + $0x48] sm:$0xf]
        %v3714 = vld [vmem:[%s3700 + $0x4c] sm:$0xf]
        %v3715 = vld [vmem:[%s3700 + $0x54] sm:$0xf]
        %v3716 = vld [vmem:[%s3700 + $0x58] sm:$0xf]
        %s3717 = scalar_lea.vmem [#allocation12], 384
        %v3718 = vld [vmem:[%s3717] sm:$0xf]
        %v3719 = vld [vmem:[%s3717 + $0x4] sm:$0xf]
        %v3720 = vld [vmem:[%s3717 + $0x8] sm:$0xf]
        %v3721 = vld [vmem:[%s3717 + $0xc] sm:$0xf]
        %v3722 = vld [vmem:[%s3717 + $0x10] sm:$0xf]
        %v3723 = vld [vmem:[%s3717 + $0x14] sm:$0xf]
        %v3724 = vld [vmem:[%s3717 + $0x18] sm:$0xf]
        %v3725 = vld [vmem:[%s3717 + $0x1c] sm:$0xf]
        %v3726 = vld [vmem:[%s3717 + $0x20] sm:$0xf]
        %v3727 = vld [vmem:[%s3717 + $0x24] sm:$0xf]
        %v3728 = vld [vmem:[%s3717 + $0x28] sm:$0xf]
        %v3729 = vld [vmem:[%s3717 + $0x2c] sm:$0xf]
        %v3730 = vld [vmem:[%s3717 + $0x30] sm:$0xf]
        %v3731 = vld [vmem:[%s3717 + $0x34] sm:$0xf]
        %v3732 = vld [vmem:[%s3717 + $0x38] sm:$0xf]
        %v3733 = vld [vmem:[%s3717 + $0x3c] sm:$0xf]
        %v3750 = vunpack.c.l.b16 %v3701
        %v3751 = vunpack.c.l.b16 %v3702
        %v3752 = vunpack.c.l.b16 %v3703
        %v3753 = vunpack.c.l.b16 %v3704
        %v3754 = vunpack.c.l.b16 %v3705
        %v3755 = vunpack.c.l.b16 %v3706
        %v3756 = vunpack.c.l.b16 %v3707
        %v3757 = vunpack.c.l.b16 %v3708
        %v3758 = vunpack.c.l.b16 %v3709
        %v3759 = vunpack.c.l.b16 %v3710
        %v3760 = vunpack.c.l.b16 %v3711
        %v3761 = vunpack.c.l.b16 %v3712
        %v3762 = vunpack.c.l.b16 %v3713
        %v3763 = vunpack.c.l.b16 %v3714
        %v3764 = vunpack.c.l.b16 %v3715
        %v3765 = vunpack.c.l.b16 %v3716
        %v3766 = vpack.c.b16 %v3751, %v3750
        %v3767 = vpack.c.b16 %v3753, %v3752
        %v3768 = vpack.c.b16 %v3755, %v3754
        %v3769 = vpack.c.b16 %v3757, %v3756
        %v3770 = vpack.c.b16 %v3759, %v3758
        %v3771 = vpack.c.b16 %v3761, %v3760
        %v3772 = vpack.c.b16 %v3763, %v3762
        %v3773 = vpack.c.b16 %v3765, %v3764
        %v3798 = vunpack.c.l.b16 %v3718
        %v3799 = vunpack.c.l.b16 %v3719
        %v3800 = vunpack.c.l.b16 %v3720
        %v3801 = vunpack.c.l.b16 %v3721
        %v3802 = vunpack.c.l.b16 %v3722
        %v3803 = vunpack.c.l.b16 %v3723
        %v3804 = vunpack.c.l.b16 %v3724
        %v3805 = vunpack.c.l.b16 %v3725
        %v3806 = vunpack.c.l.b16 %v3726
        %v3807 = vunpack.c.l.b16 %v3727
        %v3808 = vunpack.c.l.b16 %v3728
        %v3809 = vunpack.c.l.b16 %v3729
        %v3810 = vunpack.c.l.b16 %v3730
        %v3811 = vunpack.c.l.b16 %v3731
        %v3812 = vunpack.c.l.b16 %v3732
        %v3813 = vunpack.c.l.b16 %v3733
        %v3814 = vpack.c.b16 %v3799, %v3798
        %v3815 = vpack.c.b16 %v3801, %v3800
        %v3816 = vpack.c.b16 %v3803, %v3802
        %v3817 = vpack.c.b16 %v3805, %v3804
        %v3818 = vpack.c.b16 %v3807, %v3806
        %v3819 = vpack.c.b16 %v3809, %v3808
        %v3820 = vpack.c.b16 %v3811, %v3810
        %v3821 = vpack.c.b16 %v3813, %v3812
        %3830 = vmatprep.subr.bf16.mxu0 0
        %3831 = vmatpush1.bf16.msra.mxu0 %v3821
        %3832 = vmatprep.subr.bf16.mxu0 0
        %3833 = vmatpush1.bf16.msra.mxu0 %v3820
        %3834 = vmatprep.subr.bf16.mxu0 0
        %3835 = vmatpush1.bf16.msra.mxu0 %v3819
        %3836 = vmatprep.subr.bf16.mxu0 0
        %3837 = vmatpush1.bf16.msra.mxu0 %v3818
        %3838 = vmatprep.subr.bf16.mxu0 0
        %3839 = vmatpush1.bf16.msra.mxu0 %v3817
        %3840 = vmatprep.subr.bf16.mxu0 0
        %3841 = vmatpush1.bf16.msra.mxu0 %v3816
        %3842 = vmatprep.subr.bf16.mxu0 0
        %3843 = vmatpush1.bf16.msra.mxu0 %v3815
        %3844 = vmatprep.subr.bf16.mxu0 0
        %3845 = vmatpush1.bf16.msra.mxu0 %v3814
        %3846 = vmatprep.subr.bf16.mxu0 0
        %3847 = vmatpush2.bf16.msra.mxu0 0
        %3848 = vmatprep.subr.bf16.mxu0 0
        %3849 = vmatpush2.bf16.msra.mxu0 0
        %3850 = vmatprep.subr.bf16.mxu0 0
        %3851 = vmatpush2.bf16.msra.mxu0 0
        %3852 = vmatprep.subr.bf16.mxu0 0
        %3853 = vmatpush2.bf16.msra.mxu0 0
        %3854 = vmatprep.subr.bf16.mxu0 0
        %3855 = vmatpush2.bf16.msra.mxu0 0
        %3856 = vmatprep.subr.bf16.mxu0 0
        %3857 = vmatpush2.bf16.msra.mxu0 0
        %3858 = vmatprep.subr.bf16.mxu0 0
        %3859 = vmatpush2.bf16.msra.mxu0 0
        %3860 = vmatprep.subr.bf16.mxu0 0
        %3861 = vmatpush2.bf16.msra.mxu0 0
        %3862 = vmatprep.mubr.bf16.mxu0 0
        %3863 = vmatmul.mubr.bf16.gmra.mxu0 %v3766
        %v3864 = vpop.f32.mrf.mxu0
        %v3865 = vadd.f32 0.0, %v3864
        %v3866 = vpop.f32.mrf.mxu0
        %v3867 = vpop.f32.mrf.mxu0
        %v3868 = vadd.f32 0.0, %v3867
        %v3869 = vpop.f32.mrf.mxu0
        %3870 = vmatprep.mubr.bf16.mxu0 0
        %3871 = vmatmul.mubr.bf16.gmra.mxu0 %v3767
        %v3872 = vpop.f32.mrf.mxu0
        %v3873 = vadd.f32 0.0, %v3872
        %v3874 = vpop.f32.mrf.mxu0
        %v3875 = vpop.f32.mrf.mxu0
        %v3876 = vadd.f32 0.0, %v3875
        %v3877 = vpop.f32.mrf.mxu0
        %3878 = vmatprep.mubr.bf16.mxu0 0
        %3879 = vmatmul.mubr.bf16.gmra.mxu0 %v3768
        %v3880 = vpop.f32.mrf.mxu0
        %v3881 = vadd.f32 0.0, %v3880
        %v3882 = vpop.f32.mrf.mxu0
        %v3883 = vpop.f32.mrf.mxu0
        %v3884 = vadd.f32 0.0, %v3883
        %v3885 = vpop.f32.mrf.mxu0
        %3886 = vmatprep.mubr.bf16.mxu0 0
        %3887 = vmatmul.mubr.bf16.gmra.mxu0 %v3769
        %v3888 = vpop.f32.mrf.mxu0
        %v3889 = vadd.f32 0.0, %v3888
        %v3890 = vpop.f32.mrf.mxu0
        %v3891 = vpop.f32.mrf.mxu0
        %v3892 = vadd.f32 0.0, %v3891
        %v3893 = vpop.f32.mrf.mxu0
        %3894 = vmatprep.mubr.bf16.mxu0 0
        %3895 = vmatmul.mubr.bf16.gmra.mxu0 %v3770
        %v3896 = vpop.f32.mrf.mxu0
        %v3897 = vadd.f32 0.0, %v3896
        %v3898 = vpop.f32.mrf.mxu0
        %v3899 = vpop.f32.mrf.mxu0
        %v3900 = vadd.f32 0.0, %v3899
        %v3901 = vpop.f32.mrf.mxu0
        %3902 = vmatprep.mubr.bf16.mxu0 0
        %3903 = vmatmul.mubr.bf16.gmra.mxu0 %v3771
        %v3904 = vpop.f32.mrf.mxu0
        %v3905 = vadd.f32 0.0, %v3904
        %v3906 = vpop.f32.mrf.mxu0
        %v3907 = vpop.f32.mrf.mxu0
        %v3908 = vadd.f32 0.0, %v3907
        %v3909 = vpop.f32.mrf.mxu0
        %3910 = vmatprep.mubr.bf16.mxu0 0
        %3911 = vmatmul.mubr.bf16.gmra.mxu0 %v3772
        %v3912 = vpop.f32.mrf.mxu0
        %v3913 = vadd.f32 0.0, %v3912
        %v3914 = vpop.f32.mrf.mxu0
        %v3915 = vpop.f32.mrf.mxu0
        %v3916 = vadd.f32 0.0, %v3915
        %v3917 = vpop.f32.mrf.mxu0
        %3918 = vmatprep.mubr.bf16.mxu0 0
        %3919 = vmatmul.mubr.bf16.gmra.mxu0 %v3773
        %v3920 = vpop.f32.mrf.mxu0
        %v3921 = vadd.f32 0.0, %v3920
        %v3922 = vpop.f32.mrf.mxu0
        %v3923 = vpop.f32.mrf.mxu0
        %v3924 = vadd.f32 0.0, %v3923
        %v3925 = vpop.f32.mrf.mxu0
        %3926 = vdwg.mxu0
        %v3927 = vadd.f32 %v3684, %v3865
        %v3928 = vadd.f32 %v3685, %v3868
        %v3929 = vadd.f32 %v3686, %v3873
        %v3930 = vadd.f32 %v3687, %v3876
        %v3931 = vadd.f32 %v3688, %v3881
        %v3932 = vadd.f32 %v3689, %v3884
        %v3933 = vadd.f32 %v3690, %v3889
        %v3934 = vadd.f32 %v3691, %v3892
        %v3935 = vadd.f32 %v3692, %v3897
        %v3936 = vadd.f32 %v3693, %v3900
        %v3937 = vadd.f32 %v3694, %v3905
        %v3938 = vadd.f32 %v3695, %v3908
        %v3939 = vadd.f32 %v3696, %v3913
        %v3940 = vadd.f32 %v3697, %v3916
        %v3941 = vadd.f32 %v3698, %v3921
        %v3942 = vadd.f32 %v3699, %v3924
        %v3943 = vld [vmem:[%s3700] sm:$0xf]
        %v3944 = vld [vmem:[%s3700 + $0x4] sm:$0xf]
        %v3945 = vld [vmem:[%s3700 + $0x8] sm:$0x1]
        %v3946 = vld [vmem:[%s3700 + $0xc] sm:$0xf]
        %v3947 = vld [vmem:[%s3700 + $0x10] sm:$0xf]
        %v3948 = vld [vmem:[%s3700 + $0x14] sm:$0x1]
        %v3949 = vld [vmem:[%s3700 + $0x18] sm:$0xf]
        %v3950 = vld [vmem:[%s3700 + $0x1c] sm:$0xf]
        %v3951 = vld [vmem:[%s3700 + $0x20] sm:$0x1]
        %v3952 = vld [vmem:[%s3700 + $0x24] sm:$0xf]
        %v3953 = vld [vmem:[%s3700 + $0x28] sm:$0xf]
        %v3954 = vld [vmem:[%s3700 + $0x2c] sm:$0x1]
        %v3955 = vld [vmem:[%s3700 + $0x30] sm:$0xf]
        %v3956 = vld [vmem:[%s3700 + $0x34] sm:$0xf]
        %v3957 = vld [vmem:[%s3700 + $0x38] sm:$0x1]
        %v3958 = vld [vmem:[%s3700 + $0x3c] sm:$0xf]
        %v3959 = vld [vmem:[%s3700 + $0x40] sm:$0xf]
        %v3960 = vld [vmem:[%s3700 + $0x44] sm:$0x1]
        %v3961 = vld [vmem:[%s3700 + $0x48] sm:$0xf]
        %v3962 = vld [vmem:[%s3700 + $0x4c] sm:$0xf]
        %v3963 = vld [vmem:[%s3700 + $0x50] sm:$0x1]
        %v3964 = vld [vmem:[%s3700 + $0x54] sm:$0xf]
        %v3965 = vld [vmem:[%s3700 + $0x58] sm:$0xf]
        %v3966 = vld [vmem:[%s3700 + $0x5c] sm:$0x1]
        %v3968 = vshrl.u32 %v3943, 16
        %v3970 = vrot.slane %v3968, 4
        %v3971 = vshll.u32 %v3943, 16
        %v3973 = vrot.slane %v3971, 5
        %v3974 = vor.u32 %v3970, %v3973
        %v3975 = vrot.slane %v3974, 4
        %v3977 = vshll.u32 %v3944, 16
        %v3979 = vrot.slane %v3977, 5
        %v3980 = vsel %vm2030, %v3975, %v3979
        %v3981 = vshrl.u32 %v3944, 16
        %v3983 = vrot.slane %v3981, 4
        %v3984 = vor.u32 %v3983, %v3979
        %v3985 = vrot.slane %v3984, 4
        %v3987 = vshll.u32 %v3945, 16
        %v3989 = vrot.slane %v3987, 5
        %v3990 = vsel %vm2030, %v3985, %v3989
        %v3992 = vshrl.u32 %v3946, 16
        %v3994 = vrot.slane %v3992, 4
        %v3995 = vshll.u32 %v3946, 16
        %v3997 = vrot.slane %v3995, 5
        %v3998 = vor.u32 %v3994, %v3997
        %v3999 = vrot.slane %v3998, 4
        %v4001 = vshll.u32 %v3947, 16
        %v4003 = vrot.slane %v4001, 5
        %v4004 = vsel %vm2030, %v3999, %v4003
        %v4005 = vshrl.u32 %v3947, 16
        %v4007 = vrot.slane %v4005, 4
        %v4008 = vor.u32 %v4007, %v4003
        %v4009 = vrot.slane %v4008, 4
        %v4011 = vshll.u32 %v3948, 16
        %v4013 = vrot.slane %v4011, 5
        %v4014 = vsel %vm2030, %v4009, %v4013
        %v4016 = vshrl.u32 %v3949, 16
        %v4018 = vrot.slane %v4016, 4
        %v4019 = vshll.u32 %v3949, 16
        %v4021 = vrot.slane %v4019, 5
        %v4022 = vor.u32 %v4018, %v4021
        %v4023 = vrot.slane %v4022, 4
        %v4025 = vshll.u32 %v3950, 16
        %v4027 = vrot.slane %v4025, 5
        %v4028 = vsel %vm2030, %v4023, %v4027
        %v4029 = vshrl.u32 %v3950, 16
        %v4031 = vrot.slane %v4029, 4
        %v4032 = vor.u32 %v4031, %v4027
        %v4033 = vrot.slane %v4032, 4
        %v4035 = vshll.u32 %v3951, 16
        %v4037 = vrot.slane %v4035, 5
        %v4038 = vsel %vm2030, %v4033, %v4037
        %v4040 = vshrl.u32 %v3952, 16
        %v4042 = vrot.slane %v4040, 4
        %v4043 = vshll.u32 %v3952, 16
        %v4045 = vrot.slane %v4043, 5
        %v4046 = vor.u32 %v4042, %v4045
        %v4047 = vrot.slane %v4046, 4
        %v4049 = vshll.u32 %v3953, 16
        %v4051 = vrot.slane %v4049, 5
        %v4052 = vsel %vm2030, %v4047, %v4051
        %v4053 = vshrl.u32 %v3953, 16
        %v4055 = vrot.slane %v4053, 4
        %v4056 = vor.u32 %v4055, %v4051
        %v4057 = vrot.slane %v4056, 4
        %v4059 = vshll.u32 %v3954, 16
        %v4061 = vrot.slane %v4059, 5
        %v4062 = vsel %vm2030, %v4057, %v4061
        %v4064 = vshrl.u32 %v3955, 16
        %v4066 = vrot.slane %v4064, 4
        %v4067 = vshll.u32 %v3955, 16
        %v4069 = vrot.slane %v4067, 5
        %v4070 = vor.u32 %v4066, %v4069
        %v4071 = vrot.slane %v4070, 4
        %v4073 = vshll.u32 %v3956, 16
        %v4075 = vrot.slane %v4073, 5
        %v4076 = vsel %vm2030, %v4071, %v4075
        %v4077 = vshrl.u32 %v3956, 16
        %v4079 = vrot.slane %v4077, 4
        %v4080 = vor.u32 %v4079, %v4075
        %v4081 = vrot.slane %v4080, 4
        %v4083 = vshll.u32 %v3957, 16
        %v4085 = vrot.slane %v4083, 5
        %v4086 = vsel %vm2030, %v4081, %v4085
        %v4088 = vshrl.u32 %v3958, 16
        %v4090 = vrot.slane %v4088, 4
        %v4091 = vshll.u32 %v3958, 16
        %v4093 = vrot.slane %v4091, 5
        %v4094 = vor.u32 %v4090, %v4093
        %v4095 = vrot.slane %v4094, 4
        %v4097 = vshll.u32 %v3959, 16
        %v4099 = vrot.slane %v4097, 5
        %v4100 = vsel %vm2030, %v4095, %v4099
        %v4101 = vshrl.u32 %v3959, 16
        %v4103 = vrot.slane %v4101, 4
        %v4104 = vor.u32 %v4103, %v4099
        %v4105 = vrot.slane %v4104, 4
        %v4107 = vshll.u32 %v3960, 16
        %v4109 = vrot.slane %v4107, 5
        %v4110 = vsel %vm2030, %v4105, %v4109
        %v4112 = vshrl.u32 %v3961, 16
        %v4114 = vrot.slane %v4112, 4
        %v4115 = vshll.u32 %v3961, 16
        %v4117 = vrot.slane %v4115, 5
        %v4118 = vor.u32 %v4114, %v4117
        %v4119 = vrot.slane %v4118, 4
        %v4121 = vshll.u32 %v3962, 16
        %v4123 = vrot.slane %v4121, 5
        %v4124 = vsel %vm2030, %v4119, %v4123
        %v4125 = vshrl.u32 %v3962, 16
        %v4127 = vrot.slane %v4125, 4
        %v4128 = vor.u32 %v4127, %v4123
        %v4129 = vrot.slane %v4128, 4
        %v4131 = vshll.u32 %v3963, 16
        %v4133 = vrot.slane %v4131, 5
        %v4134 = vsel %vm2030, %v4129, %v4133
        %v4136 = vshrl.u32 %v3964, 16
        %v4138 = vrot.slane %v4136, 4
        %v4139 = vshll.u32 %v3964, 16
        %v4141 = vrot.slane %v4139, 5
        %v4142 = vor.u32 %v4138, %v4141
        %v4143 = vrot.slane %v4142, 4
        %v4145 = vshll.u32 %v3965, 16
        %v4147 = vrot.slane %v4145, 5
        %v4148 = vsel %vm2030, %v4143, %v4147
        %v4149 = vshrl.u32 %v3965, 16
        %v4151 = vrot.slane %v4149, 4
        %v4152 = vor.u32 %v4151, %v4147
        %v4153 = vrot.slane %v4152, 4
        %v4155 = vshll.u32 %v3966, 16
        %v4157 = vrot.slane %v4155, 5
        %v4158 = vsel %vm2030, %v4153, %v4157
        %s4159 = scalar_lea.vmem [#allocation12], 448
        %v4160 = vld [vmem:[%s4159] sm:$0xf]
        %v4161 = vld [vmem:[%s4159 + $0x4] sm:$0xf]
        %v4162 = vld [vmem:[%s4159 + $0x8] sm:$0xf]
        %v4163 = vld [vmem:[%s4159 + $0xc] sm:$0xf]
        %v4164 = vld [vmem:[%s4159 + $0x10] sm:$0xf]
        %v4165 = vld [vmem:[%s4159 + $0x14] sm:$0xf]
        %v4166 = vld [vmem:[%s4159 + $0x18] sm:$0xf]
        %v4167 = vld [vmem:[%s4159 + $0x1c] sm:$0xf]
        %v4168 = vld [vmem:[%s4159 + $0x20] sm:$0xf]
        %v4169 = vld [vmem:[%s4159 + $0x24] sm:$0xf]
        %v4170 = vld [vmem:[%s4159 + $0x28] sm:$0xf]
        %v4171 = vld [vmem:[%s4159 + $0x2c] sm:$0xf]
        %v4172 = vld [vmem:[%s4159 + $0x30] sm:$0xf]
        %v4173 = vld [vmem:[%s4159 + $0x34] sm:$0xf]
        %v4174 = vld [vmem:[%s4159 + $0x38] sm:$0xf]
        %v4175 = vld [vmem:[%s4159 + $0x3c] sm:$0xf]
        %v4176 = vunpack.c.l.b16 %v3980
        %v4177 = vunpack.c.l.b16 %v3990
        %v4178 = vunpack.c.l.b16 %v4004
        %v4179 = vunpack.c.l.b16 %v4014
        %v4180 = vunpack.c.l.b16 %v4028
        %v4181 = vunpack.c.l.b16 %v4038
        %v4182 = vunpack.c.l.b16 %v4052
        %v4183 = vunpack.c.l.b16 %v4062
        %v4184 = vunpack.c.l.b16 %v4076
        %v4185 = vunpack.c.l.b16 %v4086
        %v4186 = vunpack.c.l.b16 %v4100
        %v4187 = vunpack.c.l.b16 %v4110
        %v4188 = vunpack.c.l.b16 %v4124
        %v4189 = vunpack.c.l.b16 %v4134
        %v4190 = vunpack.c.l.b16 %v4148
        %v4191 = vunpack.c.l.b16 %v4158
        %v4192 = vpack.c.b16 %v4177, %v4176
        %v4193 = vpack.c.b16 %v4179, %v4178
        %v4194 = vpack.c.b16 %v4181, %v4180
        %v4195 = vpack.c.b16 %v4183, %v4182
        %v4196 = vpack.c.b16 %v4185, %v4184
        %v4197 = vpack.c.b16 %v4187, %v4186
        %v4198 = vpack.c.b16 %v4189, %v4188
        %v4199 = vpack.c.b16 %v4191, %v4190
        %v4224 = vunpack.c.l.b16 %v4160
        %v4225 = vunpack.c.l.b16 %v4161
        %v4226 = vunpack.c.l.b16 %v4162
        %v4227 = vunpack.c.l.b16 %v4163
        %v4228 = vunpack.c.l.b16 %v4164
        %v4229 = vunpack.c.l.b16 %v4165
        %v4230 = vunpack.c.l.b16 %v4166
        %v4231 = vunpack.c.l.b16 %v4167
        %v4232 = vunpack.c.l.b16 %v4168
        %v4233 = vunpack.c.l.b16 %v4169
        %v4234 = vunpack.c.l.b16 %v4170
        %v4235 = vunpack.c.l.b16 %v4171
        %v4236 = vunpack.c.l.b16 %v4172
        %v4237 = vunpack.c.l.b16 %v4173
        %v4238 = vunpack.c.l.b16 %v4174
        %v4239 = vunpack.c.l.b16 %v4175
        %v4240 = vpack.c.b16 %v4225, %v4224
        %v4241 = vpack.c.b16 %v4227, %v4226
        %v4242 = vpack.c.b16 %v4229, %v4228
        %v4243 = vpack.c.b16 %v4231, %v4230
        %v4244 = vpack.c.b16 %v4233, %v4232
        %v4245 = vpack.c.b16 %v4235, %v4234
        %v4246 = vpack.c.b16 %v4237, %v4236
        %v4247 = vpack.c.b16 %v4239, %v4238
        %4256 = vmatprep.subr.bf16.mxu0 0
        %4257 = vmatpush1.bf16.msra.mxu0 %v4247
        %4258 = vmatprep.subr.bf16.mxu0 0
        %4259 = vmatpush1.bf16.msra.mxu0 %v4246
        %4260 = vmatprep.subr.bf16.mxu0 0
        %4261 = vmatpush1.bf16.msra.mxu0 %v4245
        %4262 = vmatprep.subr.bf16.mxu0 0
        %4263 = vmatpush1.bf16.msra.mxu0 %v4244
        %4264 = vmatprep.subr.bf16.mxu0 0
        %4265 = vmatpush1.bf16.msra.mxu0 %v4243
        %4266 = vmatprep.subr.bf16.mxu0 0
        %4267 = vmatpush1.bf16.msra.mxu0 %v4242
        %4268 = vmatprep.subr.bf16.mxu0 0
        %4269 = vmatpush1.bf16.msra.mxu0 %v4241
        %4270 = vmatprep.subr.bf16.mxu0 0
        %4271 = vmatpush1.bf16.msra.mxu0 %v4240
        %4272 = vmatprep.subr.bf16.mxu0 0
        %4273 = vmatpush2.bf16.msra.mxu0 0
        %4274 = vmatprep.subr.bf16.mxu0 0
        %4275 = vmatpush2.bf16.msra.mxu0 0
        %4276 = vmatprep.subr.bf16.mxu0 0
        %4277 = vmatpush2.bf16.msra.mxu0 0
        %4278 = vmatprep.subr.bf16.mxu0 0
        %4279 = vmatpush2.bf16.msra.mxu0 0
        %4280 = vmatprep.subr.bf16.mxu0 0
        %4281 = vmatpush2.bf16.msra.mxu0 0
        %4282 = vmatprep.subr.bf16.mxu0 0
        %4283 = vmatpush2.bf16.msra.mxu0 0
        %4284 = vmatprep.subr.bf16.mxu0 0
        %4285 = vmatpush2.bf16.msra.mxu0 0
        %4286 = vmatprep.subr.bf16.mxu0 0
        %4287 = vmatpush2.bf16.msra.mxu0 0
        %4288 = vmatprep.mubr.bf16.mxu0 0
        %4289 = vmatmul.mubr.bf16.gmra.mxu0 %v4192
        %v4290 = vpop.f32.mrf.mxu0
        %v4291 = vadd.f32 0.0, %v4290
        %v4292 = vpop.f32.mrf.mxu0
        %v4293 = vpop.f32.mrf.mxu0
        %v4294 = vadd.f32 0.0, %v4293
        %v4295 = vpop.f32.mrf.mxu0
        %4296 = vmatprep.mubr.bf16.mxu0 0
        %4297 = vmatmul.mubr.bf16.gmra.mxu0 %v4193
        %v4298 = vpop.f32.mrf.mxu0
        %v4299 = vadd.f32 0.0, %v4298
        %v4300 = vpop.f32.mrf.mxu0
        %v4301 = vpop.f32.mrf.mxu0
        %v4302 = vadd.f32 0.0, %v4301
        %v4303 = vpop.f32.mrf.mxu0
        %4304 = vmatprep.mubr.bf16.mxu0 0
        %4305 = vmatmul.mubr.bf16.gmra.mxu0 %v4194
        %v4306 = vpop.f32.mrf.mxu0
        %v4307 = vadd.f32 0.0, %v4306
        %v4308 = vpop.f32.mrf.mxu0
        %v4309 = vpop.f32.mrf.mxu0
        %v4310 = vadd.f32 0.0, %v4309
        %v4311 = vpop.f32.mrf.mxu0
        %4312 = vmatprep.mubr.bf16.mxu0 0
        %4313 = vmatmul.mubr.bf16.gmra.mxu0 %v4195
        %v4314 = vpop.f32.mrf.mxu0
        %v4315 = vadd.f32 0.0, %v4314
        %v4316 = vpop.f32.mrf.mxu0
        %v4317 = vpop.f32.mrf.mxu0
        %v4318 = vadd.f32 0.0, %v4317
        %v4319 = vpop.f32.mrf.mxu0
        %4320 = vmatprep.mubr.bf16.mxu0 0
        %4321 = vmatmul.mubr.bf16.gmra.mxu0 %v4196
        %v4322 = vpop.f32.mrf.mxu0
        %v4323 = vadd.f32 0.0, %v4322
        %v4324 = vpop.f32.mrf.mxu0
        %v4325 = vpop.f32.mrf.mxu0
        %v4326 = vadd.f32 0.0, %v4325
        %v4327 = vpop.f32.mrf.mxu0
        %4328 = vmatprep.mubr.bf16.mxu0 0
        %4329 = vmatmul.mubr.bf16.gmra.mxu0 %v4197
        %v4330 = vpop.f32.mrf.mxu0
        %v4331 = vadd.f32 0.0, %v4330
        %v4332 = vpop.f32.mrf.mxu0
        %v4333 = vpop.f32.mrf.mxu0
        %v4334 = vadd.f32 0.0, %v4333
        %v4335 = vpop.f32.mrf.mxu0
        %4336 = vmatprep.mubr.bf16.mxu0 0
        %4337 = vmatmul.mubr.bf16.gmra.mxu0 %v4198
        %v4338 = vpop.f32.mrf.mxu0
        %v4339 = vadd.f32 0.0, %v4338
        %v4340 = vpop.f32.mrf.mxu0
        %v4341 = vpop.f32.mrf.mxu0
        %v4342 = vadd.f32 0.0, %v4341
        %v4343 = vpop.f32.mrf.mxu0
        %4344 = vmatprep.mubr.bf16.mxu0 0
        %4345 = vmatmul.mubr.bf16.gmra.mxu0 %v4199
        %v4346 = vpop.f32.mrf.mxu0
        %v4347 = vadd.f32 0.0, %v4346
        %v4348 = vpop.f32.mrf.mxu0
        %v4349 = vpop.f32.mrf.mxu0
        %v4350 = vadd.f32 0.0, %v4349
        %v4351 = vpop.f32.mrf.mxu0
        %4352 = vdwg.mxu0
        %v4353 = vadd.f32 %v3927, %v4291
        %v4354 = vadd.f32 %v3928, %v4294
        %v4355 = vadd.f32 %v3929, %v4299
        %v4356 = vadd.f32 %v3930, %v4302
        %v4357 = vadd.f32 %v3931, %v4307
        %v4358 = vadd.f32 %v3932, %v4310
        %v4359 = vadd.f32 %v3933, %v4315
        %v4360 = vadd.f32 %v3934, %v4318
        %v4361 = vadd.f32 %v3935, %v4323
        %v4362 = vadd.f32 %v3936, %v4326
        %v4363 = vadd.f32 %v3937, %v4331
        %v4364 = vadd.f32 %v3938, %v4334
        %v4365 = vadd.f32 %v3939, %v4339
        %v4366 = vadd.f32 %v3940, %v4342
        %v4367 = vadd.f32 %v3941, %v4347
        %v4368 = vadd.f32 %v3942, %v4350
        %v4369 = vld [vmem:[%s3700] sm:$0xe]
        %v4370 = vld [vmem:[%s3700 + $0xc] sm:$0xe]
        %v4371 = vld [vmem:[%s3700 + $0x18] sm:$0xe]
        %v4372 = vld [vmem:[%s3700 + $0x24] sm:$0xe]
        %v4373 = vld [vmem:[%s3700 + $0x30] sm:$0xe]
        %v4374 = vld [vmem:[%s3700 + $0x3c] sm:$0xe]
        %v4375 = vld [vmem:[%s3700 + $0x48] sm:$0xe]
        %v4376 = vld [vmem:[%s3700 + $0x54] sm:$0xe]
        %v4401 = vrot.slane %v4369, 5
        %v4402 = vrot.slane %v4401, 4
        %v4403 = vrot.slane %v3944, 5
        %v4404 = vsel %vm2467, %v4402, %v4403
        %v4405 = vrot.slane %v4403, 4
        %v4406 = vrot.slane %v3945, 5
        %v4407 = vsel %vm2467, %v4405, %v4406
        %v4408 = vrot.slane %v4370, 5
        %v4409 = vrot.slane %v4408, 4
        %v4410 = vrot.slane %v3947, 5
        %v4411 = vsel %vm2467, %v4409, %v4410
        %v4412 = vrot.slane %v4410, 4
        %v4413 = vrot.slane %v3948, 5
        %v4414 = vsel %vm2467, %v4412, %v4413
        %v4415 = vrot.slane %v4371, 5
        %v4416 = vrot.slane %v4415, 4
        %v4417 = vrot.slane %v3950, 5
        %v4418 = vsel %vm2467, %v4416, %v4417
        %v4419 = vrot.slane %v4417, 4
        %v4420 = vrot.slane %v3951, 5
        %v4421 = vsel %vm2467, %v4419, %v4420
        %v4422 = vrot.slane %v4372, 5
        %v4423 = vrot.slane %v4422, 4
        %v4424 = vrot.slane %v3953, 5
        %v4425 = vsel %vm2467, %v4423, %v4424
        %v4426 = vrot.slane %v4424, 4
        %v4427 = vrot.slane %v3954, 5
        %v4428 = vsel %vm2467, %v4426, %v4427
        %v4429 = vrot.slane %v4373, 5
        %v4430 = vrot.slane %v4429, 4
        %v4431 = vrot.slane %v3956, 5
        %v4432 = vsel %vm2467, %v4430, %v4431
        %v4433 = vrot.slane %v4431, 4
        %v4434 = vrot.slane %v3957, 5
        %v4435 = vsel %vm2467, %v4433, %v4434
        %v4436 = vrot.slane %v4374, 5
        %v4437 = vrot.slane %v4436, 4
        %v4438 = vrot.slane %v3959, 5
        %v4439 = vsel %vm2467, %v4437, %v4438
        %v4440 = vrot.slane %v4438, 4
        %v4441 = vrot.slane %v3960, 5
        %v4442 = vsel %vm2467, %v4440, %v4441
        %v4443 = vrot.slane %v4375, 5
        %v4444 = vrot.slane %v4443, 4
        %v4445 = vrot.slane %v3962, 5
        %v4446 = vsel %vm2467, %v4444, %v4445
        %v4447 = vrot.slane %v4445, 4
        %v4448 = vrot.slane %v3963, 5
        %v4449 = vsel %vm2467, %v4447, %v4448
        %v4450 = vrot.slane %v4376, 5
        %v4451 = vrot.slane %v4450, 4
        %v4452 = vrot.slane %v3965, 5
        %v4453 = vsel %vm2467, %v4451, %v4452
        %v4454 = vrot.slane %v4452, 4
        %v4455 = vrot.slane %v3966, 5
        %v4456 = vsel %vm2467, %v4454, %v4455
        %s4457 = scalar_lea.vmem [#allocation12], 512
        %v4458 = vld [vmem:[%s4457] sm:$0xf]
        %v4459 = vld [vmem:[%s4457 + $0x4] sm:$0xf]
        %v4460 = vld [vmem:[%s4457 + $0x8] sm:$0xf]
        %v4461 = vld [vmem:[%s4457 + $0xc] sm:$0xf]
        %v4462 = vld [vmem:[%s4457 + $0x10] sm:$0xf]
        %v4463 = vld [vmem:[%s4457 + $0x14] sm:$0xf]
        %v4464 = vld [vmem:[%s4457 + $0x18] sm:$0xf]
        %v4465 = vld [vmem:[%s4457 + $0x1c] sm:$0xf]
        %v4466 = vld [vmem:[%s4457 + $0x20] sm:$0xf]
        %v4467 = vld [vmem:[%s4457 + $0x24] sm:$0xf]
        %v4468 = vld [vmem:[%s4457 + $0x28] sm:$0xf]
        %v4469 = vld [vmem:[%s4457 + $0x2c] sm:$0xf]
        %v4470 = vld [vmem:[%s4457 + $0x30] sm:$0xf]
        %v4471 = vld [vmem:[%s4457 + $0x34] sm:$0xf]
        %v4472 = vld [vmem:[%s4457 + $0x38] sm:$0xf]
        %v4473 = vld [vmem:[%s4457 + $0x3c] sm:$0xf]
        %v4474 = vunpack.c.l.b16 %v4404
        %v4475 = vunpack.c.l.b16 %v4407
        %v4476 = vunpack.c.l.b16 %v4411
        %v4477 = vunpack.c.l.b16 %v4414
        %v4478 = vunpack.c.l.b16 %v4418
        %v4479 = vunpack.c.l.b16 %v4421
        %v4480 = vunpack.c.l.b16 %v4425
        %v4481 = vunpack.c.l.b16 %v4428
        %v4482 = vunpack.c.l.b16 %v4432
        %v4483 = vunpack.c.l.b16 %v4435
        %v4484 = vunpack.c.l.b16 %v4439
        %v4485 = vunpack.c.l.b16 %v4442
        %v4486 = vunpack.c.l.b16 %v4446
        %v4487 = vunpack.c.l.b16 %v4449
        %v4488 = vunpack.c.l.b16 %v4453
        %v4489 = vunpack.c.l.b16 %v4456
        %v4490 = vpack.c.b16 %v4475, %v4474
        %v4491 = vpack.c.b16 %v4477, %v4476
        %v4492 = vpack.c.b16 %v4479, %v4478
        %v4493 = vpack.c.b16 %v4481, %v4480
        %v4494 = vpack.c.b16 %v4483, %v4482
        %v4495 = vpack.c.b16 %v4485, %v4484
        %v4496 = vpack.c.b16 %v4487, %v4486
        %v4497 = vpack.c.b16 %v4489, %v4488
        %v4522 = vunpack.c.l.b16 %v4458
        %v4523 = vunpack.c.l.b16 %v4459
        %v4524 = vunpack.c.l.b16 %v4460
        %v4525 = vunpack.c.l.b16 %v4461
        %v4526 = vunpack.c.l.b16 %v4462
        %v4527 = vunpack.c.l.b16 %v4463
        %v4528 = vunpack.c.l.b16 %v4464
        %v4529 = vunpack.c.l.b16 %v4465
        %v4530 = vunpack.c.l.b16 %v4466
        %v4531 = vunpack.c.l.b16 %v4467
        %v4532 = vunpack.c.l.b16 %v4468
        %v4533 = vunpack.c.l.b16 %v4469
        %v4534 = vunpack.c.l.b16 %v4470
        %v4535 = vunpack.c.l.b16 %v4471
        %v4536 = vunpack.c.l.b16 %v4472
        %v4537 = vunpack.c.l.b16 %v4473
        %v4538 = vpack.c.b16 %v4523, %v4522
        %v4539 = vpack.c.b16 %v4525, %v4524
        %v4540 = vpack.c.b16 %v4527, %v4526
        %v4541 = vpack.c.b16 %v4529, %v4528
        %v4542 = vpack.c.b16 %v4531, %v4530
        %v4543 = vpack.c.b16 %v4533, %v4532
        %v4544 = vpack.c.b16 %v4535, %v4534
        %v4545 = vpack.c.b16 %v4537, %v4536
        %4554 = vmatprep.subr.bf16.mxu0 0
        %4555 = vmatpush1.bf16.msra.mxu0 %v4545
        %4556 = vmatprep.subr.bf16.mxu0 0
        %4557 = vmatpush1.bf16.msra.mxu0 %v4544
        %4558 = vmatprep.subr.bf16.mxu0 0
        %4559 = vmatpush1.bf16.msra.mxu0 %v4543
        %4560 = vmatprep.subr.bf16.mxu0 0
        %4561 = vmatpush1.bf16.msra.mxu0 %v4542
        %4562 = vmatprep.subr.bf16.mxu0 0
        %4563 = vmatpush1.bf16.msra.mxu0 %v4541
        %4564 = vmatprep.subr.bf16.mxu0 0
        %4565 = vmatpush1.bf16.msra.mxu0 %v4540
        %4566 = vmatprep.subr.bf16.mxu0 0
        %4567 = vmatpush1.bf16.msra.mxu0 %v4539
        %4568 = vmatprep.subr.bf16.mxu0 0
        %4569 = vmatpush1.bf16.msra.mxu0 %v4538
        %4570 = vmatprep.subr.bf16.mxu0 0
        %4571 = vmatpush2.bf16.msra.mxu0 0
        %4572 = vmatprep.subr.bf16.mxu0 0
        %4573 = vmatpush2.bf16.msra.mxu0 0
        %4574 = vmatprep.subr.bf16.mxu0 0
        %4575 = vmatpush2.bf16.msra.mxu0 0
        %4576 = vmatprep.subr.bf16.mxu0 0
        %4577 = vmatpush2.bf16.msra.mxu0 0
        %4578 = vmatprep.subr.bf16.mxu0 0
        %4579 = vmatpush2.bf16.msra.mxu0 0
        %4580 = vmatprep.subr.bf16.mxu0 0
        %4581 = vmatpush2.bf16.msra.mxu0 0
        %4582 = vmatprep.subr.bf16.mxu0 0
        %4583 = vmatpush2.bf16.msra.mxu0 0
        %4584 = vmatprep.subr.bf16.mxu0 0
        %4585 = vmatpush2.bf16.msra.mxu0 0
        %4586 = vmatprep.mubr.bf16.mxu0 0
        %4587 = vmatmul.mubr.bf16.gmra.mxu0 %v4490
        %v4588 = vpop.f32.mrf.mxu0
        %v4589 = vadd.f32 0.0, %v4588
        %v4590 = vpop.f32.mrf.mxu0
        %v4591 = vpop.f32.mrf.mxu0
        %v4592 = vadd.f32 0.0, %v4591
        %v4593 = vpop.f32.mrf.mxu0
        %4594 = vmatprep.mubr.bf16.mxu0 0
        %4595 = vmatmul.mubr.bf16.gmra.mxu0 %v4491
        %v4596 = vpop.f32.mrf.mxu0
        %v4597 = vadd.f32 0.0, %v4596
        %v4598 = vpop.f32.mrf.mxu0
        %v4599 = vpop.f32.mrf.mxu0
        %v4600 = vadd.f32 0.0, %v4599
        %v4601 = vpop.f32.mrf.mxu0
        %4602 = vmatprep.mubr.bf16.mxu0 0
        %4603 = vmatmul.mubr.bf16.gmra.mxu0 %v4492
        %v4604 = vpop.f32.mrf.mxu0
        %v4605 = vadd.f32 0.0, %v4604
        %v4606 = vpop.f32.mrf.mxu0
        %v4607 = vpop.f32.mrf.mxu0
        %v4608 = vadd.f32 0.0, %v4607
        %v4609 = vpop.f32.mrf.mxu0
        %4610 = vmatprep.mubr.bf16.mxu0 0
        %4611 = vmatmul.mubr.bf16.gmra.mxu0 %v4493
        %v4612 = vpop.f32.mrf.mxu0
        %v4613 = vadd.f32 0.0, %v4612
        %v4614 = vpop.f32.mrf.mxu0
        %v4615 = vpop.f32.mrf.mxu0
        %v4616 = vadd.f32 0.0, %v4615
        %v4617 = vpop.f32.mrf.mxu0
        %4618 = vmatprep.mubr.bf16.mxu0 0
        %4619 = vmatmul.mubr.bf16.gmra.mxu0 %v4494
        %v4620 = vpop.f32.mrf.mxu0
        %v4621 = vadd.f32 0.0, %v4620
        %v4622 = vpop.f32.mrf.mxu0
        %v4623 = vpop.f32.mrf.mxu0
        %v4624 = vadd.f32 0.0, %v4623
        %v4625 = vpop.f32.mrf.mxu0
        %4626 = vmatprep.mubr.bf16.mxu0 0
        %4627 = vmatmul.mubr.bf16.gmra.mxu0 %v4495
        %v4628 = vpop.f32.mrf.mxu0
        %v4629 = vadd.f32 0.0, %v4628
        %v4630 = vpop.f32.mrf.mxu0
        %v4631 = vpop.f32.mrf.mxu0
        %v4632 = vadd.f32 0.0, %v4631
        %v4633 = vpop.f32.mrf.mxu0
        %4634 = vmatprep.mubr.bf16.mxu0 0
        %4635 = vmatmul.mubr.bf16.gmra.mxu0 %v4496
        %v4636 = vpop.f32.mrf.mxu0
        %v4637 = vadd.f32 0.0, %v4636
        %v4638 = vpop.f32.mrf.mxu0
        %v4639 = vpop.f32.mrf.mxu0
        %v4640 = vadd.f32 0.0, %v4639
        %v4641 = vpop.f32.mrf.mxu0
        %4642 = vmatprep.mubr.bf16.mxu0 0
        %4643 = vmatmul.mubr.bf16.gmra.mxu0 %v4497
        %v4644 = vpop.f32.mrf.mxu0
        %v4645 = vadd.f32 0.0, %v4644
        %v4646 = vpop.f32.mrf.mxu0
        %v4647 = vpop.f32.mrf.mxu0
        %v4648 = vadd.f32 0.0, %v4647
        %v4649 = vpop.f32.mrf.mxu0
        %4650 = vdwg.mxu0
        %v4651 = vadd.f32 %v4353, %v4589
        %v4652 = vadd.f32 %v4354, %v4592
        %v4653 = vadd.f32 %v4355, %v4597
        %v4654 = vadd.f32 %v4356, %v4600
        %v4655 = vadd.f32 %v4357, %v4605
        %v4656 = vadd.f32 %v4358, %v4608
        %v4657 = vadd.f32 %v4359, %v4613
        %v4658 = vadd.f32 %v4360, %v4616
        %v4659 = vadd.f32 %v4361, %v4621
        %v4660 = vadd.f32 %v4362, %v4624
        %v4661 = vadd.f32 %v4363, %v4629
        %v4662 = vadd.f32 %v4364, %v4632
        %v4663 = vadd.f32 %v4365, %v4637
        %v4664 = vadd.f32 %v4366, %v4640
        %v4665 = vadd.f32 %v4367, %v4645
        %v4666 = vadd.f32 %v4368, %v4648
        %v4667 = vmax.f32 %v4651, 0.0
        %v4668 = vmax.f32 %v4652, 0.0
        %v4669 = vmax.f32 %v4653, 0.0
        %v4670 = vmax.f32 %v4654, 0.0
        %v4671 = vmax.f32 %v4655, 0.0
        %v4672 = vmax.f32 %v4656, 0.0
        %v4673 = vmax.f32 %v4657, 0.0
        %v4674 = vmax.f32 %v4658, 0.0
        %v4675 = vmax.f32 %v4659, 0.0
        %v4676 = vmax.f32 %v4660, 0.0
        %v4677 = vmax.f32 %v4661, 0.0
        %v4678 = vmax.f32 %v4662, 0.0
        %v4679 = vmax.f32 %v4663, 0.0
        %v4680 = vmax.f32 %v4664, 0.0
        %v4681 = vmax.f32 %v4665, 0.0
        %v4682 = vmax.f32 %v4666, 0.0
        %v4683 = vadd.f32 %v1277, %v4667
        %v4684 = vadd.f32 %v1279, %v4668
        %v4685 = vadd.f32 %v1281, %v4669
        %v4686 = vadd.f32 %v1283, %v4670
        %v4687 = vadd.f32 %v1285, %v4671
        %v4688 = vadd.f32 %v1287, %v4672
        %v4689 = vadd.f32 %v1289, %v4673
        %v4690 = vadd.f32 %v1291, %v4674
        %v4691 = vadd.f32 %v1293, %v4675
        %v4692 = vadd.f32 %v1295, %v4676
        %v4693 = vadd.f32 %v1297, %v4677
        %v4694 = vadd.f32 %v1299, %v4678
        %v4695 = vadd.f32 %v1301, %v4679
        %v4696 = vadd.f32 %v1303, %v4680
        %v4697 = vadd.f32 %v1305, %v4681
        %v4698 = vadd.f32 %v1307, %v4682
        %v4699 = vpack.c.bf16 %v4684, %v4683
        %v4700 = vpack.c.bf16 %v4686, %v4685
        %v4701 = vpack.c.bf16 %v4688, %v4687
        %v4702 = vpack.c.bf16 %v4690, %v4689
        %v4703 = vpack.c.bf16 %v4692, %v4691
        %v4704 = vpack.c.bf16 %v4694, %v4693
        %v4705 = vpack.c.bf16 %v4696, %v4695
        %v4706 = vpack.c.bf16 %v4698, %v4697
        %v4707 = vld [vmem:[#allocation14] sm:$0xf]
        %v4708 = vld [vmem:[#allocation14 + $0x4] sm:$0xf]
        %v4709 = vld [vmem:[#allocation14 + $0x8] sm:$0xf]
        %v4710 = vld [vmem:[#allocation14 + $0xc] sm:$0xf]
        %v4711 = vld [vmem:[#allocation14 + $0x10] sm:$0xf]
        %v4712 = vld [vmem:[#allocation14 + $0x14] sm:$0xf]
        %v4713 = vld [vmem:[#allocation14 + $0x18] sm:$0xf]
        %v4714 = vld [vmem:[#allocation14 + $0x1c] sm:$0xf]
        %v4715 = vld [vmem:[#allocation14 + $0x20] sm:$0xf]
        %v4716 = vld [vmem:[#allocation14 + $0x24] sm:$0xf]
        %v4717 = vld [vmem:[#allocation14 + $0x28] sm:$0xf]
        %v4718 = vld [vmem:[#allocation14 + $0x2c] sm:$0xf]
        %v4719 = vld [vmem:[#allocation14 + $0x30] sm:$0xf]
        %v4720 = vld [vmem:[#allocation14 + $0x34] sm:$0xf]
        %v4721 = vld [vmem:[#allocation14 + $0x38] sm:$0xf]
        %v4722 = vld [vmem:[#allocation14 + $0x3c] sm:$0xf]
        %v4723 = vpack.c.bf16 %v1280, %v1278
        %v4724 = vpack.c.bf16 %v1284, %v1282
        %v4725 = vpack.c.bf16 %v1288, %v1286
        %v4726 = vpack.c.bf16 %v1292, %v1290
        %v4727 = vpack.c.bf16 %v1296, %v1294
        %v4728 = vpack.c.bf16 %v1300, %v1298
        %v4729 = vpack.c.bf16 %v1304, %v1302
        %v4730 = vpack.c.bf16 %v1308, %v1306
        %v4731 = vld [vmem:[#allocation15] sm:$0xf]
        %v4732 = vld [vmem:[#allocation15 + $0x4] sm:$0xf]
        %v4733 = vld [vmem:[#allocation15 + $0x8] sm:$0xf]
        %v4734 = vld [vmem:[#allocation15 + $0xc] sm:$0xf]
        %v4735 = vld [vmem:[#allocation15 + $0x10] sm:$0xf]
        %v4736 = vld [vmem:[#allocation15 + $0x14] sm:$0xf]
        %v4737 = vld [vmem:[#allocation15 + $0x18] sm:$0xf]
        %v4738 = vld [vmem:[#allocation15 + $0x1c] sm:$0xf]
        %v4739 = vld [vmem:[#allocation15 + $0x20] sm:$0xf]
        %v4740 = vld [vmem:[#allocation15 + $0x24] sm:$0xf]
        %v4741 = vld [vmem:[#allocation15 + $0x28] sm:$0xf]
        %v4742 = vld [vmem:[#allocation15 + $0x2c] sm:$0xf]
        %v4743 = vld [vmem:[#allocation15 + $0x30] sm:$0xf]
        %v4744 = vld [vmem:[#allocation15 + $0x34] sm:$0xf]
        %v4745 = vld [vmem:[#allocation15 + $0x38] sm:$0xf]
        %v4746 = vld [vmem:[#allocation15 + $0x3c] sm:$0xf]
        %v4763 = vunpack.c.l.b16 %v4731
        %v4764 = vunpack.c.l.b16 %v4732
        %v4765 = vunpack.c.l.b16 %v4733
        %v4766 = vunpack.c.l.b16 %v4734
        %v4767 = vunpack.c.l.b16 %v4735
        %v4768 = vunpack.c.l.b16 %v4736
        %v4769 = vunpack.c.l.b16 %v4737
        %v4770 = vunpack.c.l.b16 %v4738
        %v4771 = vunpack.c.l.b16 %v4739
        %v4772 = vunpack.c.l.b16 %v4740
        %v4773 = vunpack.c.l.b16 %v4741
        %v4774 = vunpack.c.l.b16 %v4742
        %v4775 = vunpack.c.l.b16 %v4743
        %v4776 = vunpack.c.l.b16 %v4744
        %v4777 = vunpack.c.l.b16 %v4745
        %v4778 = vunpack.c.l.b16 %v4746
        %v4779 = vpack.c.b16 %v4764, %v4763
        %v4780 = vpack.c.b16 %v4766, %v4765
        %v4781 = vpack.c.b16 %v4768, %v4767
        %v4782 = vpack.c.b16 %v4770, %v4769
        %v4783 = vpack.c.b16 %v4772, %v4771
        %v4784 = vpack.c.b16 %v4774, %v4773
        %v4785 = vpack.c.b16 %v4776, %v4775
        %v4786 = vpack.c.b16 %v4778, %v4777
        %4795 = vmatprep.subr.bf16.mxu0 0
        %4796 = vmatpush1.bf16.msra.mxu0 %v4786
        %4797 = vmatprep.subr.bf16.mxu0 0
        %4798 = vmatpush1.bf16.msra.mxu0 %v4785
        %4799 = vmatprep.subr.bf16.mxu0 0
        %4800 = vmatpush1.bf16.msra.mxu0 %v4784
        %4801 = vmatprep.subr.bf16.mxu0 0
        %4802 = vmatpush1.bf16.msra.mxu0 %v4783
        %4803 = vmatprep.subr.bf16.mxu0 0
        %4804 = vmatpush1.bf16.msra.mxu0 %v4782
        %4805 = vmatprep.subr.bf16.mxu0 0
        %4806 = vmatpush1.bf16.msra.mxu0 %v4781
        %4807 = vmatprep.subr.bf16.mxu0 0
        %4808 = vmatpush1.bf16.msra.mxu0 %v4780
        %4809 = vmatprep.subr.bf16.mxu0 0
        %4810 = vmatpush1.bf16.msra.mxu0 %v4779
        %4811 = vmatprep.subr.bf16.mxu0 0
        %4812 = vmatpush2.bf16.msra.mxu0 0
        %4813 = vmatprep.subr.bf16.mxu0 0
        %4814 = vmatpush2.bf16.msra.mxu0 0
        %4815 = vmatprep.subr.bf16.mxu0 0
        %4816 = vmatpush2.bf16.msra.mxu0 0
        %4817 = vmatprep.subr.bf16.mxu0 0
        %4818 = vmatpush2.bf16.msra.mxu0 0
        %4819 = vmatprep.subr.bf16.mxu0 0
        %4820 = vmatpush2.bf16.msra.mxu0 0
        %4821 = vmatprep.subr.bf16.mxu0 0
        %4822 = vmatpush2.bf16.msra.mxu0 0
        %4823 = vmatprep.subr.bf16.mxu0 0
        %4824 = vmatpush2.bf16.msra.mxu0 0
        %4825 = vmatprep.subr.bf16.mxu0 0
        %4826 = vmatpush2.bf16.msra.mxu0 0
        %4827 = vmatprep.mubr.bf16.mxu0 0
        %4828 = vmatmul.mubr.bf16.gmra.mxu0 %v4723
        %v4829 = vpop.f32.mrf.mxu0
        %v4830 = vadd.f32 0.0, %v4829
        %v4831 = vpop.f32.mrf.mxu0
        %v4832 = vpop.f32.mrf.mxu0
        %v4833 = vadd.f32 0.0, %v4832
        %v4834 = vpop.f32.mrf.mxu0
        %4835 = vmatprep.mubr.bf16.mxu0 0
        %4836 = vmatmul.mubr.bf16.gmra.mxu0 %v4724
        %v4837 = vpop.f32.mrf.mxu0
        %v4838 = vadd.f32 0.0, %v4837
        %v4839 = vpop.f32.mrf.mxu0
        %v4840 = vpop.f32.mrf.mxu0
        %v4841 = vadd.f32 0.0, %v4840
        %v4842 = vpop.f32.mrf.mxu0
        %4843 = vmatprep.mubr.bf16.mxu0 0
        %4844 = vmatmul.mubr.bf16.gmra.mxu0 %v4725
        %v4845 = vpop.f32.mrf.mxu0
        %v4846 = vadd.f32 0.0, %v4845
        %v4847 = vpop.f32.mrf.mxu0
        %v4848 = vpop.f32.mrf.mxu0
        %v4849 = vadd.f32 0.0, %v4848
        %v4850 = vpop.f32.mrf.mxu0
        %4851 = vmatprep.mubr.bf16.mxu0 0
        %4852 = vmatmul.mubr.bf16.gmra.mxu0 %v4726
        %v4853 = vpop.f32.mrf.mxu0
        %v4854 = vadd.f32 0.0, %v4853
        %v4855 = vpop.f32.mrf.mxu0
        %v4856 = vpop.f32.mrf.mxu0
        %v4857 = vadd.f32 0.0, %v4856
        %v4858 = vpop.f32.mrf.mxu0
        %4859 = vmatprep.mubr.bf16.mxu0 0
        %4860 = vmatmul.mubr.bf16.gmra.mxu0 %v4727
        %v4861 = vpop.f32.mrf.mxu0
        %v4862 = vadd.f32 0.0, %v4861
        %v4863 = vpop.f32.mrf.mxu0
        %v4864 = vpop.f32.mrf.mxu0
        %v4865 = vadd.f32 0.0, %v4864
        %v4866 = vpop.f32.mrf.mxu0
        %4867 = vmatprep.mubr.bf16.mxu0 0
        %4868 = vmatmul.mubr.bf16.gmra.mxu0 %v4728
        %v4869 = vpop.f32.mrf.mxu0
        %v4870 = vadd.f32 0.0, %v4869
        %v4871 = vpop.f32.mrf.mxu0
        %v4872 = vpop.f32.mrf.mxu0
        %v4873 = vadd.f32 0.0, %v4872
        %v4874 = vpop.f32.mrf.mxu0
        %4875 = vmatprep.mubr.bf16.mxu0 0
        %4876 = vmatmul.mubr.bf16.gmra.mxu0 %v4729
        %v4877 = vpop.f32.mrf.mxu0
        %v4878 = vadd.f32 0.0, %v4877
        %v4879 = vpop.f32.mrf.mxu0
        %v4880 = vpop.f32.mrf.mxu0
        %v4881 = vadd.f32 0.0, %v4880
        %v4882 = vpop.f32.mrf.mxu0
        %4883 = vmatprep.mubr.bf16.mxu0 0
        %4884 = vmatmul.mubr.bf16.gmra.mxu0 %v4730
        %v4885 = vpop.f32.mrf.mxu0
        %v4886 = vadd.f32 0.0, %v4885
        %v4887 = vpop.f32.mrf.mxu0
        %v4888 = vpop.f32.mrf.mxu0
        %v4889 = vadd.f32 0.0, %v4888
        %v4890 = vpop.f32.mrf.mxu0
        %4891 = vdwg.mxu0
        %v4908 = vunpack.c.l.b16 %v4707
        %v4909 = vunpack.c.l.b16 %v4708
        %v4910 = vunpack.c.l.b16 %v4709
        %v4911 = vunpack.c.l.b16 %v4710
        %v4912 = vunpack.c.l.b16 %v4711
        %v4913 = vunpack.c.l.b16 %v4712
        %v4914 = vunpack.c.l.b16 %v4713
        %v4915 = vunpack.c.l.b16 %v4714
        %v4916 = vunpack.c.l.b16 %v4715
        %v4917 = vunpack.c.l.b16 %v4716
        %v4918 = vunpack.c.l.b16 %v4717
        %v4919 = vunpack.c.l.b16 %v4718
        %v4920 = vunpack.c.l.b16 %v4719
        %v4921 = vunpack.c.l.b16 %v4720
        %v4922 = vunpack.c.l.b16 %v4721
        %v4923 = vunpack.c.l.b16 %v4722
        %v4924 = vpack.c.b16 %v4909, %v4908
        %v4925 = vpack.c.b16 %v4911, %v4910
        %v4926 = vpack.c.b16 %v4913, %v4912
        %v4927 = vpack.c.b16 %v4915, %v4914
        %v4928 = vpack.c.b16 %v4917, %v4916
        %v4929 = vpack.c.b16 %v4919, %v4918
        %v4930 = vpack.c.b16 %v4921, %v4920
        %v4931 = vpack.c.b16 %v4923, %v4922
        %4940 = vmatprep.subr.bf16.mxu0 0
        %4941 = vmatpush1.bf16.msra.mxu0 %v4931
        %4942 = vmatprep.subr.bf16.mxu0 0
        %4943 = vmatpush1.bf16.msra.mxu0 %v4930
        %4944 = vmatprep.subr.bf16.mxu0 0
        %4945 = vmatpush1.bf16.msra.mxu0 %v4929
        %4946 = vmatprep.subr.bf16.mxu0 0
        %4947 = vmatpush1.bf16.msra.mxu0 %v4928
        %4948 = vmatprep.subr.bf16.mxu0 0
        %4949 = vmatpush1.bf16.msra.mxu0 %v4927
        %4950 = vmatprep.subr.bf16.mxu0 0
        %4951 = vmatpush1.bf16.msra.mxu0 %v4926
        %4952 = vmatprep.subr.bf16.mxu0 0
        %4953 = vmatpush1.bf16.msra.mxu0 %v4925
        %4954 = vmatprep.subr.bf16.mxu0 0
        %4955 = vmatpush1.bf16.msra.mxu0 %v4924
        %4956 = vmatprep.subr.bf16.mxu0 0
        %4957 = vmatpush2.bf16.msra.mxu0 0
        %4958 = vmatprep.subr.bf16.mxu0 0
        %4959 = vmatpush2.bf16.msra.mxu0 0
        %4960 = vmatprep.subr.bf16.mxu0 0
        %4961 = vmatpush2.bf16.msra.mxu0 0
        %4962 = vmatprep.subr.bf16.mxu0 0
        %4963 = vmatpush2.bf16.msra.mxu0 0
        %4964 = vmatprep.subr.bf16.mxu0 0
        %4965 = vmatpush2.bf16.msra.mxu0 0
        %4966 = vmatprep.subr.bf16.mxu0 0
        %4967 = vmatpush2.bf16.msra.mxu0 0
        %4968 = vmatprep.subr.bf16.mxu0 0
        %4969 = vmatpush2.bf16.msra.mxu0 0
        %4970 = vmatprep.subr.bf16.mxu0 0
        %4971 = vmatpush2.bf16.msra.mxu0 0
        %4972 = vmatprep.mubr.bf16.mxu0 0
        %4973 = vmatmul.mubr.bf16.gmra.mxu0 %v4699
        %v4974 = vpop.f32.mrf.mxu0
        %v4975 = vadd.f32 %v4830, %v4974
        %v4976 = vpop.f32.mrf.mxu0
        %v4977 = vpop.f32.mrf.mxu0
        %v4978 = vadd.f32 %v4833, %v4977
        %v4979 = vpop.f32.mrf.mxu0
        %4980 = vmatprep.mubr.bf16.mxu0 0
        %4981 = vmatmul.mubr.bf16.gmra.mxu0 %v4700
        %v4982 = vpop.f32.mrf.mxu0
        %v4983 = vadd.f32 %v4838, %v4982
        %v4984 = vpop.f32.mrf.mxu0
        %v4985 = vpop.f32.mrf.mxu0
        %v4986 = vadd.f32 %v4841, %v4985
        %v4987 = vpop.f32.mrf.mxu0
        %4988 = vmatprep.mubr.bf16.mxu0 0
        %4989 = vmatmul.mubr.bf16.gmra.mxu0 %v4701
        %v4990 = vpop.f32.mrf.mxu0
        %v4991 = vadd.f32 %v4846, %v4990
        %v4992 = vpop.f32.mrf.mxu0
        %v4993 = vpop.f32.mrf.mxu0
        %v4994 = vadd.f32 %v4849, %v4993
        %v4995 = vpop.f32.mrf.mxu0
        %4996 = vmatprep.mubr.bf16.mxu0 0
        %4997 = vmatmul.mubr.bf16.gmra.mxu0 %v4702
        %v4998 = vpop.f32.mrf.mxu0
        %v4999 = vadd.f32 %v4854, %v4998
        %v5000 = vpop.f32.mrf.mxu0
        %v5001 = vpop.f32.mrf.mxu0
        %v5002 = vadd.f32 %v4857, %v5001
        %v5003 = vpop.f32.mrf.mxu0
        %5004 = vmatprep.mubr.bf16.mxu0 0
        %5005 = vmatmul.mubr.bf16.gmra.mxu0 %v4703
        %v5006 = vpop.f32.mrf.mxu0
        %v5007 = vadd.f32 %v4862, %v5006
        %v5008 = vpop.f32.mrf.mxu0
        %v5009 = vpop.f32.mrf.mxu0
        %v5010 = vadd.f32 %v4865, %v5009
        %v5011 = vpop.f32.mrf.mxu0
        %5012 = vmatprep.mubr.bf16.mxu0 0
        %5013 = vmatmul.mubr.bf16.gmra.mxu0 %v4704
        %v5014 = vpop.f32.mrf.mxu0
        %v5015 = vadd.f32 %v4870, %v5014
        %v5016 = vpop.f32.mrf.mxu0
        %v5017 = vpop.f32.mrf.mxu0
        %v5018 = vadd.f32 %v4873, %v5017
        %v5019 = vpop.f32.mrf.mxu0
        %5020 = vmatprep.mubr.bf16.mxu0 0
        %5021 = vmatmul.mubr.bf16.gmra.mxu0 %v4705
        %v5022 = vpop.f32.mrf.mxu0
        %v5023 = vadd.f32 %v4878, %v5022
        %v5024 = vpop.f32.mrf.mxu0
        %v5025 = vpop.f32.mrf.mxu0
        %v5026 = vadd.f32 %v4881, %v5025
        %v5027 = vpop.f32.mrf.mxu0
        %5028 = vmatprep.mubr.bf16.mxu0 0
        %5029 = vmatmul.mubr.bf16.gmra.mxu0 %v4706
        %v5030 = vpop.f32.mrf.mxu0
        %v5031 = vadd.f32 %v4886, %v5030
        %v5032 = vpop.f32.mrf.mxu0
        %v5033 = vpop.f32.mrf.mxu0
        %v5034 = vadd.f32 %v4889, %v5033
        %v5035 = vpop.f32.mrf.mxu0
        %5036 = vdwg.mxu0
        %v5037 = vld [vmem:[%s11] sm:$0x1]
        %v5039 = vlaneseq
        %v5040 = vshrl.u32 %v5039, 7
        %v5041 = vsub.s32 0, %v5040
        %v5042 = vrot.slane %v5037, %v5041
        %v5044 = vadd.f32 %v4975, %v5042
        %v5045 = vadd.f32 %v4978, %v5042
        %v5046 = vadd.f32 %v4983, %v5042
        %v5047 = vadd.f32 %v4986, %v5042
        %v5048 = vadd.f32 %v4991, %v5042
        %v5049 = vadd.f32 %v4994, %v5042
        %v5050 = vadd.f32 %v4999, %v5042
        %v5051 = vadd.f32 %v5002, %v5042
        %v5052 = vadd.f32 %v5007, %v5042
        %v5053 = vadd.f32 %v5010, %v5042
        %v5054 = vadd.f32 %v5015, %v5042
        %v5055 = vadd.f32 %v5018, %v5042
        %v5056 = vadd.f32 %v5023, %v5042
        %v5057 = vadd.f32 %v5026, %v5042
        %v5058 = vadd.f32 %v5031, %v5042
        %v5059 = vadd.f32 %v5034, %v5042
        %v5060 = vmax.f32 %v5044, 0.0
        %v5061 = vmax.f32 %v5045, 0.0
        %v5062 = vmax.f32 %v5046, 0.0
        %v5063 = vmax.f32 %v5047, 0.0
        %v5064 = vmax.f32 %v5048, 0.0
        %v5065 = vmax.f32 %v5049, 0.0
        %v5066 = vmax.f32 %v5050, 0.0
        %v5067 = vmax.f32 %v5051, 0.0
        %v5068 = vmax.f32 %v5052, 0.0
        %v5069 = vmax.f32 %v5053, 0.0
        %v5070 = vmax.f32 %v5054, 0.0
        %v5071 = vmax.f32 %v5055, 0.0
        %v5072 = vmax.f32 %v5056, 0.0
        %v5073 = vmax.f32 %v5057, 0.0
        %v5074 = vmax.f32 %v5058, 0.0
        %v5075 = vmax.f32 %v5059, 0.0
        %v5076 = vpack.c.bf16 %v5061, %v5060
        %v5077 = vpack.c.bf16 %v5063, %v5062
        %v5078 = vpack.c.bf16 %v5065, %v5064
        %v5079 = vpack.c.bf16 %v5067, %v5066
        %v5080 = vpack.c.bf16 %v5069, %v5068
        %v5081 = vpack.c.bf16 %v5071, %v5070
        %v5082 = vpack.c.bf16 %v5073, %v5072
        %v5083 = vpack.c.bf16 %v5075, %v5074
        %v5092 = vunpack.c.l.b16 %v5076
        %v5093 = vunpack.c.h.b16 %v5076
        %v5094 = vunpack.c.l.b16 %v5077
        %v5095 = vunpack.c.h.b16 %v5077
        %v5096 = vunpack.c.l.b16 %v5078
        %v5097 = vunpack.c.h.b16 %v5078
        %v5098 = vunpack.c.l.b16 %v5079
        %v5099 = vunpack.c.h.b16 %v5079
        %v5100 = vunpack.c.l.b16 %v5080
        %v5101 = vunpack.c.h.b16 %v5080
        %v5102 = vunpack.c.l.b16 %v5081
        %v5103 = vunpack.c.h.b16 %v5081
        %v5104 = vunpack.c.l.b16 %v5082
        %v5105 = vunpack.c.h.b16 %v5082
        %v5106 = vunpack.c.l.b16 %v5083
        %v5107 = vunpack.c.h.b16 %v5083
        %v5108 = vpack.c.b16 %v5092, %v5092
        %v5109 = vpack.c.b16 %v5093, %v5093
        %v5110 = vpack.c.b16 %v5094, %v5094
        %v5111 = vpack.c.b16 %v5095, %v5095
        %v5112 = vpack.c.b16 %v5096, %v5096
        %v5113 = vpack.c.b16 %v5097, %v5097
        %v5114 = vpack.c.b16 %v5098, %v5098
        %v5115 = vpack.c.b16 %v5099, %v5099
        %v5116 = vpack.c.b16 %v5100, %v5100
        %v5117 = vpack.c.b16 %v5101, %v5101
        %v5118 = vpack.c.b16 %v5102, %v5102
        %v5119 = vpack.c.b16 %v5103, %v5103
        %v5120 = vpack.c.b16 %v5104, %v5104
        %v5121 = vpack.c.b16 %v5105, %v5105
        %v5122 = vpack.c.b16 %v5106, %v5106
        %v5123 = vpack.c.b16 %v5107, %v5107
        %5140 = vst [vmem:[%s632] sm:$0xf] %v5108
        %5141 = vst [vmem:[%s632 + $0x4] sm:$0xf] %v5109
        %5142 = vst [vmem:[%s632 + $0x8] sm:$0xf] %v5110
        %5143 = vst [vmem:[%s632 + $0xc] sm:$0xf] %v5111
        %5144 = vst [vmem:[%s632 + $0x10] sm:$0xf] %v5112
        %5145 = vst [vmem:[%s632 + $0x14] sm:$0xf] %v5113
        %5146 = vst [vmem:[%s632 + $0x18] sm:$0xf] %v5114
        %5147 = vst [vmem:[%s632 + $0x1c] sm:$0xf] %v5115
        %5148 = vst [vmem:[%s632 + $0x20] sm:$0xf] %v5116
        %5149 = vst [vmem:[%s632 + $0x24] sm:$0xf] %v5117
        %5150 = vst [vmem:[%s632 + $0x28] sm:$0xf] %v5118
        %5151 = vst [vmem:[%s632 + $0x2c] sm:$0xf] %v5119
        %5152 = vst [vmem:[%s632 + $0x30] sm:$0xf] %v5120
        %5153 = vst [vmem:[%s632 + $0x34] sm:$0xf] %v5121
        %5154 = vst [vmem:[%s632 + $0x38] sm:$0xf] %v5122
        %5155 = vst [vmem:[%s632 + $0x3c] sm:$0xf] %v5123
        %s5156 = sand.u32 %s346, 1
        %s5157 = scalar_lea.sflag [#allocation5], %s5156
        %s5158 = sand.u32 %s346, 1
        %s5159 = smul.addr %s5158, 64
        %s5160 = scalar_lea.vmem [#allocation17], %s5159
        // Predicated region
        $region101: #{tpu_custom_call.1} parent=67 // pred_check
          %p5161 = pneg %p356
        $region102: #{tpu_custom_call.1} parent=67 // pred_check_branch
          %5163 = sbr.rel (%p5161) target = $region104
        $region103: #{tpu_custom_call.1} parent=67 // pred_region
          %s5164 = smul.u32 8, %s40
          %s5166 = ssub.s32 1024, 1024
          %5167 = vsyncadd %s5157, %s5166
          %s5168 = smul.addr %s5164, 2
          %s5169 = smul.addr %s39, 32
          %s5170 = sadd.s32 %s5168, %s5169
          %s5171 = smul.addr %s5170, 64
          %s5172 = scalar_lea.hbm %s12, %s5171
          %s5173 = sshll.u32 %s5160, 4
          %s5174 = int_to_ptr.vmem [resolvable:$true] %s5173
          %5179 = dma.vmem_to_hbm [thread:$0]  %s5174, 1024, %s5172, %s5157, 64, 64, 4
        $region104: #{tpu_custom_call.1} parent=67 // pred_fallthru
          _
      $region68: #{tpu_custom_call.1} parent=5 // pred_fallthru
        _
      %p5180 = scmp.le.s32.totalorder 2, %s30
      // Predicated region
      $region105: #{tpu_custom_call.1} parent=5 // pred_check
        %p5181 = pneg %p5180
      $region106: #{tpu_custom_call.1} parent=5 // pred_check_branch
        %5183 = sbr.rel (%p5181) target = $region108
      $region107: #{tpu_custom_call.1} parent=5 // pred_region
        %s5184 = ssub.s32 %s30, 2
        // Predicated region
        $region109: #{tpu_custom_call.1} parent=107 // pred_check
          %p5185 = pneg %p362
        $region110: #{tpu_custom_call.1} parent=107 // pred_check_branch
          %5187 = sbr.rel (%p5185) target = $region112
        $region111: #{tpu_custom_call.1} parent=107 // pred_region
          %s5188 = sand.u32 %s347, 1
          %s5189 = scalar_lea.sflag [#allocation5], %s5188
          %s5190 = sand.u32 %s347, 1
          %s5191 = smul.addr %s5190, 64
          %s5192 = scalar_lea.vmem [#allocation17], %s5191
          %5193 = dma.done %s5189, 1024
        $region112: #{tpu_custom_call.1} parent=107 // pred_fallthru
          _
      $region108: #{tpu_custom_call.1} parent=5 // pred_fallthru
        _
    $region6: #{tpu_custom_call.1} parent=1 // loop_footer
      %s34 = sadd.s32 1, %s30
    $region7: #{tpu_custom_call.1} parent=1 // loop_footer_branch
      %29 = sbr.rel target = $region3
    $region8: #{tpu_custom_call.1} parent=1 // loop_exit
      _
    %5194 = vsyncpa [#allocation4], 1
    %s5195 = scalar_lea.sflag [#allocation4], 1
    %5196 = vsyncpa %s5195, 1
    %5197 = vsyncpa [#allocation7], 1
    %s5198 = scalar_lea.sflag [#allocation7], 1
    %5199 = vsyncpa %s5198, 1
    %5200 = vsyncpa [#allocation10], 1
    %5201 = vsyncpa [#allocation13], 1
    %5202 = vsyncpa [#allocation16], 1
    %5203 = vsyncpa [#allocation5], 1
    %s5204 = scalar_lea.sflag [#allocation5], 1
    %5205 = vsyncpa %s5204, 1

</llo_original>
